<compile_context>
chip_gen: v7x
topology: tpu7x:2x2x1
jax: 0.10.0
libtpu: 0.0.40
codegen_flags: <defaults>
</compile_context>

<pallas_src>
import functools

import jax
import jax.numpy as jnp
from jax.experimental import pallas as pl
from jax.experimental.pallas import tpu as pltpu


# ----------------------------------------------------------------------------
# Generic fused conv kernel (lane-dense row-matmul formulation)
# ----------------------------------------------------------------------------
def _conv_row_kernel(x_ref, w_ref, si_ref, bi_ref, so_ref, bo_ref, o_ref,
                     *, pad_h, in_relu, act):
    # x_ref : (1, H, W*Cin)          lane-dense input rows for one image
    # w_ref : (KH, W*Cin, W*Cout)    row-Toeplitz conv weight (W-padding folded)
    # si/bi : (1, W*Cin)             input-side per-channel scale / shift
    # so/bo : (1, W*Cout)            output-side per-channel scale / shift
    # o_ref : (1, H, W*Cout)         lane-dense output rows
    H = x_ref.shape[1]

    x = x_ref[0]                                   # (H, W*Cin)
    x = x * si_ref[...] + bi_ref[...]              # fused pre-BN (eval) affine
    if in_relu:
        x = jnp.maximum(x, 0.0)
    if pad_h > 0:                                  # zero pad along H in VMEM
        z = jnp.zeros((pad_h, x.shape[1]), x.dtype)
        x = jnp.concatenate([z, x, z], axis=0)     # (H + 2*pad_h, W*Cin)

    acc = jnp.zeros((H, o_ref.shape[2]), jnp.float32)
    for kh in range(w_ref.shape[0]):               # KH contiguous-H matmuls
        acc = acc + jnp.dot(x[kh:kh + H, :], w_ref[kh],
                            preferred_element_type=jnp.float32)

    acc = acc * so_ref[...] + bo_ref[...]          # fused bias + eval-BN
    if act == "relu":
        acc = jnp.maximum(acc, 0.0)
    elif act == "sigmoid":
        acc = 1.0 / (1.0 + jnp.exp(-acc))

    o_ref[...] = acc[None, :, :].astype(o_ref.dtype)


def _row_conv_weight(weight, w_img):
    """(Cout, Cin, KH, KW) OIHW -> (KH, W*Cin, W*Cout) row matmul weight with
    the 'same' zero padding along W folded in."""
    cout, cin, kh, kw = weight.shape
    pad_w = (kw - 1) // 2
    w_t = jnp.transpose(weight, (2, 3, 1, 0))                 # (KH, KW, Cin, Cout)
    wi = jnp.arange(w_img)[:, None]                           # input column
    wo = jnp.arange(w_img)[None, :]                           # output column
    tap = wi - wo + pad_w                                     # (Wi, Wo)
    valid = (tap >= 0) & (tap < kw)
    tap_c = jnp.clip(tap, 0, kw - 1)
    big = w_t[:, tap_c, :, :]                                 # (KH, Wi, Wo, Cin, Cout)
    big = jnp.where(valid[None, :, :, None, None], big, 0.0)
    big = jnp.transpose(big, (0, 1, 3, 2, 4))                 # (KH, Wi, Cin, Wo, Cout)
    return big.reshape(kh, w_img * cin, w_img * cout)


def pallas_conv2d(x_nhwc, weight, *, bias=None, bn=None, act=None,
                  in_bn=None, in_relu=False):
    """Conv2d(k, stride=1, padding=(k-1)//2) in NHWC with fused
    (optional) input-side eval-BN + ReLU and output-side bias / eval-BN /
    activation ('relu' | 'sigmoid' | None)."""
    n, h, w, cin = x_nhwc.shape
    cout, cin_w, kh, _ = weight.shape
    assert cin == cin_w, (cin, cin_w)
    pad_h = (kh - 1) // 2

    w_rows = _row_conv_weight(weight, w).astype(x_nhwc.dtype)  # (KH, W*Cin, W*Cout)

    # input-side affine (folded eval-mode BN), tiled to the lane-dense layout
    if in_bn is not None:
        si = in_bn['gamma'] / jnp.sqrt(in_bn['var'] + in_bn['eps'])
        bi = in_bn['beta'] - in_bn['mean'] * si
    else:
        si = jnp.ones((cin,), jnp.float32)
        bi = jnp.zeros((cin,), jnp.float32)
    si_l = jnp.tile(si, w).reshape(1, w * cin).astype(x_nhwc.dtype)
    bi_l = jnp.tile(bi, w).reshape(1, w * cin).astype(x_nhwc.dtype)

    # output-side affine:  BN(conv + bias) == conv * so + bo
    b = bias if bias is not None else jnp.zeros((cout,), jnp.float32)
    if bn is not None:
        so = bn['gamma'] / jnp.sqrt(bn['var'] + bn['eps'])
        bo = bn['beta'] + (b - bn['mean']) * so
    else:
        so = jnp.ones((cout,), jnp.float32)
        bo = b.astype(jnp.float32)
    so_l = jnp.tile(so, w).reshape(1, w * cout).astype(jnp.float32)
    bo_l = jnp.tile(bo, w).reshape(1, w * cout).astype(jnp.float32)

    x_flat = x_nhwc.reshape(n, h, w * cin)        # free reshape (same HBM bytes)
    wcin, wcout = w * cin, w * cout

    kernel = functools.partial(_conv_row_kernel, pad_h=pad_h,
                               in_relu=in_relu, act=act)
    out = pl.pallas_call(
        kernel,
        out_shape=jax.ShapeDtypeStruct((n, h, wcout), x_nhwc.dtype),
        grid_spec=pltpu.PrefetchScalarGridSpec(
            num_scalar_prefetch=0,
            grid=(n,),
            in_specs=[
                pl.BlockSpec((1, h, wcin), lambda i: (i, 0, 0)),
                pl.BlockSpec((w_rows.shape[0], wcin, wcout), lambda i: (0, 0, 0)),
                pl.BlockSpec((1, wcin), lambda i: (0, 0)),
                pl.BlockSpec((1, wcin), lambda i: (0, 0)),
                pl.BlockSpec((1, wcout), lambda i: (0, 0)),
                pl.BlockSpec((1, wcout), lambda i: (0, 0)),
            ],
            out_specs=pl.BlockSpec((1, h, wcout), lambda i: (i, 0, 0)),
        ),
        compiler_params=pltpu.CompilerParams(
            dimension_semantics=("parallel",)),
    )(x_flat, w_rows, si_l, bi_l, so_l, bo_l)

    return out.reshape(n, h, w, cout)             # free reshape back to NHWC


# ----------------------------------------------------------------------------
# BiFusion_block forward (NCHW in / NCHW out, internals in NHWC)
# ----------------------------------------------------------------------------
def bifusion_forward_pallas(params, g_nchw, x_nchw):
    P = params
    g = jnp.transpose(g_nchw, (0, 2, 3, 1))       # single NCHW -> NHWC transpose
    x = jnp.transpose(x_nchw, (0, 2, 3, 1))

    # bilinear pooling branch: bp = W(W_g(g) * W_x(x))
    wg = pallas_conv2d(g, P['W_g']['w'], bias=P['W_g']['b'], bn=P['W_g']['bn'])
    wx = pallas_conv2d(x, P['W_x']['w'], bias=P['W_x']['b'], bn=P['W_x']['bn'])
    bp = pallas_conv2d(wg * wx, P['W']['w'], bias=P['W']['b'],
                       bn=P['W']['bn'], act='relu')

    # spatial attention branch on g (ChannelPool -> 7x7 conv+BN -> sigmoid gate)
    g_pool = jnp.concatenate([jnp.max(g, axis=-1, keepdims=True),
                              jnp.mean(g, axis=-1, keepdims=True)], axis=-1)
    g_att = pallas_conv2d(g_pool, P['spatial']['w'], bias=None,
                          bn=P['spatial']['bn'], act='sigmoid')
    g_out = g_att * g

    # channel attention branch on x (global mean -> fc1+relu -> fc2+sigmoid)
    x_se = jnp.mean(x, axis=(1, 2), keepdims=True)            # (N,1,1,ch2)
    h = pallas_conv2d(x_se, P['fc1']['w'], bias=P['fc1']['b'], act='relu')
    h = pallas_conv2d(h, P['fc2']['w'], bias=P['fc2']['b'], act='sigmoid')
    x_out = h * x

    # Residual(cat([g, x, bp]))
    fuse_in = jnp.concatenate([g_out, x_out, bp], axis=-1)
    R = P['residual']
    if R['need_skip']:
        residual = pallas_conv2d(fuse_in, R['skip']['w'], bias=R['skip']['b'])
    else:
        residual = fuse_in
    out = pallas_conv2d(fuse_in, R['conv1']['w'], bias=R['conv1']['b'],
                        in_bn=R['bn1'], in_relu=True)
    out = pallas_conv2d(out, R['conv2']['w'], bias=R['conv2']['b'],
                        in_bn=R['bn2'], in_relu=True)
    out = pallas_conv2d(out, R['conv3']['w'], bias=R['conv3']['b'],
                        in_bn=R['bn3'], in_relu=True)
    out = out + residual
    # drop_rate = 0.0 -> Dropout2d is an identity
    return jnp.transpose(out, (0, 3, 1, 2))       # back to NCHW


# ----------------------------------------------------------------------------
# Deterministic parameters + pure-JAX reference for the self-check
# ----------------------------------------------------------------------------
def _conv_params(key, cin, cout, k, *, bias=True):
    kw_, kb_ = jax.random.split(key)
    bound = 1.0 / ((cin * k * k) ** 0.5)
    w = jax.random.uniform(kw_, (cout, cin, k, k), minval=-bound, maxval=bound,
                           dtype=jnp.float32)
    b = (jax.random.uniform(kb_, (cout,), minval=-bound, maxval=bound,
                            dtype=jnp.float32) if bias else None)
    return {'w': w, 'b': b}


def _bn_params(key, c):
    k1, k2, k3, k4 = jax.random.split(key, 4)
    return {'gamma': jax.random.uniform(k1, (c,), minval=0.5, maxval=1.5),
            'beta': jax.random.uniform(k2, (c,), minval=-0.3, maxval=0.3),
            'mean': 0.1 * jax.random.normal(k3, (c,)),
            'var': jax.random.uniform(k4, (c,), minval=0.5, maxval=1.5),
            'eps': 1e-5}


def make_bifusion_params(key, ch_1, ch_2, r_2, ch_int, ch_out):
    ks = jax.random.split(key, 17)
    inp = ch_1 + ch_2 + ch_int
    half = ch_out // 2
    return {
        'W_g': {**_conv_params(ks[0], ch_1, ch_int, 1), 'bn': _bn_params(ks[1], ch_int)},
        'W_x': {**_conv_params(ks[2], ch_2, ch_int, 1), 'bn': _bn_params(ks[3], ch_int)},
        'W':   {**_conv_params(ks[4], ch_int, ch_int, 3), 'bn': _bn_params(ks[5], ch_int)},
        'spatial': {**_conv_params(ks[6], 2, 1, 7, bias=False),
                    'bn': _bn_params(ks[7], 1)},
        'fc1': _conv_params(ks[8], ch_2, ch_2 // r_2, 1),
        'fc2': _conv_params(ks[9], ch_2 // r_2, ch_2, 1),
        'residual': {
            'need_skip': inp != ch_out,
            'skip':  _conv_params(ks[10], inp, ch_out, 1),
            'bn1':   _bn_params(ks[11], inp),
            'conv1': _conv_params(ks[12], inp, half, 1),
            'bn2':   _bn_params(ks[13], half),
            'conv2': _conv_params(ks[14], half, half, 3),
            'bn3':   _bn_params(ks[15], half),
            'conv3': _conv_params(ks[16], half, ch_out, 1),
        },
    }


def _conv2d_ref(x, w, b=None):
    out = jax.lax.conv_general_dilated(
        x, w, window_strides=(1, 1), padding="SAME",
        dimension_numbers=("NCHW", "OIHW", "NCHW"),
        precision=jax.lax.Precision.HIGHEST)
    if b is not None:
        out = out + b[None, :, None, None]
    return out


def _bn_ref(x, bn):
    s = bn['gamma'] / jnp.sqrt(bn['var'] + bn['eps'])
    t = bn['beta'] - bn['mean'] * s
    return x * s[None, :, None, None] + t[None, :, None, None]


def bifusion_reference(params, g, x):
    P = params
    wg = _bn_ref(_conv2d_ref(g, P['W_g']['w'], P['W_g']['b']), P['W_g']['bn'])
    wx = _bn_ref(_conv2d_ref(x, P['W_x']['w'], P['W_x']['b']), P['W_x']['bn'])
    bp = jnp.maximum(
        _bn_ref(_conv2d_ref(wg * wx, P['W']['w'], P['W']['b']), P['W']['bn']), 0.0)

    g_in = g
    gp = jnp.concatenate([jnp.max(g, axis=1, keepdims=True),
                          jnp.mean(g, axis=1, keepdims=True)], axis=1)
    ga = _bn_ref(_conv2d_ref(gp, P['spatial']['w'], None), P['spatial']['bn'])
    g_o = jax.nn.sigmoid(ga) * g_in

    x_in = x
    xm = jnp.mean(x, axis=(2, 3), keepdims=True)
    h = jnp.maximum(_conv2d_ref(xm, P['fc1']['w'], P['fc1']['b']), 0.0)
    h = _conv2d_ref(h, P['fc2']['w'], P['fc2']['b'])
    x_o = jax.nn.sigmoid(h) * x_in

    cat = jnp.concatenate([g_o, x_o, bp], axis=1)
    R = P['residual']
    resid = _conv2d_ref(cat, R['skip']['w'], R['skip']['b']) if R['need_skip'] else cat
    out = _conv2d_ref(jnp.maximum(_bn_ref(cat, R['bn1']), 0.0),
                      R['conv1']['w'], R['conv1']['b'])
    out = _conv2d_ref(jnp.maximum(_bn_ref(out, R['bn2']), 0.0),
                      R['conv2']['w'], R['conv2']['b'])
    out = _conv2d_ref(jnp.maximum(_bn_ref(out, R['bn3']), 0.0),
                      R['conv3']['w'], R['conv3']['b'])
    return out + resid


if __name__ == "__main__":
    N, H, W = 2, 16, 16
    ch_1, ch_2, r_2, ch_int, ch_out = 4, 4, 2, 4, 8

    key = jax.random.PRNGKey(0)
    kp, kg, kx = jax.random.split(key, 3)
    params = make_bifusion_params(kp, ch_1, ch_2, r_2, ch_int, ch_out)
    g = jax.random.normal(kg, (N, ch_1, H, W), dtype=jnp.float32)
    x = jax.random.normal(kx, (N, ch_2, H, W), dtype=jnp.float32)

    fwd = jax.jit(lambda g_, x_: bifusion_forward_pallas(params, g_, x_))
    out = jax.block_until_ready(fwd(g, x))

    ref = jax.block_until_ready(bifusion_reference(params, g, x))
    assert out.shape == (N, ch_out, H, W), out.shape
    assert jnp.allclose(out, ref, atol=1e-3, rtol=1e-3), \
        float(jnp.max(jnp.abs(out - ref)))

    print("KERNEL_OK")
</pallas_src>

<mosaic_0001>
module attributes {stable_mosaic.version = 11 : i64} {
  func.func @_conv_row_kernel(%arg0: i32, %arg1: memref<1x16x64xf32, #tpu.memory_space<vmem>>, %arg2: memref<1x64x64xf32, #tpu.memory_space<vmem>>, %arg3: memref<1x64xf32, #tpu.memory_space<vmem>>, %arg4: memref<1x64xf32, #tpu.memory_space<vmem>>, %arg5: memref<1x64xf32, #tpu.memory_space<vmem>>, %arg6: memref<1x64xf32, #tpu.memory_space<vmem>>, %arg7: memref<1x16x64xf32, #tpu.memory_space<vmem>>) attributes {dimension_semantics = [#tpu.dimension_semantics<parallel>], iteration_bounds = array<i64: 2>, scalar_prefetch = 0 : i64, scratch_operands = 0 : i64, tpu.core_type = #tpu.core_type<tc>, window_params = [{transform_indices = @transform_0, window_bounds = array<i64: 1, 16, 64>}, {pipeline_mode = #tpu.pipeline_mode<synchronous>, transform_indices = @transform_1, window_bounds = array<i64: 1, 64, 64>}, {pipeline_mode = #tpu.pipeline_mode<synchronous>, transform_indices = @transform_2, window_bounds = array<i64: 1, 64>}, {pipeline_mode = #tpu.pipeline_mode<synchronous>, transform_indices = @transform_3, window_bounds = array<i64: 1, 64>}, {pipeline_mode = #tpu.pipeline_mode<synchronous>, transform_indices = @transform_4, window_bounds = array<i64: 1, 64>}, {pipeline_mode = #tpu.pipeline_mode<synchronous>, transform_indices = @transform_5, window_bounds = array<i64: 1, 64>}, {transform_indices = @transform_6, window_bounds = array<i64: 1, 16, 64>}]} {
    %c0 = arith.constant 0 : index
    %c0_0 = arith.constant 0 : index
    %c0_1 = arith.constant 0 : index
    %0 = vector.load %arg1[%c0, %c0_0, %c0_1] : memref<1x16x64xf32, #tpu.memory_space<vmem>>, vector<1x16x64xf32>
    %1 = vector.shape_cast %0 : vector<1x16x64xf32> to vector<16x64xf32>
    %c0_2 = arith.constant 0 : index
    %c0_3 = arith.constant 0 : index
    %2 = vector.load %arg3[%c0_2, %c0_3] : memref<1x64xf32, #tpu.memory_space<vmem>>, vector<1x64xf32>
    %3 = vector.broadcast %2 : vector<1x64xf32> to vector<16x64xf32>
    %4 = arith.mulf %1, %3 : vector<16x64xf32>
    %c0_4 = arith.constant 0 : index
    %c0_5 = arith.constant 0 : index
    %5 = vector.load %arg4[%c0_4, %c0_5] : memref<1x64xf32, #tpu.memory_space<vmem>>, vector<1x64xf32>
    %6 = vector.broadcast %5 : vector<1x64xf32> to vector<16x64xf32>
    %7 = arith.addf %4, %6 : vector<16x64xf32>
    %cst = arith.constant 0.000000e+00 : f32
    %8 = vector.broadcast %cst : f32 to vector<16x64xf32>
    %c0_6 = arith.constant 0 : index
    %c0_7 = arith.constant 0 : index
    %c0_8 = arith.constant 0 : index
    %9 = vector.load %arg2[%c0_6, %c0_7, %c0_8] : memref<1x64x64xf32, #tpu.memory_space<vmem>>, vector<1x64x64xf32>
    %10 = vector.shape_cast %9 : vector<1x64x64xf32> to vector<64x64xf32>
    %cst_9 = arith.constant dense<0.000000e+00> : vector<16x64xf32>
    %11 = tpu.matmul %7, %10, %cst_9 {dimension_numbers = #tpu.dot_dimension_numbers<[1], [0], [0], [1], [0, 0, 1, 1], [], []>} : vector<16x64xf32>, vector<64x64xf32>, vector<16x64xf32> -> vector<16x64xf32>
    %12 = arith.addf %8, %11 : vector<16x64xf32>
    %c0_10 = arith.constant 0 : index
    %c0_11 = arith.constant 0 : index
    %13 = vector.load %arg5[%c0_10, %c0_11] : memref<1x64xf32, #tpu.memory_space<vmem>>, vector<1x64xf32>
    %14 = vector.broadcast %13 : vector<1x64xf32> to vector<16x64xf32>
    %15 = arith.mulf %12, %14 : vector<16x64xf32>
    %c0_12 = arith.constant 0 : index
    %c0_13 = arith.constant 0 : index
    %16 = vector.load %arg6[%c0_12, %c0_13] : memref<1x64xf32, #tpu.memory_space<vmem>>, vector<1x64xf32>
    %17 = vector.broadcast %16 : vector<1x64xf32> to vector<16x64xf32>
    %18 = arith.addf %15, %17 : vector<16x64xf32>
    %19 = vector.shape_cast %18 : vector<16x64xf32> to vector<1x16x64xf32>
    %c0_14 = arith.constant 0 : index
    %c0_15 = arith.constant 0 : index
    %c0_16 = arith.constant 0 : index
    %20 = vector.load %arg7[%c0_14, %c0_15, %c0_16] : memref<1x16x64xf32, #tpu.memory_space<vmem>>, vector<1x16x64xf32>
    tpu.vector_store %arg7[%c0_14, %c0_15, %c0_16], %19 {strides = array<i32>} : memref<1x16x64xf32, #tpu.memory_space<vmem>>, vector<1x16x64xf32>,
    return
  }
  func.func @transform_0(%arg0: i32) -> (i32, i32, i32) {
    %c0_i32 = arith.constant 0 : i32
    %c0_i32_0 = arith.constant 0 : i32
    %c0_i32_1 = arith.constant 0 : i32
    return %arg0, %c0_i32, %c0_i32_0 : i32, i32, i32
  }
  func.func @transform_1(%arg0: i32) -> (i32, i32, i32) {
    %c0_i32 = arith.constant 0 : i32
    %c0_i32_0 = arith.constant 0 : i32
    %c0_i32_1 = arith.constant 0 : i32
    %c0_i32_2 = arith.constant 0 : i32
    return %c0_i32, %c0_i32_0, %c0_i32_1 : i32, i32, i32
  }
  func.func @transform_2(%arg0: i32) -> (i32, i32) {
    %c0_i32 = arith.constant 0 : i32
    %c0_i32_0 = arith.constant 0 : i32
    %c0_i32_1 = arith.constant 0 : i32
    return %c0_i32, %c0_i32_0 : i32, i32
  }
  func.func @transform_3(%arg0: i32) -> (i32, i32) {
    %c0_i32 = arith.constant 0 : i32
    %c0_i32_0 = arith.constant 0 : i32
    %c0_i32_1 = arith.constant 0 : i32
    return %c0_i32, %c0_i32_0 : i32, i32
  }
  func.func @transform_4(%arg0: i32) -> (i32, i32) {
    %c0_i32 = arith.constant 0 : i32
    %c0_i32_0 = arith.constant 0 : i32
    %c0_i32_1 = arith.constant 0 : i32
    return %c0_i32, %c0_i32_0 : i32, i32
  }
  func.func @transform_5(%arg0: i32) -> (i32, i32) {
    %c0_i32 = arith.constant 0 : i32
    %c0_i32_0 = arith.constant 0 : i32
    %c0_i32_1 = arith.constant 0 : i32
    return %c0_i32, %c0_i32_0 : i32, i32
  }
  func.func @transform_6(%arg0: i32) -> (i32, i32, i32) {
    %c0_i32 = arith.constant 0 : i32
    %c0_i32_0 = arith.constant 0 : i32
    %c0_i32_1 = arith.constant 0 : i32
    return %arg0, %c0_i32, %c0_i32_0 : i32, i32, i32
  }
}

module attributes {stable_mosaic.version = 11 : i64} {
  func.func @_conv_row_kernel(%arg0: i32, %arg1: memref<1x16x64xf32, #tpu.memory_space<vmem>>, %arg2: memref<3x64x64xf32, #tpu.memory_space<vmem>>, %arg3: memref<1x64xf32, #tpu.memory_space<vmem>>, %arg4: memref<1x64xf32, #tpu.memory_space<vmem>>, %arg5: memref<1x64xf32, #tpu.memory_space<vmem>>, %arg6: memref<1x64xf32, #tpu.memory_space<vmem>>, %arg7: memref<1x16x64xf32, #tpu.memory_space<vmem>>) attributes {dimension_semantics = [#tpu.dimension_semantics<parallel>], iteration_bounds = array<i64: 2>, scalar_prefetch = 0 : i64, scratch_operands = 0 : i64, tpu.core_type = #tpu.core_type<tc>, window_params = [{transform_indices = @transform_0, window_bounds = array<i64: 1, 16, 64>}, {pipeline_mode = #tpu.pipeline_mode<synchronous>, transform_indices = @transform_1, window_bounds = array<i64: 3, 64, 64>}, {pipeline_mode = #tpu.pipeline_mode<synchronous>, transform_indices = @transform_2, window_bounds = array<i64: 1, 64>}, {pipeline_mode = #tpu.pipeline_mode<synchronous>, transform_indices = @transform_3, window_bounds = array<i64: 1, 64>}, {pipeline_mode = #tpu.pipeline_mode<synchronous>, transform_indices = @transform_4, window_bounds = array<i64: 1, 64>}, {pipeline_mode = #tpu.pipeline_mode<synchronous>, transform_indices = @transform_5, window_bounds = array<i64: 1, 64>}, {transform_indices = @transform_6, window_bounds = array<i64: 1, 16, 64>}]} {
    %c0 = arith.constant 0 : index
    %c0_0 = arith.constant 0 : index
    %c0_1 = arith.constant 0 : index
    %0 = vector.load %arg1[%c0, %c0_0, %c0_1] : memref<1x16x64xf32, #tpu.memory_space<vmem>>, vector<1x16x64xf32>
    %1 = vector.shape_cast %0 : vector<1x16x64xf32> to vector<16x64xf32>
    %c0_2 = arith.constant 0 : index
    %c0_3 = arith.constant 0 : index
    %2 = vector.load %arg3[%c0_2, %c0_3] : memref<1x64xf32, #tpu.memory_space<vmem>>, vector<1x64xf32>
    %3 = vector.broadcast %2 : vector<1x64xf32> to vector<16x64xf32>
    %4 = arith.mulf %1, %3 : vector<16x64xf32>
    %c0_4 = arith.constant 0 : index
    %c0_5 = arith.constant 0 : index
    %5 = vector.load %arg4[%c0_4, %c0_5] : memref<1x64xf32, #tpu.memory_space<vmem>>, vector<1x64xf32>
    %6 = vector.broadcast %5 : vector<1x64xf32> to vector<16x64xf32>
    %7 = arith.addf %4, %6 : vector<16x64xf32>
    %cst = arith.constant 0.000000e+00 : f32
    %8 = vector.broadcast %cst : f32 to vector<1x64xf32>
    %9 = tpu.concatenate %8, %7, %8 in 0 : vector<1x64xf32>, vector<16x64xf32>, vector<1x64xf32> -> vector<18x64xf32>
    %cst_6 = arith.constant 0.000000e+00 : f32
    %10 = vector.broadcast %cst_6 : f32 to vector<16x64xf32>
    %11 = vector.extract_strided_slice %9 {offsets = [0, 0], sizes = [16, 64], strides = [1, 1]} : vector<18x64xf32> to vector<16x64xf32>
    %c0_7 = arith.constant 0 : index
    %c0_8 = arith.constant 0 : index
    %c0_9 = arith.constant 0 : index
    %12 = vector.load %arg2[%c0_7, %c0_8, %c0_9] : memref<3x64x64xf32, #tpu.memory_space<vmem>>, vector<1x64x64xf32>
    %13 = vector.shape_cast %12 : vector<1x64x64xf32> to vector<64x64xf32>
    %cst_10 = arith.constant dense<0.000000e+00> : vector<16x64xf32>
    %14 = tpu.matmul %11, %13, %cst_10 {dimension_numbers = #tpu.dot_dimension_numbers<[1], [0], [0], [1], [0, 0, 1, 1], [], []>} : vector<16x64xf32>, vector<64x64xf32>, vector<16x64xf32> -> vector<16x64xf32>
    %15 = arith.addf %10, %14 : vector<16x64xf32>
    %16 = vector.extract_strided_slice %9 {offsets = [1, 0], sizes = [16, 64], strides = [1, 1]} : vector<18x64xf32> to vector<16x64xf32>
    %c1 = arith.constant 1 : index
    %c0_11 = arith.constant 0 : index
    %c0_12 = arith.constant 0 : index
    %17 = vector.load %arg2[%c1, %c0_11, %c0_12] : memref<3x64x64xf32, #tpu.memory_space<vmem>>, vector<1x64x64xf32>
    %18 = vector.shape_cast %17 : vector<1x64x64xf32> to vector<64x64xf32>
    %cst_13 = arith.constant dense<0.000000e+00> : vector<16x64xf32>
    %19 = tpu.matmul %16, %18, %cst_13 {dimension_numbers = #tpu.dot_dimension_numbers<[1], [0], [0], [1], [0, 0, 1, 1], [], []>} : vector<16x64xf32>, vector<64x64xf32>, vector<16x64xf32> -> vector<16x64xf32>
    %20 = arith.addf %15, %19 : vector<16x64xf32>
    %21 = vector.extract_strided_slice %9 {offsets = [2, 0], sizes = [16, 64], strides = [1, 1]} : vector<18x64xf32> to vector<16x64xf32>
    %c2 = arith.constant 2 : index
    %c0_14 = arith.constant 0 : index
    %c0_15 = arith.constant 0 : index
    %22 = vector.load %arg2[%c2, %c0_14, %c0_15] : memref<3x64x64xf32, #tpu.memory_space<vmem>>, vector<1x64x64xf32>
    %23 = vector.shape_cast %22 : vector<1x64x64xf32> to vector<64x64xf32>
    %cst_16 = arith.constant dense<0.000000e+00> : vector<16x64xf32>
    %24 = tpu.matmul %21, %23, %cst_16 {dimension_numbers = #tpu.dot_dimension_numbers<[1], [0], [0], [1], [0, 0, 1, 1], [], []>} : vector<16x64xf32>, vector<64x64xf32>, vector<16x64xf32> -> vector<16x64xf32>
    %25 = arith.addf %20, %24 : vector<16x64xf32>
    %c0_17 = arith.constant 0 : index
    %c0_18 = arith.constant 0 : index
    %26 = vector.load %arg5[%c0_17, %c0_18] : memref<1x64xf32, #tpu.memory_space<vmem>>, vector<1x64xf32>
    %27 = vector.broadcast %26 : vector<1x64xf32> to vector<16x64xf32>
    %28 = arith.mulf %25, %27 : vector<16x64xf32>
    %c0_19 = arith.constant 0 : index
    %c0_20 = arith.constant 0 : index
    %29 = vector.load %arg6[%c0_19, %c0_20] : memref<1x64xf32, #tpu.memory_space<vmem>>, vector<1x64xf32>
    %30 = vector.broadcast %29 : vector<1x64xf32> to vector<16x64xf32>
    %31 = arith.addf %28, %30 : vector<16x64xf32>
    %cst_21 = arith.constant 0.000000e+00 : f32
    %32 = vector.broadcast %cst_21 : f32 to vector<16x64xf32>
    %33 = arith.maximumf %31, %32 : vector<16x64xf32>
    %34 = vector.shape_cast %33 : vector<16x64xf32> to vector<1x16x64xf32>
    %c0_22 = arith.constant 0 : index
    %c0_23 = arith.constant 0 : index
    %c0_24 = arith.constant 0 : index
    %35 = vector.load %arg7[%c0_22, %c0_23, %c0_24] : memref<1x16x64xf32, #tpu.memory_space<vmem>>, vector<1x16x64xf32>
    tpu.vector_store %arg7[%c0_22, %c0_23, %c0_24], %34 {strides = array<i32>} : memref<1x16x64xf32, #tpu.memory_space<vmem>>, vector<1x16x64xf32>,
    return
  }
  func.func @transform_0(%arg0: i32) -> (i32, i32, i32) {
    %c0_i32 = arith.constant 0 : i32
    %c0_i32_0 = arith.constant 0 : i32
    %c0_i32_1 = arith.constant 0 : i32
    return %arg0, %c0_i32, %c0_i32_0 : i32, i32, i32
  }
  func.func @transform_1(%arg0: i32) -> (i32, i32, i32) {
    %c0_i32 = arith.constant 0 : i32
    %c0_i32_0 = arith.constant 0 : i32
    %c0_i32_1 = arith.constant 0 : i32
    %c0_i32_2 = arith.constant 0 : i32
    return %c0_i32, %c0_i32_0, %c0_i32_1 : i32, i32, i32
  }
  func.func @transform_2(%arg0: i32) -> (i32, i32) {
    %c0_i32 = arith.constant 0 : i32
    %c0_i32_0 = arith.constant 0 : i32
    %c0_i32_1 = arith.constant 0 : i32
    return %c0_i32, %c0_i32_0 : i32, i32
  }
  func.func @transform_3(%arg0: i32) -> (i32, i32) {
    %c0_i32 = arith.constant 0 : i32
    %c0_i32_0 = arith.constant 0 : i32
    %c0_i32_1 = arith.constant 0 : i32
    return %c0_i32, %c0_i32_0 : i32, i32
  }
  func.func @transform_4(%arg0: i32) -> (i32, i32) {
    %c0_i32 = arith.constant 0 : i32
    %c0_i32_0 = arith.constant 0 : i32
    %c0_i32_1 = arith.constant 0 : i32
    return %c0_i32, %c0_i32_0 : i32, i32
  }
  func.func @transform_5(%arg0: i32) -> (i32, i32) {
    %c0_i32 = arith.constant 0 : i32
    %c0_i32_0 = arith.constant 0 : i32
    %c0_i32_1 = arith.constant 0 : i32
    return %c0_i32, %c0_i32_0 : i32, i32
  }
  func.func @transform_6(%arg0: i32) -> (i32, i32, i32) {
    %c0_i32 = arith.constant 0 : i32
    %c0_i32_0 = arith.constant 0 : i32
    %c0_i32_1 = arith.constant 0 : i32
    return %arg0, %c0_i32, %c0_i32_0 : i32, i32, i32
  }
}

module attributes {stable_mosaic.version = 11 : i64} {
  func.func @_conv_row_kernel(%arg0: i32, %arg1: memref<1x16x32xf32, #tpu.memory_space<vmem>>, %arg2: memref<7x32x16xf32, #tpu.memory_space<vmem>>, %arg3: memref<1x32xf32, #tpu.memory_space<vmem>>, %arg4: memref<1x32xf32, #tpu.memory_space<vmem>>, %arg5: memref<1x16xf32, #tpu.memory_space<vmem>>, %arg6: memref<1x16xf32, #tpu.memory_space<vmem>>, %arg7: memref<1x16x16xf32, #tpu.memory_space<vmem>>) attributes {dimension_semantics = [#tpu.dimension_semantics<parallel>], iteration_bounds = array<i64: 2>, scalar_prefetch = 0 : i64, scratch_operands = 0 : i64, tpu.core_type = #tpu.core_type<tc>, window_params = [{transform_indices = @transform_0, window_bounds = array<i64: 1, 16, 32>}, {pipeline_mode = #tpu.pipeline_mode<synchronous>, transform_indices = @transform_1, window_bounds = array<i64: 7, 32, 16>}, {pipeline_mode = #tpu.pipeline_mode<synchronous>, transform_indices = @transform_2, window_bounds = array<i64: 1, 32>}, {pipeline_mode = #tpu.pipeline_mode<synchronous>, transform_indices = @transform_3, window_bounds = array<i64: 1, 32>}, {pipeline_mode = #tpu.pipeline_mode<synchronous>, transform_indices = @transform_4, window_bounds = array<i64: 1, 16>}, {pipeline_mode = #tpu.pipeline_mode<synchronous>, transform_indices = @transform_5, window_bounds = array<i64: 1, 16>}, {transform_indices = @transform_6, window_bounds = array<i64: 1, 16, 16>}]} {
    %c0 = arith.constant 0 : index
    %c0_0 = arith.constant 0 : index
    %c0_1 = arith.constant 0 : index
    %0 = vector.load %arg1[%c0, %c0_0, %c0_1] : memref<1x16x32xf32, #tpu.memory_space<vmem>>, vector<1x16x32xf32>
    %1 = vector.shape_cast %0 : vector<1x16x32xf32> to vector<16x32xf32>
    %c0_2 = arith.constant 0 : index
    %c0_3 = arith.constant 0 : index
    %2 = vector.load %arg3[%c0_2, %c0_3] : memref<1x32xf32, #tpu.memory_space<vmem>>, vector<1x32xf32>
    %3 = vector.broadcast %2 : vector<1x32xf32> to vector<16x32xf32>
    %4 = arith.mulf %1, %3 : vector<16x32xf32>
    %c0_4 = arith.constant 0 : index
    %c0_5 = arith.constant 0 : index
    %5 = vector.load %arg4[%c0_4, %c0_5] : memref<1x32xf32, #tpu.memory_space<vmem>>, vector<1x32xf32>
    %6 = vector.broadcast %5 : vector<1x32xf32> to vector<16x32xf32>
    %7 = arith.addf %4, %6 : vector<16x32xf32>
    %cst = arith.constant 0.000000e+00 : f32
    %8 = vector.broadcast %cst : f32 to vector<3x32xf32>
    %9 = tpu.concatenate %8, %7, %8 in 0 : vector<3x32xf32>, vector<16x32xf32>, vector<3x32xf32> -> vector<22x32xf32>
    %cst_6 = arith.constant 0.000000e+00 : f32
    %10 = vector.broadcast %cst_6 : f32 to vector<16x16xf32>
    %11 = vector.extract_strided_slice %9 {offsets = [0, 0], sizes = [16, 32], strides = [1, 1]} : vector<22x32xf32> to vector<16x32xf32>
    %c0_7 = arith.constant 0 : index
    %c0_8 = arith.constant 0 : index
    %c0_9 = arith.constant 0 : index
    %12 = vector.load %arg2[%c0_7, %c0_8, %c0_9] : memref<7x32x16xf32, #tpu.memory_space<vmem>>, vector<1x32x16xf32>
    %13 = vector.shape_cast %12 : vector<1x32x16xf32> to vector<32x16xf32>
    %cst_10 = arith.constant dense<0.000000e+00> : vector<16x16xf32>
    %14 = tpu.matmul %11, %13, %cst_10 {dimension_numbers = #tpu.dot_dimension_numbers<[1], [0], [0], [1], [0, 0, 1, 1], [], []>} : vector<16x32xf32>, vector<32x16xf32>, vector<16x16xf32> -> vector<16x16xf32>
    %15 = arith.addf %10, %14 : vector<16x16xf32>
    %16 = vector.extract_strided_slice %9 {offsets = [1, 0], sizes = [16, 32], strides = [1, 1]} : vector<22x32xf32> to vector<16x32xf32>
    %c1 = arith.constant 1 : index
    %c0_11 = arith.constant 0 : index
    %c0_12 = arith.constant 0 : index
    %17 = vector.load %arg2[%c1, %c0_11, %c0_12] : memref<7x32x16xf32, #tpu.memory_space<vmem>>, vector<1x32x16xf32>
    %18 = vector.shape_cast %17 : vector<1x32x16xf32> to vector<32x16xf32>
    %cst_13 = arith.constant dense<0.000000e+00> : vector<16x16xf32>
    %19 = tpu.matmul %16, %18, %cst_13 {dimension_numbers = #tpu.dot_dimension_numbers<[1], [0], [0], [1], [0, 0, 1, 1], [], []>} : vector<16x32xf32>, vector<32x16xf32>, vector<16x16xf32> -> vector<16x16xf32>
    %20 = arith.addf %15, %19 : vector<16x16xf32>
    %21 = vector.extract_strided_slice %9 {offsets = [2, 0], sizes = [16, 32], strides = [1, 1]} : vector<22x32xf32> to vector<16x32xf32>
    %c2 = arith.constant 2 : index
    %c0_14 = arith.constant 0 : index
    %c0_15 = arith.constant 0 : index
    %22 = vector.load %arg2[%c2, %c0_14, %c0_15] : memref<7x32x16xf32, #tpu.memory_space<vmem>>, vector<1x32x16xf32>
    %23 = vector.shape_cast %22 : vector<1x32x16xf32> to vector<32x16xf32>
    %cst_16 = arith.constant dense<0.000000e+00> : vector<16x16xf32>
    %24 = tpu.matmul %21, %23, %cst_16 {dimension_numbers = #tpu.dot_dimension_numbers<[1], [0], [0], [1], [0, 0, 1, 1], [], []>} : vector<16x32xf32>, vector<32x16xf32>, vector<16x16xf32> -> vector<16x16xf32>
    %25 = arith.addf %20, %24 : vector<16x16xf32>
    %26 = vector.extract_strided_slice %9 {offsets = [3, 0], sizes = [16, 32], strides = [1, 1]} : vector<22x32xf32> to vector<16x32xf32>
    %c3 = arith.constant 3 : index
    %c0_17 = arith.constant 0 : index
    %c0_18 = arith.constant 0 : index
    %27 = vector.load %arg2[%c3, %c0_17, %c0_18] : memref<7x32x16xf32, #tpu.memory_space<vmem>>, vector<1x32x16xf32>
    %28 = vector.shape_cast %27 : vector<1x32x16xf32> to vector<32x16xf32>
    %cst_19 = arith.constant dense<0.000000e+00> : vector<16x16xf32>
    %29 = tpu.matmul %26, %28, %cst_19 {dimension_numbers = #tpu.dot_dimension_numbers<[1], [0], [0], [1], [0, 0, 1, 1], [], []>} : vector<16x32xf32>, vector<32x16xf32>, vector<16x16xf32> -> vector<16x16xf32>
    %30 = arith.addf %25, %29 : vector<16x16xf32>
    %31 = vector.extract_strided_slice %9 {offsets = [4, 0], sizes = [16, 32], strides = [1, 1]} : vector<22x32xf32> to vector<16x32xf32>
    %c4 = arith.constant 4 : index
    %c0_20 = arith.constant 0 : index
    %c0_21 = arith.constant 0 : index
    %32 = vector.load %arg2[%c4, %c0_20, %c0_21] : memref<7x32x16xf32, #tpu.memory_space<vmem>>, vector<1x32x16xf32>
    %33 = vector.shape_cast %32 : vector<1x32x16xf32> to vector<32x16xf32>
    %cst_22 = arith.constant dense<0.000000e+00> : vector<16x16xf32>
    %34 = tpu.matmul %31, %33, %cst_22 {dimension_numbers = #tpu.dot_dimension_numbers<[1], [0], [0], [1], [0, 0, 1, 1], [], []>} : vector<16x32xf32>, vector<32x16xf32>, vector<16x16xf32> -> vector<16x16xf32>
    %35 = arith.addf %30, %34 : vector<16x16xf32>
    %36 = vector.extract_strided_slice %9 {offsets = [5, 0], sizes = [16, 32], strides = [1, 1]} : vector<22x32xf32> to vector<16x32xf32>
    %c5 = arith.constant 5 : index
    %c0_23 = arith.constant 0 : index
    %c0_24 = arith.constant 0 : index
    %37 = vector.load %arg2[%c5, %c0_23, %c0_24] : memref<7x32x16xf32, #tpu.memory_space<vmem>>, vector<1x32x16xf32>
    %38 = vector.shape_cast %37 : vector<1x32x16xf32> to vector<32x16xf32>
    %cst_25 = arith.constant dense<0.000000e+00> : vector<16x16xf32>
    %39 = tpu.matmul %36, %38, %cst_25 {dimension_numbers = #tpu.dot_dimension_numbers<[1], [0], [0], [1], [0, 0, 1, 1], [], []>} : vector<16x32xf32>, vector<32x16xf32>, vector<16x16xf32> -> vector<16x16xf32>
    %40 = arith.addf %35, %39 : vector<16x16xf32>
    %41 = vector.extract_strided_slice %9 {offsets = [6, 0], sizes = [16, 32], strides = [1, 1]} : vector<22x32xf32> to vector<16x32xf32>
    %c6 = arith.constant 6 : index
    %c0_26 = arith.constant 0 : index
    %c0_27 = arith.constant 0 : index
    %42 = vector.load %arg2[%c6, %c0_26, %c0_27] : memref<7x32x16xf32, #tpu.memory_space<vmem>>, vector<1x32x16xf32>
    %43 = vector.shape_cast %42 : vector<1x32x16xf32> to vector<32x16xf32>
    %cst_28 = arith.constant dense<0.000000e+00> : vector<16x16xf32>
    %44 = tpu.matmul %41, %43, %cst_28 {dimension_numbers = #tpu.dot_dimension_numbers<[1], [0], [0], [1], [0, 0, 1, 1], [], []>} : vector<16x32xf32>, vector<32x16xf32>, vector<16x16xf32> -> vector<16x16xf32>
    %45 = arith.addf %40, %44 : vector<16x16xf32>
    %c0_29 = arith.constant 0 : index
    %c0_30 = arith.constant 0 : index
    %46 = vector.load %arg5[%c0_29, %c0_30] : memref<1x16xf32, #tpu.memory_space<vmem>>, vector<1x16xf32>
    %47 = vector.broadcast %46 : vector<1x16xf32> to vector<16x16xf32>
    %48 = arith.mulf %45, %47 : vector<16x16xf32>
    %c0_31 = arith.constant 0 : index
    %c0_32 = arith.constant 0 : index
    %49 = vector.load %arg6[%c0_31, %c0_32] : memref<1x16xf32, #tpu.memory_space<vmem>>, vector<1x16xf32>
    %50 = vector.broadcast %49 : vector<1x16xf32> to vector<16x16xf32>
    %51 = arith.addf %48, %50 : vector<16x16xf32>
    %cst_33 = arith.constant 0.000000e+00 : f32
    %52 = vector.broadcast %cst_33 : f32 to vector<16x16xf32>
    %53 = arith.subf %52, %51 : vector<16x16xf32>
    %54 = math.exp %53 : vector<16x16xf32>
    %cst_34 = arith.constant 1.000000e+00 : f32
    %55 = vector.broadcast %cst_34 : f32 to vector<16x16xf32>
    %56 = arith.addf %55, %54 : vector<16x16xf32>
    %cst_35 = arith.constant 1.000000e+00 : f32
    %57 = vector.broadcast %cst_35 : f32 to vector<16x16xf32>
    %58 = arith.divf %57, %56 : vector<16x16xf32>
    %59 = vector.shape_cast %58 : vector<16x16xf32> to vector<1x16x16xf32>
    %c0_36 = arith.constant 0 : index
    %c0_37 = arith.constant 0 : index
    %c0_38 = arith.constant 0 : index
    %60 = vector.load %arg7[%c0_36, %c0_37, %c0_38] : memref<1x16x16xf32, #tpu.memory_space<vmem>>, vector<1x16x16xf32>
    tpu.vector_store %arg7[%c0_36, %c0_37, %c0_38], %59 {strides = array<i32>} : memref<1x16x16xf32, #tpu.memory_space<vmem>>, vector<1x16x16xf32>,
    return
  }
  func.func @transform_0(%arg0: i32) -> (i32, i32, i32) {
    %c0_i32 = arith.constant 0 : i32
    %c0_i32_0 = arith.constant 0 : i32
    %c0_i32_1 = arith.constant 0 : i32
    return %arg0, %c0_i32, %c0_i32_0 : i32, i32, i32
  }
  func.func @transform_1(%arg0: i32) -> (i32, i32, i32) {
    %c0_i32 = arith.constant 0 : i32
    %c0_i32_0 = arith.constant 0 : i32
    %c0_i32_1 = arith.constant 0 : i32
    %c0_i32_2 = arith.constant 0 : i32
    return %c0_i32, %c0_i32_0, %c0_i32_1 : i32, i32, i32
  }
  func.func @transform_2(%arg0: i32) -> (i32, i32) {
    %c0_i32 = arith.constant 0 : i32
    %c0_i32_0 = arith.constant 0 : i32
    %c0_i32_1 = arith.constant 0 : i32
    return %c0_i32, %c0_i32_0 : i32, i32
  }
  func.func @transform_3(%arg0: i32) -> (i32, i32) {
    %c0_i32 = arith.constant 0 : i32
    %c0_i32_0 = arith.constant 0 : i32
    %c0_i32_1 = arith.constant 0 : i32
    return %c0_i32, %c0_i32_0 : i32, i32
  }
  func.func @transform_4(%arg0: i32) -> (i32, i32) {
    %c0_i32 = arith.constant 0 : i32
    %c0_i32_0 = arith.constant 0 : i32
    %c0_i32_1 = arith.constant 0 : i32
    return %c0_i32, %c0_i32_0 : i32, i32
  }
  func.func @transform_5(%arg0: i32) -> (i32, i32) {
    %c0_i32 = arith.constant 0 : i32
    %c0_i32_0 = arith.constant 0 : i32
    %c0_i32_1 = arith.constant 0 : i32
    return %c0_i32, %c0_i32_0 : i32, i32
  }
  func.func @transform_6(%arg0: i32) -> (i32, i32, i32) {
    %c0_i32 = arith.constant 0 : i32
    %c0_i32_0 = arith.constant 0 : i32
    %c0_i32_1 = arith.constant 0 : i32
    return %arg0, %c0_i32, %c0_i32_0 : i32, i32, i32
  }
}

module attributes {stable_mosaic.version = 11 : i64} {
  func.func @_conv_row_kernel(%arg0: i32, %arg1: memref<1x1x4xf32, #tpu.memory_space<vmem>>, %arg2: memref<1x4x2xf32, #tpu.memory_space<vmem>>, %arg3: memref<1x4xf32, #tpu.memory_space<vmem>>, %arg4: memref<1x4xf32, #tpu.memory_space<vmem>>, %arg5: memref<1x2xf32, #tpu.memory_space<vmem>>, %arg6: memref<1x2xf32, #tpu.memory_space<vmem>>, %arg7: memref<1x1x2xf32, #tpu.memory_space<vmem>>) attributes {dimension_semantics = [#tpu.dimension_semantics<parallel>], iteration_bounds = array<i64: 2>, scalar_prefetch = 0 : i64, scratch_operands = 0 : i64, tpu.core_type = #tpu.core_type<tc>, window_params = [{transform_indices = @transform_0, window_bounds = array<i64: 1, 1, 4>}, {pipeline_mode = #tpu.pipeline_mode<synchronous>, transform_indices = @transform_1, window_bounds = array<i64: 1, 4, 2>}, {pipeline_mode = #tpu.pipeline_mode<synchronous>, transform_indices = @transform_2, window_bounds = array<i64: 1, 4>}, {pipeline_mode = #tpu.pipeline_mode<synchronous>, transform_indices = @transform_3, window_bounds = array<i64: 1, 4>}, {pipeline_mode = #tpu.pipeline_mode<synchronous>, transform_indices = @transform_4, window_bounds = array<i64: 1, 2>}, {pipeline_mode = #tpu.pipeline_mode<synchronous>, transform_indices = @transform_5, window_bounds = array<i64: 1, 2>}, {transform_indices = @transform_6, window_bounds = array<i64: 1, 1, 2>}]} {
    %c0 = arith.constant 0 : index
    %c0_0 = arith.constant 0 : index
    %c0_1 = arith.constant 0 : index
    %0 = vector.load %arg1[%c0, %c0_0, %c0_1] : memref<1x1x4xf32, #tpu.memory_space<vmem>>, vector<1x1x4xf32>
    %1 = vector.shape_cast %0 : vector<1x1x4xf32> to vector<1x4xf32>
    %c0_2 = arith.constant 0 : index
    %c0_3 = arith.constant 0 : index
    %2 = vector.load %arg3[%c0_2, %c0_3] : memref<1x4xf32, #tpu.memory_space<vmem>>, vector<1x4xf32>
    %3 = arith.mulf %1, %2 : vector<1x4xf32>
    %c0_4 = arith.constant 0 : index
    %c0_5 = arith.constant 0 : index
    %4 = vector.load %arg4[%c0_4, %c0_5] : memref<1x4xf32, #tpu.memory_space<vmem>>, vector<1x4xf32>
    %5 = arith.addf %3, %4 : vector<1x4xf32>
    %cst = arith.constant 0.000000e+00 : f32
    %6 = vector.broadcast %cst : f32 to vector<1x2xf32>
    %c0_6 = arith.constant 0 : index
    %c0_7 = arith.constant 0 : index
    %c0_8 = arith.constant 0 : index
    %7 = vector.load %arg2[%c0_6, %c0_7, %c0_8] : memref<1x4x2xf32, #tpu.memory_space<vmem>>, vector<1x4x2xf32>
    %8 = vector.shape_cast %7 : vector<1x4x2xf32> to vector<4x2xf32>
    %cst_9 = arith.constant dense<0.000000e+00> : vector<1x2xf32>
    %9 = tpu.matmul %5, %8, %cst_9 {dimension_numbers = #tpu.dot_dimension_numbers<[1], [0], [0], [1], [0, 0, 1, 1], [], []>} : vector<1x4xf32>, vector<4x2xf32>, vector<1x2xf32> -> vector<1x2xf32>
    %10 = arith.addf %6, %9 : vector<1x2xf32>
    %c0_10 = arith.constant 0 : index
    %c0_11 = arith.constant 0 : index
    %11 = vector.load %arg5[%c0_10, %c0_11] : memref<1x2xf32, #tpu.memory_space<vmem>>, vector<1x2xf32>
    %12 = arith.mulf %10, %11 : vector<1x2xf32>
    %c0_12 = arith.constant 0 : index
    %c0_13 = arith.constant 0 : index
    %13 = vector.load %arg6[%c0_12, %c0_13] : memref<1x2xf32, #tpu.memory_space<vmem>>, vector<1x2xf32>
    %14 = arith.addf %12, %13 : vector<1x2xf32>
    %cst_14 = arith.constant 0.000000e+00 : f32
    %15 = vector.broadcast %cst_14 : f32 to vector<1x2xf32>
    %16 = arith.maximumf %14, %15 : vector<1x2xf32>
    %17 = vector.shape_cast %16 : vector<1x2xf32> to vector<1x1x2xf32>
    %c0_15 = arith.constant 0 : index
    %c0_16 = arith.constant 0 : index
    %c0_17 = arith.constant 0 : index
    %18 = vector.load %arg7[%c0_15, %c0_16, %c0_17] : memref<1x1x2xf32, #tpu.memory_space<vmem>>, vector<1x1x2xf32>
    tpu.vector_store %arg7[%c0_15, %c0_16, %c0_17], %17 {strides = array<i32>} : memref<1x1x2xf32, #tpu.memory_space<vmem>>, vector<1x1x2xf32>,
    return
  }
  func.func @transform_0(%arg0: i32) -> (i32, i32, i32) {
    %c0_i32 = arith.constant 0 : i32
    %c0_i32_0 = arith.constant 0 : i32
    %c0_i32_1 = arith.constant 0 : i32
    return %arg0, %c0_i32, %c0_i32_0 : i32, i32, i32
  }
  func.func @transform_1(%arg0: i32) -> (i32, i32, i32) {
    %c0_i32 = arith.constant 0 : i32
    %c0_i32_0 = arith.constant 0 : i32
    %c0_i32_1 = arith.constant 0 : i32
    %c0_i32_2 = arith.constant 0 : i32
    return %c0_i32, %c0_i32_0, %c0_i32_1 : i32, i32, i32
  }
  func.func @transform_2(%arg0: i32) -> (i32, i32) {
    %c0_i32 = arith.constant 0 : i32
    %c0_i32_0 = arith.constant 0 : i32
    %c0_i32_1 = arith.constant 0 : i32
    return %c0_i32, %c0_i32_0 : i32, i32
  }
  func.func @transform_3(%arg0: i32) -> (i32, i32) {
    %c0_i32 = arith.constant 0 : i32
    %c0_i32_0 = arith.constant 0 : i32
    %c0_i32_1 = arith.constant 0 : i32
    return %c0_i32, %c0_i32_0 : i32, i32
  }
  func.func @transform_4(%arg0: i32) -> (i32, i32) {
    %c0_i32 = arith.constant 0 : i32
    %c0_i32_0 = arith.constant 0 : i32
    %c0_i32_1 = arith.constant 0 : i32
    return %c0_i32, %c0_i32_0 : i32, i32
  }
  func.func @transform_5(%arg0: i32) -> (i32, i32) {
    %c0_i32 = arith.constant 0 : i32
    %c0_i32_0 = arith.constant 0 : i32
    %c0_i32_1 = arith.constant 0 : i32
    return %c0_i32, %c0_i32_0 : i32, i32
  }
  func.func @transform_6(%arg0: i32) -> (i32, i32, i32) {
    %c0_i32 = arith.constant 0 : i32
    %c0_i32_0 = arith.constant 0 : i32
    %c0_i32_1 = arith.constant 0 : i32
    return %arg0, %c0_i32, %c0_i32_0 : i32, i32, i32
  }
}

module attributes {stable_mosaic.version = 11 : i64} {
  func.func @_conv_row_kernel(%arg0: i32, %arg1: memref<1x1x2xf32, #tpu.memory_space<vmem>>, %arg2: memref<1x2x4xf32, #tpu.memory_space<vmem>>, %arg3: memref<1x2xf32, #tpu.memory_space<vmem>>, %arg4: memref<1x2xf32, #tpu.memory_space<vmem>>, %arg5: memref<1x4xf32, #tpu.memory_space<vmem>>, %arg6: memref<1x4xf32, #tpu.memory_space<vmem>>, %arg7: memref<1x1x4xf32, #tpu.memory_space<vmem>>) attributes {dimension_semantics = [#tpu.dimension_semantics<parallel>], iteration_bounds = array<i64: 2>, scalar_prefetch = 0 : i64, scratch_operands = 0 : i64, tpu.core_type = #tpu.core_type<tc>, window_params = [{transform_indices = @transform_0, window_bounds = array<i64: 1, 1, 2>}, {pipeline_mode = #tpu.pipeline_mode<synchronous>, transform_indices = @transform_1, window_bounds = array<i64: 1, 2, 4>}, {pipeline_mode = #tpu.pipeline_mode<synchronous>, transform_indices = @transform_2, window_bounds = array<i64: 1, 2>}, {pipeline_mode = #tpu.pipeline_mode<synchronous>, transform_indices = @transform_3, window_bounds = array<i64: 1, 2>}, {pipeline_mode = #tpu.pipeline_mode<synchronous>, transform_indices = @transform_4, window_bounds = array<i64: 1, 4>}, {pipeline_mode = #tpu.pipeline_mode<synchronous>, transform_indices = @transform_5, window_bounds = array<i64: 1, 4>}, {transform_indices = @transform_6, window_bounds = array<i64: 1, 1, 4>}]} {
    %c0 = arith.constant 0 : index
    %c0_0 = arith.constant 0 : index
    %c0_1 = arith.constant 0 : index
    %0 = vector.load %arg1[%c0, %c0_0, %c0_1] : memref<1x1x2xf32, #tpu.memory_space<vmem>>, vector<1x1x2xf32>
    %1 = vector.shape_cast %0 : vector<1x1x2xf32> to vector<1x2xf32>
    %c0_2 = arith.constant 0 : index
    %c0_3 = arith.constant 0 : index
    %2 = vector.load %arg3[%c0_2, %c0_3] : memref<1x2xf32, #tpu.memory_space<vmem>>, vector<1x2xf32>
    %3 = arith.mulf %1, %2 : vector<1x2xf32>
    %c0_4 = arith.constant 0 : index
    %c0_5 = arith.constant 0 : index
    %4 = vector.load %arg4[%c0_4, %c0_5] : memref<1x2xf32, #tpu.memory_space<vmem>>, vector<1x2xf32>
    %5 = arith.addf %3, %4 : vector<1x2xf32>
    %cst = arith.constant 0.000000e+00 : f32
    %6 = vector.broadcast %cst : f32 to vector<1x4xf32>
    %c0_6 = arith.constant 0 : index
    %c0_7 = arith.constant 0 : index
    %c0_8 = arith.constant 0 : index
    %7 = vector.load %arg2[%c0_6, %c0_7, %c0_8] : memref<1x2x4xf32, #tpu.memory_space<vmem>>, vector<1x2x4xf32>
    %8 = vector.shape_cast %7 : vector<1x2x4xf32> to vector<2x4xf32>
    %cst_9 = arith.constant dense<0.000000e+00> : vector<1x4xf32>
    %9 = tpu.matmul %5, %8, %cst_9 {dimension_numbers = #tpu.dot_dimension_numbers<[1], [0], [0], [1], [0, 0, 1, 1], [], []>} : vector<1x2xf32>, vector<2x4xf32>, vector<1x4xf32> -> vector<1x4xf32>
    %10 = arith.addf %6, %9 : vector<1x4xf32>
    %c0_10 = arith.constant 0 : index
    %c0_11 = arith.constant 0 : index
    %11 = vector.load %arg5[%c0_10, %c0_11] : memref<1x4xf32, #tpu.memory_space<vmem>>, vector<1x4xf32>
    %12 = arith.mulf %10, %11 : vector<1x4xf32>
    %c0_12 = arith.constant 0 : index
    %c0_13 = arith.constant 0 : index
    %13 = vector.load %arg6[%c0_12, %c0_13] : memref<1x4xf32, #tpu.memory_space<vmem>>, vector<1x4xf32>
    %14 = arith.addf %12, %13 : vector<1x4xf32>
    %cst_14 = arith.constant 0.000000e+00 : f32
    %15 = vector.broadcast %cst_14 : f32 to vector<1x4xf32>
    %16 = arith.subf %15, %14 : vector<1x4xf32>
    %17 = math.exp %16 : vector<1x4xf32>
    %cst_15 = arith.constant 1.000000e+00 : f32
    %18 = vector.broadcast %cst_15 : f32 to vector<1x4xf32>
    %19 = arith.addf %18, %17 : vector<1x4xf32>
    %cst_16 = arith.constant 1.000000e+00 : f32
    %20 = vector.broadcast %cst_16 : f32 to vector<1x4xf32>
    %21 = arith.divf %20, %19 : vector<1x4xf32>
    %22 = vector.shape_cast %21 : vector<1x4xf32> to vector<1x1x4xf32>
    %c0_17 = arith.constant 0 : index
    %c0_18 = arith.constant 0 : index
    %c0_19 = arith.constant 0 : index
    %23 = vector.load %arg7[%c0_17, %c0_18, %c0_19] : memref<1x1x4xf32, #tpu.memory_space<vmem>>, vector<1x1x4xf32>
    tpu.vector_store %arg7[%c0_17, %c0_18, %c0_19], %22 {strides = array<i32>} : memref<1x1x4xf32, #tpu.memory_space<vmem>>, vector<1x1x4xf32>,
    return
  }
  func.func @transform_0(%arg0: i32) -> (i32, i32, i32) {
    %c0_i32 = arith.constant 0 : i32
    %c0_i32_0 = arith.constant 0 : i32
    %c0_i32_1 = arith.constant 0 : i32
    return %arg0, %c0_i32, %c0_i32_0 : i32, i32, i32
  }
  func.func @transform_1(%arg0: i32) -> (i32, i32, i32) {
    %c0_i32 = arith.constant 0 : i32
    %c0_i32_0 = arith.constant 0 : i32
    %c0_i32_1 = arith.constant 0 : i32
    %c0_i32_2 = arith.constant 0 : i32
    return %c0_i32, %c0_i32_0, %c0_i32_1 : i32, i32, i32
  }
  func.func @transform_2(%arg0: i32) -> (i32, i32) {
    %c0_i32 = arith.constant 0 : i32
    %c0_i32_0 = arith.constant 0 : i32
    %c0_i32_1 = arith.constant 0 : i32
    return %c0_i32, %c0_i32_0 : i32, i32
  }
  func.func @transform_3(%arg0: i32) -> (i32, i32) {
    %c0_i32 = arith.constant 0 : i32
    %c0_i32_0 = arith.constant 0 : i32
    %c0_i32_1 = arith.constant 0 : i32
    return %c0_i32, %c0_i32_0 : i32, i32
  }
  func.func @transform_4(%arg0: i32) -> (i32, i32) {
    %c0_i32 = arith.constant 0 : i32
    %c0_i32_0 = arith.constant 0 : i32
    %c0_i32_1 = arith.constant 0 : i32
    return %c0_i32, %c0_i32_0 : i32, i32
  }
  func.func @transform_5(%arg0: i32) -> (i32, i32) {
    %c0_i32 = arith.constant 0 : i32
    %c0_i32_0 = arith.constant 0 : i32
    %c0_i32_1 = arith.constant 0 : i32
    return %c0_i32, %c0_i32_0 : i32, i32
  }
  func.func @transform_6(%arg0: i32) -> (i32, i32, i32) {
    %c0_i32 = arith.constant 0 : i32
    %c0_i32_0 = arith.constant 0 : i32
    %c0_i32_1 = arith.constant 0 : i32
    return %arg0, %c0_i32, %c0_i32_0 : i32, i32, i32
  }
}

module attributes {stable_mosaic.version = 11 : i64} {
  func.func @_conv_row_kernel(%arg0: i32, %arg1: memref<1x16x192xf32, #tpu.memory_space<vmem>>, %arg2: memref<1x192x64xf32, #tpu.memory_space<vmem>>, %arg3: memref<1x192xf32, #tpu.memory_space<vmem>>, %arg4: memref<1x192xf32, #tpu.memory_space<vmem>>, %arg5: memref<1x64xf32, #tpu.memory_space<vmem>>, %arg6: memref<1x64xf32, #tpu.memory_space<vmem>>, %arg7: memref<1x16x64xf32, #tpu.memory_space<vmem>>) attributes {dimension_semantics = [#tpu.dimension_semantics<parallel>], iteration_bounds = array<i64: 2>, scalar_prefetch = 0 : i64, scratch_operands = 0 : i64, tpu.core_type = #tpu.core_type<tc>, window_params = [{transform_indices = @transform_0, window_bounds = array<i64: 1, 16, 192>}, {pipeline_mode = #tpu.pipeline_mode<synchronous>, transform_indices = @transform_1, window_bounds = array<i64: 1, 192, 64>}, {pipeline_mode = #tpu.pipeline_mode<synchronous>, transform_indices = @transform_2, window_bounds = array<i64: 1, 192>}, {pipeline_mode = #tpu.pipeline_mode<synchronous>, transform_indices = @transform_3, window_bounds = array<i64: 1, 192>}, {pipeline_mode = #tpu.pipeline_mode<synchronous>, transform_indices = @transform_4, window_bounds = array<i64: 1, 64>}, {pipeline_mode = #tpu.pipeline_mode<synchronous>, transform_indices = @transform_5, window_bounds = array<i64: 1, 64>}, {transform_indices = @transform_6, window_bounds = array<i64: 1, 16, 64>}]} {
    %c0 = arith.constant 0 : index
    %c0_0 = arith.constant 0 : index
    %c0_1 = arith.constant 0 : index
    %0 = vector.load %arg1[%c0, %c0_0, %c0_1] : memref<1x16x192xf32, #tpu.memory_space<vmem>>, vector<1x16x192xf32>
    %1 = vector.shape_cast %0 : vector<1x16x192xf32> to vector<16x192xf32>
    %c0_2 = arith.constant 0 : index
    %c0_3 = arith.constant 0 : index
    %2 = vector.load %arg3[%c0_2, %c0_3] : memref<1x192xf32, #tpu.memory_space<vmem>>, vector<1x192xf32>
    %3 = vector.broadcast %2 : vector<1x192xf32> to vector<16x192xf32>
    %4 = arith.mulf %1, %3 : vector<16x192xf32>
    %c0_4 = arith.constant 0 : index
    %c0_5 = arith.constant 0 : index
    %5 = vector.load %arg4[%c0_4, %c0_5] : memref<1x192xf32, #tpu.memory_space<vmem>>, vector<1x192xf32>
    %6 = vector.broadcast %5 : vector<1x192xf32> to vector<16x192xf32>
    %7 = arith.addf %4, %6 : vector<16x192xf32>
    %cst = arith.constant 0.000000e+00 : f32
    %8 = vector.broadcast %cst : f32 to vector<16x192xf32>
    %9 = arith.maximumf %7, %8 : vector<16x192xf32>
    %cst_6 = arith.constant 0.000000e+00 : f32
    %10 = vector.broadcast %cst_6 : f32 to vector<16x64xf32>
    %c0_7 = arith.constant 0 : index
    %c0_8 = arith.constant 0 : index
    %c0_9 = arith.constant 0 : index
    %11 = vector.load %arg2[%c0_7, %c0_8, %c0_9] : memref<1x192x64xf32, #tpu.memory_space<vmem>>, vector<1x192x64xf32>
    %12 = vector.shape_cast %11 : vector<1x192x64xf32> to vector<192x64xf32>
    %cst_10 = arith.constant dense<0.000000e+00> : vector<16x64xf32>
    %13 = tpu.matmul %9, %12, %cst_10 {dimension_numbers = #tpu.dot_dimension_numbers<[1], [0], [0], [1], [0, 0, 1, 1], [], []>} : vector<16x192xf32>, vector<192x64xf32>, vector<16x64xf32> -> vector<16x64xf32>
    %14 = arith.addf %10, %13 : vector<16x64xf32>
    %c0_11 = arith.constant 0 : index
    %c0_12 = arith.constant 0 : index
    %15 = vector.load %arg5[%c0_11, %c0_12] : memref<1x64xf32, #tpu.memory_space<vmem>>, vector<1x64xf32>
    %16 = vector.broadcast %15 : vector<1x64xf32> to vector<16x64xf32>
    %17 = arith.mulf %14, %16 : vector<16x64xf32>
    %c0_13 = arith.constant 0 : index
    %c0_14 = arith.constant 0 : index
    %18 = vector.load %arg6[%c0_13, %c0_14] : memref<1x64xf32, #tpu.memory_space<vmem>>, vector<1x64xf32>
    %19 = vector.broadcast %18 : vector<1x64xf32> to vector<16x64xf32>
    %20 = arith.addf %17, %19 : vector<16x64xf32>
    %21 = vector.shape_cast %20 : vector<16x64xf32> to vector<1x16x64xf32>
    %c0_15 = arith.constant 0 : index
    %c0_16 = arith.constant 0 : index
    %c0_17 = arith.constant 0 : index
    %22 = vector.load %arg7[%c0_15, %c0_16, %c0_17] : memref<1x16x64xf32, #tpu.memory_space<vmem>>, vector<1x16x64xf32>
    tpu.vector_store %arg7[%c0_15, %c0_16, %c0_17], %21 {strides = array<i32>} : memref<1x16x64xf32, #tpu.memory_space<vmem>>, vector<1x16x64xf32>,
    return
  }
  func.func @transform_0(%arg0: i32) -> (i32, i32, i32) {
    %c0_i32 = arith.constant 0 : i32
    %c0_i32_0 = arith.constant 0 : i32
    %c0_i32_1 = arith.constant 0 : i32
    return %arg0, %c0_i32, %c0_i32_0 : i32, i32, i32
  }
  func.func @transform_1(%arg0: i32) -> (i32, i32, i32) {
    %c0_i32 = arith.constant 0 : i32
    %c0_i32_0 = arith.constant 0 : i32
    %c0_i32_1 = arith.constant 0 : i32
    %c0_i32_2 = arith.constant 0 : i32
    return %c0_i32, %c0_i32_0, %c0_i32_1 : i32, i32, i32
  }
  func.func @transform_2(%arg0: i32) -> (i32, i32) {
    %c0_i32 = arith.constant 0 : i32
    %c0_i32_0 = arith.constant 0 : i32
    %c0_i32_1 = arith.constant 0 : i32
    return %c0_i32, %c0_i32_0 : i32, i32
  }
  func.func @transform_3(%arg0: i32) -> (i32, i32) {
    %c0_i32 = arith.constant 0 : i32
    %c0_i32_0 = arith.constant 0 : i32
    %c0_i32_1 = arith.constant 0 : i32
    return %c0_i32, %c0_i32_0 : i32, i32
  }
  func.func @transform_4(%arg0: i32) -> (i32, i32) {
    %c0_i32 = arith.constant 0 : i32
    %c0_i32_0 = arith.constant 0 : i32
    %c0_i32_1 = arith.constant 0 : i32
    return %c0_i32, %c0_i32_0 : i32, i32
  }
  func.func @transform_5(%arg0: i32) -> (i32, i32) {
    %c0_i32 = arith.constant 0 : i32
    %c0_i32_0 = arith.constant 0 : i32
    %c0_i32_1 = arith.constant 0 : i32
    return %c0_i32, %c0_i32_0 : i32, i32
  }
  func.func @transform_6(%arg0: i32) -> (i32, i32, i32) {
    %c0_i32 = arith.constant 0 : i32
    %c0_i32_0 = arith.constant 0 : i32
    %c0_i32_1 = arith.constant 0 : i32
    return %arg0, %c0_i32, %c0_i32_0 : i32, i32, i32
  }
}

module attributes {stable_mosaic.version = 11 : i64} {
  func.func @_conv_row_kernel(%arg0: i32, %arg1: memref<1x16x64xf32, #tpu.memory_space<vmem>>, %arg2: memref<3x64x64xf32, #tpu.memory_space<vmem>>, %arg3: memref<1x64xf32, #tpu.memory_space<vmem>>, %arg4: memref<1x64xf32, #tpu.memory_space<vmem>>, %arg5: memref<1x64xf32, #tpu.memory_space<vmem>>, %arg6: memref<1x64xf32, #tpu.memory_space<vmem>>, %arg7: memref<1x16x64xf32, #tpu.memory_space<vmem>>) attributes {dimension_semantics = [#tpu.dimension_semantics<parallel>], iteration_bounds = array<i64: 2>, scalar_prefetch = 0 : i64, scratch_operands = 0 : i64, tpu.core_type = #tpu.core_type<tc>, window_params = [{transform_indices = @transform_0, window_bounds = array<i64: 1, 16, 64>}, {pipeline_mode = #tpu.pipeline_mode<synchronous>, transform_indices = @transform_1, window_bounds = array<i64: 3, 64, 64>}, {pipeline_mode = #tpu.pipeline_mode<synchronous>, transform_indices = @transform_2, window_bounds = array<i64: 1, 64>}, {pipeline_mode = #tpu.pipeline_mode<synchronous>, transform_indices = @transform_3, window_bounds = array<i64: 1, 64>}, {pipeline_mode = #tpu.pipeline_mode<synchronous>, transform_indices = @transform_4, window_bounds = array<i64: 1, 64>}, {pipeline_mode = #tpu.pipeline_mode<synchronous>, transform_indices = @transform_5, window_bounds = array<i64: 1, 64>}, {transform_indices = @transform_6, window_bounds = array<i64: 1, 16, 64>}]} {
    %c0 = arith.constant 0 : index
    %c0_0 = arith.constant 0 : index
    %c0_1 = arith.constant 0 : index
    %0 = vector.load %arg1[%c0, %c0_0, %c0_1] : memref<1x16x64xf32, #tpu.memory_space<vmem>>, vector<1x16x64xf32>
    %1 = vector.shape_cast %0 : vector<1x16x64xf32> to vector<16x64xf32>
    %c0_2 = arith.constant 0 : index
    %c0_3 = arith.constant 0 : index
    %2 = vector.load %arg3[%c0_2, %c0_3] : memref<1x64xf32, #tpu.memory_space<vmem>>, vector<1x64xf32>
    %3 = vector.broadcast %2 : vector<1x64xf32> to vector<16x64xf32>
    %4 = arith.mulf %1, %3 : vector<16x64xf32>
    %c0_4 = arith.constant 0 : index
    %c0_5 = arith.constant 0 : index
    %5 = vector.load %arg4[%c0_4, %c0_5] : memref<1x64xf32, #tpu.memory_space<vmem>>, vector<1x64xf32>
    %6 = vector.broadcast %5 : vector<1x64xf32> to vector<16x64xf32>
    %7 = arith.addf %4, %6 : vector<16x64xf32>
    %cst = arith.constant 0.000000e+00 : f32
    %8 = vector.broadcast %cst : f32 to vector<16x64xf32>
    %9 = arith.maximumf %7, %8 : vector<16x64xf32>
    %cst_6 = arith.constant 0.000000e+00 : f32
    %10 = vector.broadcast %cst_6 : f32 to vector<1x64xf32>
    %11 = tpu.concatenate %10, %9, %10 in 0 : vector<1x64xf32>, vector<16x64xf32>, vector<1x64xf32> -> vector<18x64xf32>
    %cst_7 = arith.constant 0.000000e+00 : f32
    %12 = vector.broadcast %cst_7 : f32 to vector<16x64xf32>
    %13 = vector.extract_strided_slice %11 {offsets = [0, 0], sizes = [16, 64], strides = [1, 1]} : vector<18x64xf32> to vector<16x64xf32>
    %c0_8 = arith.constant 0 : index
    %c0_9 = arith.constant 0 : index
    %c0_10 = arith.constant 0 : index
    %14 = vector.load %arg2[%c0_8, %c0_9, %c0_10] : memref<3x64x64xf32, #tpu.memory_space<vmem>>, vector<1x64x64xf32>
    %15 = vector.shape_cast %14 : vector<1x64x64xf32> to vector<64x64xf32>
    %cst_11 = arith.constant dense<0.000000e+00> : vector<16x64xf32>
    %16 = tpu.matmul %13, %15, %cst_11 {dimension_numbers = #tpu.dot_dimension_numbers<[1], [0], [0], [1], [0, 0, 1, 1], [], []>} : vector<16x64xf32>, vector<64x64xf32>, vector<16x64xf32> -> vector<16x64xf32>
    %17 = arith.addf %12, %16 : vector<16x64xf32>
    %18 = vector.extract_strided_slice %11 {offsets = [1, 0], sizes = [16, 64], strides = [1, 1]} : vector<18x64xf32> to vector<16x64xf32>
    %c1 = arith.constant 1 : index
    %c0_12 = arith.constant 0 : index
    %c0_13 = arith.constant 0 : index
    %19 = vector.load %arg2[%c1, %c0_12, %c0_13] : memref<3x64x64xf32, #tpu.memory_space<vmem>>, vector<1x64x64xf32>
    %20 = vector.shape_cast %19 : vector<1x64x64xf32> to vector<64x64xf32>
    %cst_14 = arith.constant dense<0.000000e+00> : vector<16x64xf32>
    %21 = tpu.matmul %18, %20, %cst_14 {dimension_numbers = #tpu.dot_dimension_numbers<[1], [0], [0], [1], [0, 0, 1, 1], [], []>} : vector<16x64xf32>, vector<64x64xf32>, vector<16x64xf32> -> vector<16x64xf32>
    %22 = arith.addf %17, %21 : vector<16x64xf32>
    %23 = vector.extract_strided_slice %11 {offsets = [2, 0], sizes = [16, 64], strides = [1, 1]} : vector<18x64xf32> to vector<16x64xf32>
    %c2 = arith.constant 2 : index
    %c0_15 = arith.constant 0 : index
    %c0_16 = arith.constant 0 : index
    %24 = vector.load %arg2[%c2, %c0_15, %c0_16] : memref<3x64x64xf32, #tpu.memory_space<vmem>>, vector<1x64x64xf32>
    %25 = vector.shape_cast %24 : vector<1x64x64xf32> to vector<64x64xf32>
    %cst_17 = arith.constant dense<0.000000e+00> : vector<16x64xf32>
    %26 = tpu.matmul %23, %25, %cst_17 {dimension_numbers = #tpu.dot_dimension_numbers<[1], [0], [0], [1], [0, 0, 1, 1], [], []>} : vector<16x64xf32>, vector<64x64xf32>, vector<16x64xf32> -> vector<16x64xf32>
    %27 = arith.addf %22, %26 : vector<16x64xf32>
    %c0_18 = arith.constant 0 : index
    %c0_19 = arith.constant 0 : index
    %28 = vector.load %arg5[%c0_18, %c0_19] : memref<1x64xf32, #tpu.memory_space<vmem>>, vector<1x64xf32>
    %29 = vector.broadcast %28 : vector<1x64xf32> to vector<16x64xf32>
    %30 = arith.mulf %27, %29 : vector<16x64xf32>
    %c0_20 = arith.constant 0 : index
    %c0_21 = arith.constant 0 : index
    %31 = vector.load %arg6[%c0_20, %c0_21] : memref<1x64xf32, #tpu.memory_space<vmem>>, vector<1x64xf32>
    %32 = vector.broadcast %31 : vector<1x64xf32> to vector<16x64xf32>
    %33 = arith.addf %30, %32 : vector<16x64xf32>
    %34 = vector.shape_cast %33 : vector<16x64xf32> to vector<1x16x64xf32>
    %c0_22 = arith.constant 0 : index
    %c0_23 = arith.constant 0 : index
    %c0_24 = arith.constant 0 : index
    %35 = vector.load %arg7[%c0_22, %c0_23, %c0_24] : memref<1x16x64xf32, #tpu.memory_space<vmem>>, vector<1x16x64xf32>
    tpu.vector_store %arg7[%c0_22, %c0_23, %c0_24], %34 {strides = array<i32>} : memref<1x16x64xf32, #tpu.memory_space<vmem>>, vector<1x16x64xf32>,
    return
  }
  func.func @transform_0(%arg0: i32) -> (i32, i32, i32) {
    %c0_i32 = arith.constant 0 : i32
    %c0_i32_0 = arith.constant 0 : i32
    %c0_i32_1 = arith.constant 0 : i32
    return %arg0, %c0_i32, %c0_i32_0 : i32, i32, i32
  }
  func.func @transform_1(%arg0: i32) -> (i32, i32, i32) {
    %c0_i32 = arith.constant 0 : i32
    %c0_i32_0 = arith.constant 0 : i32
    %c0_i32_1 = arith.constant 0 : i32
    %c0_i32_2 = arith.constant 0 : i32
    return %c0_i32, %c0_i32_0, %c0_i32_1 : i32, i32, i32
  }
  func.func @transform_2(%arg0: i32) -> (i32, i32) {
    %c0_i32 = arith.constant 0 : i32
    %c0_i32_0 = arith.constant 0 : i32
    %c0_i32_1 = arith.constant 0 : i32
    return %c0_i32, %c0_i32_0 : i32, i32
  }
  func.func @transform_3(%arg0: i32) -> (i32, i32) {
    %c0_i32 = arith.constant 0 : i32
    %c0_i32_0 = arith.constant 0 : i32
    %c0_i32_1 = arith.constant 0 : i32
    return %c0_i32, %c0_i32_0 : i32, i32
  }
  func.func @transform_4(%arg0: i32) -> (i32, i32) {
    %c0_i32 = arith.constant 0 : i32
    %c0_i32_0 = arith.constant 0 : i32
    %c0_i32_1 = arith.constant 0 : i32
    return %c0_i32, %c0_i32_0 : i32, i32
  }
  func.func @transform_5(%arg0: i32) -> (i32, i32) {
    %c0_i32 = arith.constant 0 : i32
    %c0_i32_0 = arith.constant 0 : i32
    %c0_i32_1 = arith.constant 0 : i32
    return %c0_i32, %c0_i32_0 : i32, i32
  }
  func.func @transform_6(%arg0: i32) -> (i32, i32, i32) {
    %c0_i32 = arith.constant 0 : i32
    %c0_i32_0 = arith.constant 0 : i32
    %c0_i32_1 = arith.constant 0 : i32
    return %arg0, %c0_i32, %c0_i32_0 : i32, i32, i32
  }
}

module attributes {stable_mosaic.version = 11 : i64} {
  func.func @_conv_row_kernel(%arg0: i32, %arg1: memref<1x16x64xf32, #tpu.memory_space<vmem>>, %arg2: memref<1x64x128xf32, #tpu.memory_space<vmem>>, %arg3: memref<1x64xf32, #tpu.memory_space<vmem>>, %arg4: memref<1x64xf32, #tpu.memory_space<vmem>>, %arg5: memref<1x128xf32, #tpu.memory_space<vmem>>, %arg6: memref<1x128xf32, #tpu.memory_space<vmem>>, %arg7: memref<1x16x128xf32, #tpu.memory_space<vmem>>) attributes {dimension_semantics = [#tpu.dimension_semantics<parallel>], iteration_bounds = array<i64: 2>, scalar_prefetch = 0 : i64, scratch_operands = 0 : i64, tpu.core_type = #tpu.core_type<tc>, window_params = [{transform_indices = @transform_0, window_bounds = array<i64: 1, 16, 64>}, {pipeline_mode = #tpu.pipeline_mode<synchronous>, transform_indices = @transform_1, window_bounds = array<i64: 1, 64, 128>}, {pipeline_mode = #tpu.pipeline_mode<synchronous>, transform_indices = @transform_2, window_bounds = array<i64: 1, 64>}, {pipeline_mode = #tpu.pipeline_mode<synchronous>, transform_indices = @transform_3, window_bounds = array<i64: 1, 64>}, {pipeline_mode = #tpu.pipeline_mode<synchronous>, transform_indices = @transform_4, window_bounds = array<i64: 1, 128>}, {pipeline_mode = #tpu.pipeline_mode<synchronous>, transform_indices = @transform_5, window_bounds = array<i64: 1, 128>}, {transform_indices = @transform_6, window_bounds = array<i64: 1, 16, 128>}]} {
    %c0 = arith.constant 0 : index
    %c0_0 = arith.constant 0 : index
    %c0_1 = arith.constant 0 : index
    %0 = vector.load %arg1[%c0, %c0_0, %c0_1] : memref<1x16x64xf32, #tpu.memory_space<vmem>>, vector<1x16x64xf32>
    %1 = vector.shape_cast %0 : vector<1x16x64xf32> to vector<16x64xf32>
    %c0_2 = arith.constant 0 : index
    %c0_3 = arith.constant 0 : index
    %2 = vector.load %arg3[%c0_2, %c0_3] : memref<1x64xf32, #tpu.memory_space<vmem>>, vector<1x64xf32>
    %3 = vector.broadcast %2 : vector<1x64xf32> to vector<16x64xf32>
    %4 = arith.mulf %1, %3 : vector<16x64xf32>
    %c0_4 = arith.constant 0 : index
    %c0_5 = arith.constant 0 : index
    %5 = vector.load %arg4[%c0_4, %c0_5] : memref<1x64xf32, #tpu.memory_space<vmem>>, vector<1x64xf32>
    %6 = vector.broadcast %5 : vector<1x64xf32> to vector<16x64xf32>
    %7 = arith.addf %4, %6 : vector<16x64xf32>
    %cst = arith.constant 0.000000e+00 : f32
    %8 = vector.broadcast %cst : f32 to vector<16x64xf32>
    %9 = arith.maximumf %7, %8 : vector<16x64xf32>
    %cst_6 = arith.constant 0.000000e+00 : f32
    %10 = vector.broadcast %cst_6 : f32 to vector<16x128xf32>
    %c0_7 = arith.constant 0 : index
    %c0_8 = arith.constant 0 : index
    %c0_9 = arith.constant 0 : index
    %11 = vector.load %arg2[%c0_7, %c0_8, %c0_9] : memref<1x64x128xf32, #tpu.memory_space<vmem>>, vector<1x64x128xf32>
    %12 = vector.shape_cast %11 : vector<1x64x128xf32> to vector<64x128xf32>
    %cst_10 = arith.constant dense<0.000000e+00> : vector<16x128xf32>
    %13 = tpu.matmul %9, %12, %cst_10 {dimension_numbers = #tpu.dot_dimension_numbers<[1], [0], [0], [1], [0, 0, 1, 1], [], []>} : vector<16x64xf32>, vector<64x128xf32>, vector<16x128xf32> -> vector<16x128xf32>
    %14 = arith.addf %10, %13 : vector<16x128xf32>
    %c0_11 = arith.constant 0 : index
    %c0_12 = arith.constant 0 : index
    %15 = vector.load %arg5[%c0_11, %c0_12] : memref<1x128xf32, #tpu.memory_space<vmem>>, vector<1x128xf32>
    %16 = vector.broadcast %15 : vector<1x128xf32> to vector<16x128xf32>
    %17 = arith.mulf %14, %16 : vector<16x128xf32>
    %c0_13 = arith.constant 0 : index
    %c0_14 = arith.constant 0 : index
    %18 = vector.load %arg6[%c0_13, %c0_14] : memref<1x128xf32, #tpu.memory_space<vmem>>, vector<1x128xf32>
    %19 = vector.broadcast %18 : vector<1x128xf32> to vector<16x128xf32>
    %20 = arith.addf %17, %19 : vector<16x128xf32>
    %21 = vector.shape_cast %20 : vector<16x128xf32> to vector<1x16x128xf32>
    %c0_15 = arith.constant 0 : index
    %c0_16 = arith.constant 0 : index
    %c0_17 = arith.constant 0 : index
    %22 = vector.load %arg7[%c0_15, %c0_16, %c0_17] : memref<1x16x128xf32, #tpu.memory_space<vmem>>, vector<1x16x128xf32>
    tpu.vector_store %arg7[%c0_15, %c0_16, %c0_17], %21 {strides = array<i32>} : memref<1x16x128xf32, #tpu.memory_space<vmem>>, vector<1x16x128xf32>,
    return
  }
  func.func @transform_0(%arg0: i32) -> (i32, i32, i32) {
    %c0_i32 = arith.constant 0 : i32
    %c0_i32_0 = arith.constant 0 : i32
    %c0_i32_1 = arith.constant 0 : i32
    return %arg0, %c0_i32, %c0_i32_0 : i32, i32, i32
  }
  func.func @transform_1(%arg0: i32) -> (i32, i32, i32) {
    %c0_i32 = arith.constant 0 : i32
    %c0_i32_0 = arith.constant 0 : i32
    %c0_i32_1 = arith.constant 0 : i32
    %c0_i32_2 = arith.constant 0 : i32
    return %c0_i32, %c0_i32_0, %c0_i32_1 : i32, i32, i32
  }
  func.func @transform_2(%arg0: i32) -> (i32, i32) {
    %c0_i32 = arith.constant 0 : i32
    %c0_i32_0 = arith.constant 0 : i32
    %c0_i32_1 = arith.constant 0 : i32
    return %c0_i32, %c0_i32_0 : i32, i32
  }
  func.func @transform_3(%arg0: i32) -> (i32, i32) {
    %c0_i32 = arith.constant 0 : i32
    %c0_i32_0 = arith.constant 0 : i32
    %c0_i32_1 = arith.constant 0 : i32
    return %c0_i32, %c0_i32_0 : i32, i32
  }
  func.func @transform_4(%arg0: i32) -> (i32, i32) {
    %c0_i32 = arith.constant 0 : i32
    %c0_i32_0 = arith.constant 0 : i32
    %c0_i32_1 = arith.constant 0 : i32
    return %c0_i32, %c0_i32_0 : i32, i32
  }
  func.func @transform_5(%arg0: i32) -> (i32, i32) {
    %c0_i32 = arith.constant 0 : i32
    %c0_i32_0 = arith.constant 0 : i32
    %c0_i32_1 = arith.constant 0 : i32
    return %c0_i32, %c0_i32_0 : i32, i32
  }
  func.func @transform_6(%arg0: i32) -> (i32, i32, i32) {
    %c0_i32 = arith.constant 0 : i32
    %c0_i32_0 = arith.constant 0 : i32
    %c0_i32_1 = arith.constant 0 : i32
    return %arg0, %c0_i32, %c0_i32_0 : i32, i32, i32
  }
}

module attributes {stable_mosaic.version = 11 : i64} {
  func.func @_conv_row_kernel(%arg0: i32, %arg1: memref<1x16x192xf32, #tpu.memory_space<vmem>>, %arg2: memref<1x192x128xf32, #tpu.memory_space<vmem>>, %arg3: memref<1x192xf32, #tpu.memory_space<vmem>>, %arg4: memref<1x192xf32, #tpu.memory_space<vmem>>, %arg5: memref<1x128xf32, #tpu.memory_space<vmem>>, %arg6: memref<1x128xf32, #tpu.memory_space<vmem>>, %arg7: memref<1x16x128xf32, #tpu.memory_space<vmem>>) attributes {dimension_semantics = [#tpu.dimension_semantics<parallel>], iteration_bounds = array<i64: 2>, scalar_prefetch = 0 : i64, scratch_operands = 0 : i64, tpu.core_type = #tpu.core_type<tc>, window_params = [{transform_indices = @transform_0, window_bounds = array<i64: 1, 16, 192>}, {pipeline_mode = #tpu.pipeline_mode<synchronous>, transform_indices = @transform_1, window_bounds = array<i64: 1, 192, 128>}, {pipeline_mode = #tpu.pipeline_mode<synchronous>, transform_indices = @transform_2, window_bounds = array<i64: 1, 192>}, {pipeline_mode = #tpu.pipeline_mode<synchronous>, transform_indices = @transform_3, window_bounds = array<i64: 1, 192>}, {pipeline_mode = #tpu.pipeline_mode<synchronous>, transform_indices = @transform_4, window_bounds = array<i64: 1, 128>}, {pipeline_mode = #tpu.pipeline_mode<synchronous>, transform_indices = @transform_5, window_bounds = array<i64: 1, 128>}, {transform_indices = @transform_6, window_bounds = array<i64: 1, 16, 128>}]} {
    %c0 = arith.constant 0 : index
    %c0_0 = arith.constant 0 : index
    %c0_1 = arith.constant 0 : index
    %0 = vector.load %arg1[%c0, %c0_0, %c0_1] : memref<1x16x192xf32, #tpu.memory_space<vmem>>, vector<1x16x192xf32>
    %1 = vector.shape_cast %0 : vector<1x16x192xf32> to vector<16x192xf32>
    %c0_2 = arith.constant 0 : index
    %c0_3 = arith.constant 0 : index
    %2 = vector.load %arg3[%c0_2, %c0_3] : memref<1x192xf32, #tpu.memory_space<vmem>>, vector<1x192xf32>
    %3 = vector.broadcast %2 : vector<1x192xf32> to vector<16x192xf32>
    %4 = arith.mulf %1, %3 : vector<16x192xf32>
    %c0_4 = arith.constant 0 : index
    %c0_5 = arith.constant 0 : index
    %5 = vector.load %arg4[%c0_4, %c0_5] : memref<1x192xf32, #tpu.memory_space<vmem>>, vector<1x192xf32>
    %6 = vector.broadcast %5 : vector<1x192xf32> to vector<16x192xf32>
    %7 = arith.addf %4, %6 : vector<16x192xf32>
    %cst = arith.constant 0.000000e+00 : f32
    %8 = vector.broadcast %cst : f32 to vector<16x128xf32>
    %c0_6 = arith.constant 0 : index
    %c0_7 = arith.constant 0 : index
    %c0_8 = arith.constant 0 : index
    %9 = vector.load %arg2[%c0_6, %c0_7, %c0_8] : memref<1x192x128xf32, #tpu.memory_space<vmem>>, vector<1x192x128xf32>
    %10 = vector.shape_cast %9 : vector<1x192x128xf32> to vector<192x128xf32>
    %cst_9 = arith.constant dense<0.000000e+00> : vector<16x128xf32>
    %11 = tpu.matmul %7, %10, %cst_9 {dimension_numbers = #tpu.dot_dimension_numbers<[1], [0], [0], [1], [0, 0, 1, 1], [], []>} : vector<16x192xf32>, vector<192x128xf32>, vector<16x128xf32> -> vector<16x128xf32>
    %12 = arith.addf %8, %11 : vector<16x128xf32>
    %c0_10 = arith.constant 0 : index
    %c0_11 = arith.constant 0 : index
    %13 = vector.load %arg5[%c0_10, %c0_11] : memref<1x128xf32, #tpu.memory_space<vmem>>, vector<1x128xf32>
    %14 = vector.broadcast %13 : vector<1x128xf32> to vector<16x128xf32>
    %15 = arith.mulf %12, %14 : vector<16x128xf32>
    %c0_12 = arith.constant 0 : index
    %c0_13 = arith.constant 0 : index
    %16 = vector.load %arg6[%c0_12, %c0_13] : memref<1x128xf32, #tpu.memory_space<vmem>>, vector<1x128xf32>
    %17 = vector.broadcast %16 : vector<1x128xf32> to vector<16x128xf32>
    %18 = arith.addf %15, %17 : vector<16x128xf32>
    %19 = vector.shape_cast %18 : vector<16x128xf32> to vector<1x16x128xf32>
    %c0_14 = arith.constant 0 : index
    %c0_15 = arith.constant 0 : index
    %c0_16 = arith.constant 0 : index
    %20 = vector.load %arg7[%c0_14, %c0_15, %c0_16] : memref<1x16x128xf32, #tpu.memory_space<vmem>>, vector<1x16x128xf32>
    tpu.vector_store %arg7[%c0_14, %c0_15, %c0_16], %19 {strides = array<i32>} : memref<1x16x128xf32, #tpu.memory_space<vmem>>, vector<1x16x128xf32>,
    return
  }
  func.func @transform_0(%arg0: i32) -> (i32, i32, i32) {
    %c0_i32 = arith.constant 0 : i32
    %c0_i32_0 = arith.constant 0 : i32
    %c0_i32_1 = arith.constant 0 : i32
    return %arg0, %c0_i32, %c0_i32_0 : i32, i32, i32
  }
  func.func @transform_1(%arg0: i32) -> (i32, i32, i32) {
    %c0_i32 = arith.constant 0 : i32
    %c0_i32_0 = arith.constant 0 : i32
    %c0_i32_1 = arith.constant 0 : i32
    %c0_i32_2 = arith.constant 0 : i32
    return %c0_i32, %c0_i32_0, %c0_i32_1 : i32, i32, i32
  }
  func.func @transform_2(%arg0: i32) -> (i32, i32) {
    %c0_i32 = arith.constant 0 : i32
    %c0_i32_0 = arith.constant 0 : i32
    %c0_i32_1 = arith.constant 0 : i32
    return %c0_i32, %c0_i32_0 : i32, i32
  }
  func.func @transform_3(%arg0: i32) -> (i32, i32) {
    %c0_i32 = arith.constant 0 : i32
    %c0_i32_0 = arith.constant 0 : i32
    %c0_i32_1 = arith.constant 0 : i32
    return %c0_i32, %c0_i32_0 : i32, i32
  }
  func.func @transform_4(%arg0: i32) -> (i32, i32) {
    %c0_i32 = arith.constant 0 : i32
    %c0_i32_0 = arith.constant 0 : i32
    %c0_i32_1 = arith.constant 0 : i32
    return %c0_i32, %c0_i32_0 : i32, i32
  }
  func.func @transform_5(%arg0: i32) -> (i32, i32) {
    %c0_i32 = arith.constant 0 : i32
    %c0_i32_0 = arith.constant 0 : i32
    %c0_i32_1 = arith.constant 0 : i32
    return %c0_i32, %c0_i32_0 : i32, i32
  }
  func.func @transform_6(%arg0: i32) -> (i32, i32, i32) {
    %c0_i32 = arith.constant 0 : i32
    %c0_i32_0 = arith.constant 0 : i32
    %c0_i32_1 = arith.constant 0 : i32
    return %arg0, %c0_i32, %c0_i32_0 : i32, i32, i32
  }
}

</mosaic_0001>

<llo_original>
// kernel: tile.74
$region0: #{tile.74}
  #allocation0 [shape = 's32[1]{0}', space=sflag, size = 0x4, scoped, tag = 'scoped memory for tile.74']
  %s0 = inlined_call_operand.vmem [shape: f32[4], index: 0, kind: input, shape index: {}]
  %s1 = inlined_call_operand.vmem [shape: f32[16,4], index: 1, kind: output, shape index: {}]
  // Predicated region
  $region2: #{tile.74} parent=0 // pred_check
    _
  $region3: #{tile.74} parent=0 // pred_check_branch
    %3 = sbr.rel (0) target = $region5
  $region4: #{tile.74} parent=0 // pred_region
    _
  $region5: #{tile.74} parent=0 // pred_fallthru
    _
  %v4 = vld [vmem:[%s0] ss:$0 sm:$0xff]
  %5 = vst [vmem:[%s1] sm:$0xff] %v4
  %s6 = scalar_lea.vmem %s1, 8
  %7 = vst [vmem:[%s6] sm:$0xff] %v4

// kernel: tile.75
$region0: #{tile.75}
  %s0 = inlined_call_operand.vmem [shape: f32[16,4], index: 0, kind: input, shape index: {}]
  %s1 = inlined_call_operand.vmem [shape: f32[1,64], index: 1, kind: output, shape index: {}]
  $region1: #{tile.75} parent=0
    #allocation0 [shape = 'u8[4096]{0}', space=vmem, size = 0x1000, scoped, tag = 'scoped mem for output reshape']
    %v2 = vld [vmem:[%s0] sm:$0x1]
    %vm3 = vcmask 31744
    %4 = vst.msk [vmem:[#allocation0] sm:$0x1] %vm3, %v2
    %s5 = scalar_lea.vmem %s0, 15
    %v6 = vld [vmem:[%s5] sm:$0x1]
    %7 = vrot.lane.b32.xlu0 %v6, 60
    %v8 = vpop.permute.xlu0 %7
    %vm9 = vcmask 523744
    %10 = vst.msk [vmem:[#allocation0] sm:$0x1] %vm9, %v8
    %s11 = scalar_lea.vmem %s0, 14
    %v12 = vld [vmem:[%s11] sm:$0x1]
    %13 = vrot.lane.b32.xlu0 %v12, 56
    %v14 = vpop.permute.xlu0 %13
    %vm15 = vcmask 490944
    %16 = vst.msk [vmem:[#allocation0] sm:$0x1] %vm15, %v14
    %s17 = scalar_lea.vmem %s0, 13
    %v18 = vld [vmem:[%s17] sm:$0x1]
    %19 = vrot.lane.b32.xlu0 %v18, 52
    %v20 = vpop.permute.xlu0 %19
    %vm21 = vcmask 458144
    %22 = vst.msk [vmem:[#allocation0] sm:$0x1] %vm21, %v20
    %s23 = scalar_lea.vmem %s0, 12
    %v24 = vld [vmem:[%s23] sm:$0x1]
    %25 = vrot.lane.b32.xlu0 %v24, 48
    %v26 = vpop.permute.xlu0 %25
    %vm27 = vcmask 425344
    %28 = vst.msk [vmem:[#allocation0] sm:$0x1] %vm27, %v26
    %s29 = scalar_lea.vmem %s0, 11
    %v30 = vld [vmem:[%s29] sm:$0x1]
    %31 = vrot.lane.b32.xlu0 %v30, 44
    %v32 = vpop.permute.xlu0 %31
    %vm33 = vcmask 392544
    %34 = vst.msk [vmem:[#allocation0] sm:$0x1] %vm33, %v32
    %s35 = scalar_lea.vmem %s0, 10
    %v36 = vld [vmem:[%s35] sm:$0x1]
    %37 = vrot.lane.b32.xlu0 %v36, 40
    %v38 = vpop.permute.xlu0 %37
    %vm39 = vcmask 359744
    %40 = vst.msk [vmem:[#allocation0] sm:$0x1] %vm39, %v38
    %s41 = scalar_lea.vmem %s0, 9
    %v42 = vld [vmem:[%s41] sm:$0x1]
    %43 = vrot.lane.b32.xlu0 %v42, 36
    %v44 = vpop.permute.xlu0 %43
    %vm45 = vcmask 326944
    %46 = vst.msk [vmem:[#allocation0] sm:$0x1] %vm45, %v44
    %s47 = scalar_lea.vmem %s0, 8
    %v48 = vld [vmem:[%s47] sm:$0x1]
    %49 = vrot.lane.b32.xlu0 %v48, 32
    %v50 = vpop.permute.xlu0 %49
    %vm51 = vcmask 294144
    %52 = vst.msk [vmem:[#allocation0] sm:$0x1] %vm51, %v50
    %s53 = scalar_lea.vmem %s0, 7
    %v54 = vld [vmem:[%s53] sm:$0x1]
    %55 = vrot.lane.b32.xlu0 %v54, 28
    %v56 = vpop.permute.xlu0 %55
    %vm57 = vcmask 261344
    %58 = vst.msk [vmem:[#allocation0] sm:$0x1] %vm57, %v56
    %s59 = scalar_lea.vmem %s0, 6
    %v60 = vld [vmem:[%s59] sm:$0x1]
    %61 = vrot.lane.b32.xlu0 %v60, 24
    %v62 = vpop.permute.xlu0 %61
    %vm63 = vcmask 228544
    %64 = vst.msk [vmem:[#allocation0] sm:$0x1] %vm63, %v62
    %s65 = scalar_lea.vmem %s0, 5
    %v66 = vld [vmem:[%s65] sm:$0x1]
    %67 = vrot.lane.b32.xlu0 %v66, 20
    %v68 = vpop.permute.xlu0 %67
    %vm69 = vcmask 195744
    %70 = vst.msk [vmem:[#allocation0] sm:$0x1] %vm69, %v68
    %s71 = scalar_lea.vmem %s0, 4
    %v72 = vld [vmem:[%s71] sm:$0x1]
    %73 = vrot.lane.b32.xlu0 %v72, 16
    %v74 = vpop.permute.xlu0 %73
    %vm75 = vcmask 162944
    %76 = vst.msk [vmem:[#allocation0] sm:$0x1] %vm75, %v74
    %s77 = scalar_lea.vmem %s0, 3
    %v78 = vld [vmem:[%s77] sm:$0x1]
    %79 = vrot.lane.b32.xlu0 %v78, 12
    %v80 = vpop.permute.xlu0 %79
    %vm81 = vcmask 130144
    %82 = vst.msk [vmem:[#allocation0] sm:$0x1] %vm81, %v80
    %s83 = scalar_lea.vmem %s0, 2
    %v84 = vld [vmem:[%s83] sm:$0x1]
    %85 = vrot.lane.b32.xlu0 %v84, 8
    %v86 = vpop.permute.xlu0 %85
    %vm87 = vcmask 97344
    %88 = vst.msk [vmem:[#allocation0] sm:$0x1] %vm87, %v86
    %s89 = scalar_lea.vmem %s0, 1
    %v90 = vld [vmem:[%s89] sm:$0x1]
    %91 = vrot.lane.b32.xlu0 %v90, 4
    %v92 = vpop.permute.xlu0 %91
    %vm93 = vcmask 64544
    %94 = vst.msk [vmem:[#allocation0] sm:$0x1] %vm93, %v92
    %s96 = sshllo.u32 0, 1
    %v98 = vld [vmem:[#allocation0] sm:%s96]
    %s99 = sshllo.u32 0, 1
    %100 = vst [vmem:[%s1] sm:%s99] %v98

// kernel: mul.0
$region0: #{mul.0}
  #allocation0 [shape = 's32[1]{0}', space=sflag, size = 0x4, scoped, tag = 'scoped memory for mul.0']
  %s0 = inlined_call_operand.vmem [shape: f32[2,16,64], index: 0, kind: input, shape index: {}]
  %s1 = inlined_call_operand.vmem [shape: f32[2,16,64], index: 1, kind: input, shape index: {}]
  %s2 = inlined_call_operand.vmem [shape: f32[2,16,64], index: 2, kind: output, shape index: {}]
  %v3 = vld [vmem:[%s0] sm:$0xff]
  %v4 = vld [vmem:[%s1] sm:$0xff]
  %5 = xla_tuple %v3, %v4
  %6 = xla_tuple %5
  %v7 = vmul.f32 %v3, %v4
  %8 = xla_tuple %v7
  %9 = vst [vmem:[%s2] sm:$0xff] %v7
  %s10 = scalar_lea.vmem %s0, 16
  %v11 = vld [vmem:[%s10] sm:$0xff]
  %s12 = scalar_lea.vmem %s1, 16
  %v13 = vld [vmem:[%s12] sm:$0xff]
  %14 = xla_tuple %v11, %v13
  %15 = xla_tuple %14
  %v16 = vmul.f32 %v11, %v13
  %17 = xla_tuple %v16
  %s18 = scalar_lea.vmem %s2, 16
  %19 = vst [vmem:[%s18] sm:$0xff] %v16
  %s20 = scalar_lea.vmem %s0, 8
  %v21 = vld [vmem:[%s20] sm:$0xff]
  %s22 = scalar_lea.vmem %s1, 8
  %v23 = vld [vmem:[%s22] sm:$0xff]
  %24 = xla_tuple %v21, %v23
  %25 = xla_tuple %24
  %v26 = vmul.f32 %v21, %v23
  %27 = xla_tuple %v26
  %s28 = scalar_lea.vmem %s2, 8
  %29 = vst [vmem:[%s28] sm:$0xff] %v26
  %s30 = scalar_lea.vmem %s0, 24
  %v31 = vld [vmem:[%s30] sm:$0xff]
  %s32 = scalar_lea.vmem %s1, 24
  %v33 = vld [vmem:[%s32] sm:$0xff]
  %34 = xla_tuple %v31, %v33
  %35 = xla_tuple %34
  %v36 = vmul.f32 %v31, %v33
  %37 = xla_tuple %v36
  %s38 = scalar_lea.vmem %s2, 24
  %39 = vst [vmem:[%s38] sm:$0xff] %v36

// kernel: _lambda_.10
$region0: #{_lambda_.10}
  #allocation0 [shape = 'u32[]', space=smem, size = 0x4, offset = 0x4, fixed_abs, tag = 'smem constant byte address 0x4 - core index']
  #allocation1 [shape = 'u32[144,128]{1,0:T(1,128)}', space=vmem, size = 0x12000, scoped, tag = 'internal scratch']
  %s0 = inlined_call_operand.vmem [shape: f32[2,16,64], index: 0, kind: input, shape index: {}]
  %s1 = inlined_call_operand.vmem [shape: f32[1,64,64], index: 1, kind: input, shape index: {}]
  %s2 = inlined_call_operand.vmem [shape: f32[1,64], index: 2, kind: input, shape index: {}]
  %s3 = inlined_call_operand.vmem [shape: f32[1,64], index: 3, kind: input, shape index: {}]
  %s4 = inlined_call_operand.vmem [shape: f32[1,64], index: 4, kind: input, shape index: {}]
  %s5 = inlined_call_operand.vmem [shape: f32[1,64], index: 5, kind: input, shape index: {}]
  %s6 = inlined_call_operand.vmem [shape: f32[2,16,64], index: 6, kind: output, shape index: {}]
  %s7 = sld [smem:[#allocation0]]
  $region57: #{_lambda_.10} parent=0
    _
  %s9 = ssub.s32 1, %s7
  %s10 = scalar_select 0, %s9, %s7
  loop: start=0, step=1, limit=4
  $region2: #{_lambda_.10} parent=0 // loop_pre_header
    _
  $region3: #{_lambda_.10} parent=0 // loop_header
    %s12 = sphi 0, %s16
    %p13 = scmp.ge.s32.totalorder %s12, 4
    %s22 = sphi 0, %s24
    %s25 = sphi 0, %s22
    %s26 = sphi 0, %s25
    %s42 = sphi 0, %s26
    %s46 = sphi 0, %s46
    %s48 = sphi 0, %s46
    %s49 = sphi 0, %s48
    %s63 = sphi 0, %s49
    %s67 = sphi 0, %s67
    %s69 = sphi 0, %s67
    %s70 = sphi 0, %s69
    %s84 = sphi 0, %s70
    %s88 = sphi 0, %s88
    %s90 = sphi 0, %s88
    %s91 = sphi 0, %s90
    %s105 = sphi 0, %s91
    %s109 = sphi 0, %s109
    %s111 = sphi 0, %s109
    %s112 = sphi 0, %s111
    %s126 = sphi 0, %s112
    %s130 = sphi 0, %s130
    %s132 = sphi 0, %s130
    %s133 = sphi 0, %s132
    %s147 = sphi 0, %s133
    %s153 = sphi 0, %s155
    %s156 = sphi 0, %s153
    %s157 = sphi 0, %s156
    %s173 = sphi 0, %s157
  $region4: #{_lambda_.10} parent=0 // loop_header_branch
    %15 = sbr.rel (%p13) target = $region8
  $region5: #{_lambda_.10} parent=0 // loop_body
    %s17 = ssub.s32 %s12, 1
    %s18 = ssub.s32 %s12, 2
    %s19 = sadd.s32 %s12, 1
    %s20 = ssub.s32 %s12, %s19
    %p21 = scmp.eq.s32.totalorder %s20, 0
    %s23 = sadd.s32 %s22, 1
    %s24 = scalar_select %p21, %s22, %s23
    %p27 = pneg %p21
    %p28 = scmp.eq.s32.totalorder %s12, 1
    %p29 = por %p27, %p28
    %p30 = scmp.ne.s32.totalorder %s22, %s25
    %p31 = scmp.eq.s32.totalorder %s12, 0
    %p32 = por %p30, %p31
    %p33 = scmp.ne.s32.totalorder %s22, %s25
    %p34 = scmp.eq.s32.totalorder %s17, 1
    %p35 = por %p33, %p34
    %p36 = scmp.ne.s32.totalorder %s25, %s26
    %p37 = scmp.eq.s32.totalorder %s17, 0
    %p38 = por %p36, %p37
    %p39 = scmp.ne.s32.totalorder %s25, %s26
    %p40 = scmp.eq.s32.totalorder %s18, 1
    %p41 = por %p39, %p40
    %p43 = scmp.ne.s32.totalorder %s26, %s42
    %p44 = scmp.eq.s32.totalorder %s18, 0
    %p45 = por %p43, %p44
    %s47 = sadd.s32 %s46, 1
    %p50 = scmp.eq.s32.totalorder %s12, 1
    %p51 = scmp.ne.s32.totalorder %s46, %s48
    %p52 = scmp.eq.s32.totalorder %s12, 0
    %p53 = por %p51, %p52
    %p54 = scmp.ne.s32.totalorder %s46, %s48
    %p55 = scmp.eq.s32.totalorder %s17, 1
    %p56 = por %p54, %p55
    %p57 = scmp.ne.s32.totalorder %s48, %s49
    %p58 = scmp.eq.s32.totalorder %s17, 0
    %p59 = por %p57, %p58
    %p60 = scmp.ne.s32.totalorder %s48, %s49
    %p61 = scmp.eq.s32.totalorder %s18, 1
    %p62 = por %p60, %p61
    %p64 = scmp.ne.s32.totalorder %s49, %s63
    %p65 = scmp.eq.s32.totalorder %s18, 0
    %p66 = por %p64, %p65
    %s68 = sadd.s32 %s67, 1
    %p71 = scmp.eq.s32.totalorder %s12, 1
    %p72 = scmp.ne.s32.totalorder %s67, %s69
    %p73 = scmp.eq.s32.totalorder %s12, 0
    %p74 = por %p72, %p73
    %p75 = scmp.ne.s32.totalorder %s67, %s69
    %p76 = scmp.eq.s32.totalorder %s17, 1
    %p77 = por %p75, %p76
    %p78 = scmp.ne.s32.totalorder %s69, %s70
    %p79 = scmp.eq.s32.totalorder %s17, 0
    %p80 = por %p78, %p79
    %p81 = scmp.ne.s32.totalorder %s69, %s70
    %p82 = scmp.eq.s32.totalorder %s18, 1
    %p83 = por %p81, %p82
    %p85 = scmp.ne.s32.totalorder %s70, %s84
    %p86 = scmp.eq.s32.totalorder %s18, 0
    %p87 = por %p85, %p86
    %s89 = sadd.s32 %s88, 1
    %p92 = scmp.eq.s32.totalorder %s12, 1
    %p93 = scmp.ne.s32.totalorder %s88, %s90
    %p94 = scmp.eq.s32.totalorder %s12, 0
    %p95 = por %p93, %p94
    %p96 = scmp.ne.s32.totalorder %s88, %s90
    %p97 = scmp.eq.s32.totalorder %s17, 1
    %p98 = por %p96, %p97
    %p99 = scmp.ne.s32.totalorder %s90, %s91
    %p100 = scmp.eq.s32.totalorder %s17, 0
    %p101 = por %p99, %p100
    %p102 = scmp.ne.s32.totalorder %s90, %s91
    %p103 = scmp.eq.s32.totalorder %s18, 1
    %p104 = por %p102, %p103
    %p106 = scmp.ne.s32.totalorder %s91, %s105
    %p107 = scmp.eq.s32.totalorder %s18, 0
    %p108 = por %p106, %p107
    %s110 = sadd.s32 %s109, 1
    %p113 = scmp.eq.s32.totalorder %s12, 1
    %p114 = scmp.ne.s32.totalorder %s109, %s111
    %p115 = scmp.eq.s32.totalorder %s12, 0
    %p116 = por %p114, %p115
    %p117 = scmp.ne.s32.totalorder %s109, %s111
    %p118 = scmp.eq.s32.totalorder %s17, 1
    %p119 = por %p117, %p118
    %p120 = scmp.ne.s32.totalorder %s111, %s112
    %p121 = scmp.eq.s32.totalorder %s17, 0
    %p122 = por %p120, %p121
    %p123 = scmp.ne.s32.totalorder %s111, %s112
    %p124 = scmp.eq.s32.totalorder %s18, 1
    %p125 = por %p123, %p124
    %p127 = scmp.ne.s32.totalorder %s112, %s126
    %p128 = scmp.eq.s32.totalorder %s18, 0
    %p129 = por %p127, %p128
    %s131 = sadd.s32 %s130, 1
    %p134 = scmp.eq.s32.totalorder %s12, 1
    %p135 = scmp.ne.s32.totalorder %s130, %s132
    %p136 = scmp.eq.s32.totalorder %s12, 0
    %p137 = por %p135, %p136
    %p138 = scmp.ne.s32.totalorder %s130, %s132
    %p139 = scmp.eq.s32.totalorder %s17, 1
    %p140 = por %p138, %p139
    %p141 = scmp.ne.s32.totalorder %s132, %s133
    %p142 = scmp.eq.s32.totalorder %s17, 0
    %p143 = por %p141, %p142
    %p144 = scmp.ne.s32.totalorder %s132, %s133
    %p145 = scmp.eq.s32.totalorder %s18, 1
    %p146 = por %p144, %p145
    %p148 = scmp.ne.s32.totalorder %s133, %s147
    %p149 = scmp.eq.s32.totalorder %s18, 0
    %p150 = por %p148, %p149
    %s151 = ssub.s32 %s12, %s19
    %p152 = scmp.eq.s32.totalorder %s151, 0
    %s154 = sadd.s32 %s153, 1
    %s155 = scalar_select %p152, %s153, %s154
    %p158 = pneg %p152
    %p159 = scmp.eq.s32.totalorder %s12, 1
    %p160 = por %p158, %p159
    %p161 = scmp.ne.s32.totalorder %s153, %s156
    %p162 = scmp.eq.s32.totalorder %s12, 0
    %p163 = por %p161, %p162
    %p164 = scmp.ne.s32.totalorder %s153, %s156
    %p165 = scmp.eq.s32.totalorder %s17, 1
    %p166 = por %p164, %p165
    %p167 = scmp.ne.s32.totalorder %s156, %s157
    %p168 = scmp.eq.s32.totalorder %s17, 0
    %p169 = por %p167, %p168
    %p170 = scmp.ne.s32.totalorder %s156, %s157
    %p171 = scmp.eq.s32.totalorder %s18, 1
    %p172 = por %p170, %p171
    %p174 = scmp.ne.s32.totalorder %s157, %s173
    %p175 = scmp.eq.s32.totalorder %s18, 0
    %p176 = por %p174, %p175
    %p177 = scmp.le.s32.totalorder 1, %s12
    %p178 = scmp.lt.s32.totalorder %s12, 3
    %p179 = pnand %p177, %p178
    %p180 = pneg %p179
    // Predicated region
    $region9: #{_lambda_.10} parent=5 // pred_check
      _
    $region10: #{_lambda_.10} parent=5 // pred_check_branch
      %182 = sbr.rel (%p179) target = $region12
    $region11: #{_lambda_.10} parent=5 // pred_region
      %s183 = ssub.s32 %s12, 1
      // Predicated region
      $region13: #{_lambda_.10} parent=11 // pred_check
        %p184 = pneg %p59
      $region14: #{_lambda_.10} parent=11 // pred_check_branch
        %186 = sbr.rel (%p184) target = $region16
      $region15: #{_lambda_.10} parent=11 // pred_region
        _
      $region16: #{_lambda_.10} parent=11 // pred_fallthru
        _
      // Predicated region
      $region17: #{_lambda_.10} parent=11 // pred_check
        %p187 = pneg %p80
      $region18: #{_lambda_.10} parent=11 // pred_check_branch
        %189 = sbr.rel (%p187) target = $region20
      $region19: #{_lambda_.10} parent=11 // pred_region
        _
      $region20: #{_lambda_.10} parent=11 // pred_fallthru
        _
      // Predicated region
      $region21: #{_lambda_.10} parent=11 // pred_check
        %p190 = pneg %p101
      $region22: #{_lambda_.10} parent=11 // pred_check_branch
        %192 = sbr.rel (%p190) target = $region24
      $region23: #{_lambda_.10} parent=11 // pred_region
        _
      $region24: #{_lambda_.10} parent=11 // pred_fallthru
        _
      // Predicated region
      $region25: #{_lambda_.10} parent=11 // pred_check
        %p193 = pneg %p122
      $region26: #{_lambda_.10} parent=11 // pred_check_branch
        %195 = sbr.rel (%p193) target = $region28
      $region27: #{_lambda_.10} parent=11 // pred_region
        _
      $region28: #{_lambda_.10} parent=11 // pred_fallthru
        _
      // Predicated region
      $region29: #{_lambda_.10} parent=11 // pred_check
        %p196 = pneg %p143
      $region30: #{_lambda_.10} parent=11 // pred_check_branch
        %198 = sbr.rel (%p196) target = $region32
      $region31: #{_lambda_.10} parent=11 // pred_region
        _
      $region32: #{_lambda_.10} parent=11 // pred_fallthru
        _
    $region12: #{_lambda_.10} parent=5 // pred_fallthru
      _
    %p199 = scmp.lt.s32.totalorder %s12, 2
    // Predicated region
    $region33: #{_lambda_.10} parent=5 // pred_check
      %p200 = pneg %p199
    $region34: #{_lambda_.10} parent=5 // pred_check_branch
      %202 = sbr.rel (%p200) target = $region36
    $region35: #{_lambda_.10} parent=5 // pred_region
      // Predicated region
      $region37: #{_lambda_.10} parent=35 // pred_check
        %p203 = pneg %p32
      $region38: #{_lambda_.10} parent=35 // pred_check_branch
        %205 = sbr.rel (%p203) target = $region40
      $region39: #{_lambda_.10} parent=35 // pred_region
        %p206 = scmp.lt.s32.totalorder %s12, 1
        %s207 = scalar_select %p206, %s12, 1
        %s208 = smul.addr %s207, 2
        %s209 = smul.addr %s208, 8
        %s210 = scalar_lea.vmem %s0, %s209
      $region40: #{_lambda_.10} parent=35 // pred_fallthru
        _
    $region36: #{_lambda_.10} parent=5 // pred_fallthru
      _
    %p211 = scmp.le.s32.totalorder 1, %s12
    %p212 = scmp.lt.s32.totalorder %s12, 3
    %p213 = pnand %p211, %p212
    %p214 = pneg %p213
    // Predicated region
    $region41: #{_lambda_.10} parent=5 // pred_check
      _
    $region42: #{_lambda_.10} parent=5 // pred_check_branch
      %216 = sbr.rel (%p213) target = $region44
    $region43: #{_lambda_.10} parent=5 // pred_region
      %s217 = ssub.s32 %s12, 1
      %p218 = scmp.lt.s32.totalorder %s17, 1
      %s219 = scalar_select %p218, %s17, 1
      %s220 = smul.addr %s219, 2
      %s221 = smul.addr %s220, 8
      %s222 = scalar_lea.vmem %s0, %s221
      %p223 = pneg %p38
      %p224 = pneg %p35
      %p225 = pneg %p59
      %p226 = pneg %p56
      %p227 = pneg %p80
      %p228 = pneg %p77
      %p229 = pneg %p101
      %p230 = pneg %p98
      %p231 = pneg %p122
      %p232 = pneg %p119
      %p233 = pneg %p143
      %p234 = pneg %p140
      %p235 = pneg %p169
      %p236 = pneg %p166
      %p237 = scmp.lt.s32.totalorder %s17, 1
      %s238 = scalar_select %p237, %s17, 1
      %s239 = smul.addr %s238, 2
      %s240 = smul.addr %s239, 8
      %s241 = scalar_lea.vmem %s6, %s240
      %p242 = scmp.lt.s32.totalorder %s17, 1
      %s243 = scalar_select %p242, %s17, 1
      %s244 = smul.addr %s243, 2
      %s245 = smul.addr %s244, 8
      %s246 = scalar_lea.vmem %s0, %s245
      %p247 = scmp.lt.s32.totalorder %s17, 1
      %s248 = scalar_select %p247, %s17, 1
      %s249 = smul.addr %s248, 2
      %s250 = smul.addr %s249, 8
      %s251 = scalar_lea.vmem %s6, %s250
      %v252 = vld [vmem:[%s246] sm:$0xff]
      %v253 = vld [vmem:[%s246 + $0x8] sm:$0xff]
      %v254 = vld [vmem:[%s2] sm:$0x1]
      %v256 = vlaneseq
      %v257 = vshrl.u32 %v256, 7
      %v258 = vsub.s32 0, %v257
      %v259 = vrot.slane %v254, %v258
      %v261 = vmul.f32 %v252, %v259
      %v262 = vmul.f32 %v253, %v259
      %v263 = vld [vmem:[%s3] sm:$0x1]
      %v265 = vlaneseq
      %v266 = vshrl.u32 %v265, 7
      %v267 = vsub.s32 0, %v266
      %v268 = vrot.slane %v263, %v267
      %v270 = vadd.f32 %v261, %v268
      %v271 = vadd.f32 %v262, %v268
      %v272 = vld [vmem:[%s1] sm:$0xff]
      %v273 = vld [vmem:[%s1 + $0x8] sm:$0xff]
      %v274 = vld [vmem:[%s1 + $0x10] sm:$0xff]
      %v275 = vld [vmem:[%s1 + $0x18] sm:$0xff]
      %v276 = vld [vmem:[%s1 + $0x20] sm:$0xff]
      %v277 = vld [vmem:[%s1 + $0x28] sm:$0xff]
      %v278 = vld [vmem:[%s1 + $0x30] sm:$0xff]
      %v279 = vld [vmem:[%s1 + $0x38] sm:$0xff]
      %vm280 = vcmask 523264
      %v282 = vsel %vm280, %v270, 0
      %v285 = vsel %vm280, %v271, 0
      %287 = vmatprep.subr.mxu0 0.0
      %288 = vmatpush1.msra.mxu0 %v272
      %289 = vmatprep.subr.mxu0 0.0
      %290 = vmatpush1.msra.mxu0 %v273
      %291 = vmatprep.subr.mxu0 0.0
      %292 = vmatpush1.msra.mxu0 %v274
      %293 = vmatprep.subr.mxu0 0.0
      %294 = vmatpush1.msra.mxu0 %v275
      %295 = vmatprep.subr.mxu0 0.0
      %296 = vmatpush1.msra.mxu0 %v276
      %297 = vmatprep.subr.mxu0 0.0
      %298 = vmatpush1.msra.mxu0 %v277
      %299 = vmatprep.subr.mxu0 0.0
      %300 = vmatpush1.msra.mxu0 %v278
      %301 = vmatprep.subr.mxu0 0.0
      %302 = vmatpush1.msra.mxu0 %v279
      %303 = vmatprep.subr.mxu0 0.0
      %304 = vmatpush1.msra.mxu0 0.0
      %305 = vmatprep.subr.mxu0 0.0
      %306 = vmatpush1.msra.mxu0 0.0
      %307 = vmatprep.subr.mxu0 0.0
      %308 = vmatpush1.msra.mxu0 0.0
      %309 = vmatprep.subr.mxu0 0.0
      %310 = vmatpush1.msra.mxu0 0.0
      %311 = vmatprep.subr.mxu0 0.0
      %312 = vmatpush1.msra.mxu0 0.0
      %313 = vmatprep.subr.mxu0 0.0
      %314 = vmatpush1.msra.mxu0 0.0
      %315 = vmatprep.subr.mxu0 0.0
      %316 = vmatpush1.msra.mxu0 0.0
      %317 = vmatprep.subr.mxu0 0.0
      %318 = vmatpush1.msra.mxu0 0.0
      %319 = vmatprep.subr.mxu0 0.0
      %320 = vmatpush1.msra.mxu0 0.0
      %321 = vmatprep.subr.mxu0 0.0
      %322 = vmatpush1.msra.mxu0 0.0
      %323 = vmatprep.subr.mxu0 0.0
      %324 = vmatpush1.msra.mxu0 0.0
      %325 = vmatprep.subr.mxu0 0.0
      %326 = vmatpush1.msra.mxu0 0.0
      %327 = vmatprep.subr.mxu0 0.0
      %328 = vmatpush1.msra.mxu0 0.0
      %329 = vmatprep.subr.mxu0 0.0
      %330 = vmatpush1.msra.mxu0 0.0
      %331 = vmatprep.subr.mxu0 0.0
      %332 = vmatpush1.msra.mxu0 0.0
      %333 = vmatprep.subr.mxu0 0.0
      %334 = vmatpush1.msra.mxu0 0.0
      %335 = vmatprep.subr.mxu0 0.0
      %336 = vmatpush1.msra.mxu0 0.0
      %337 = vmatprep.subr.mxu0 0.0
      %338 = vmatpush1.msra.mxu0 0.0
      %339 = vmatprep.subr.mxu0 0.0
      %340 = vmatpush1.msra.mxu0 0.0
      %341 = vmatprep.subr.mxu0 0.0
      %342 = vmatpush1.msra.mxu0 0.0
      %343 = vmatprep.subr.mxu0 0.0
      %344 = vmatpush1.msra.mxu0 0.0
      %345 = vmatprep.subr.mxu0 0.0
      %346 = vmatpush1.msra.mxu0 0.0
      %347 = vmatprep.subr.mxu0 0.0
      %348 = vmatpush1.msra.mxu0 0.0
      %349 = vmatprep.subr.mxu0 0.0
      %350 = vmatpush1.msra.mxu0 0.0
      %351 = vmatprep.mubr.f32.mxu0 0.0
      %352 = vmatmul.mubr.f32.gmra.mrb[0].mxu0 %v282
      %v353 = vpop.f32.mrb[0].mxu0
      %v354 = vadd.f32 0.0, %v353
      %v355 = vpop.f32.mrb[0].mxu0
      %356 = vmatprep.mubr.f32.mxu0 0.0
      %357 = vmatmul.mubr.f32.gmra.mrb[0].mxu0 %v285
      %v358 = vpop.f32.mrb[0].mxu0
      %v359 = vadd.f32 0.0, %v358
      %v360 = vpop.f32.mrb[0].mxu0
      %361 = vdwg.mxu0
      %v362 = vld [vmem:[%s4] sm:$0x1]
      %v364 = vlaneseq
      %v365 = vshrl.u32 %v364, 7
      %v366 = vsub.s32 0, %v365
      %v367 = vrot.slane %v362, %v366
      %v369 = vmul.f32 %v354, %v367
      %v370 = vmul.f32 %v359, %v367
      %v371 = vld [vmem:[%s5] sm:$0x1]
      %v373 = vlaneseq
      %v374 = vshrl.u32 %v373, 7
      %v375 = vsub.s32 0, %v374
      %v376 = vrot.slane %v371, %v375
      %v378 = vadd.f32 %v369, %v376
      %v379 = vadd.f32 %v370, %v376
      %380 = vst.msk [vmem:[%s251] sm:$0xff] %vm280, %v378
      %381 = vst.msk [vmem:[%s251 + $0x8] sm:$0xff] %vm280, %v379
      %p382 = scmp.lt.s32.totalorder %s17, 1
      %s383 = scalar_select %p382, %s17, 1
      %s384 = smul.addr %s383, 2
      %s385 = smul.addr %s384, 8
      %s386 = scalar_lea.vmem %s6, %s385
      // Predicated region
      $region45: #{_lambda_.10} parent=43 // pred_check
        %p387 = pneg %p166
      $region46: #{_lambda_.10} parent=43 // pred_check_branch
        %389 = sbr.rel (%p387) target = $region48
      $region47: #{_lambda_.10} parent=43 // pred_region
        _
      $region48: #{_lambda_.10} parent=43 // pred_fallthru
        _
    $region44: #{_lambda_.10} parent=5 // pred_fallthru
      _
    %p390 = scmp.le.s32.totalorder 2, %s12
    // Predicated region
    $region49: #{_lambda_.10} parent=5 // pred_check
      %p391 = pneg %p390
    $region50: #{_lambda_.10} parent=5 // pred_check_branch
      %393 = sbr.rel (%p391) target = $region52
    $region51: #{_lambda_.10} parent=5 // pred_region
      %s394 = ssub.s32 %s12, 2
      // Predicated region
      $region53: #{_lambda_.10} parent=51 // pred_check
        %p395 = pneg %p172
      $region54: #{_lambda_.10} parent=51 // pred_check_branch
        %397 = sbr.rel (%p395) target = $region56
      $region55: #{_lambda_.10} parent=51 // pred_region
        %p398 = scmp.lt.s32.totalorder %s18, 1
        %s399 = scalar_select %p398, %s18, 1
        %s400 = smul.addr %s399, 2
        %s401 = smul.addr %s400, 8
        %s402 = scalar_lea.vmem %s6, %s401
      $region56: #{_lambda_.10} parent=51 // pred_fallthru
        _
    $region52: #{_lambda_.10} parent=5 // pred_fallthru
      _
  $region6: #{_lambda_.10} parent=0 // loop_footer
    %s16 = sadd.s32 1, %s12
  $region7: #{_lambda_.10} parent=0 // loop_footer_branch
    %11 = sbr.rel target = $region3
  $region8: #{_lambda_.10} parent=0 // loop_exit
    _

// kernel: _lambda_.12
$region0: #{_lambda_.12}
  #allocation0 [shape = 'u32[]', space=smem, size = 0x4, offset = 0x4, fixed_abs, tag = 'smem constant byte address 0x4 - core index']
  #allocation1 [shape = 'u32[144,128]{1,0:T(1,128)}', space=vmem, size = 0x12000, scoped, tag = 'internal scratch']
  %s0 = inlined_call_operand.vmem [shape: f32[2,16,64], index: 0, kind: input, shape index: {}]
  %s1 = inlined_call_operand.vmem [shape: f32[3,64,64], index: 1, kind: input, shape index: {}]
  %s2 = inlined_call_operand.vmem [shape: f32[1,64], index: 2, kind: input, shape index: {}]
  %s3 = inlined_call_operand.vmem [shape: f32[1,64], index: 3, kind: input, shape index: {}]
  %s4 = inlined_call_operand.vmem [shape: f32[1,64], index: 4, kind: input, shape index: {}]
  %s5 = inlined_call_operand.vmem [shape: f32[1,64], index: 5, kind: input, shape index: {}]
  %s6 = inlined_call_operand.vmem [shape: f32[2,16,64], index: 6, kind: output, shape index: {}]
  %s7 = sld [smem:[#allocation0]]
  $region57: #{_lambda_.12} parent=0
    _
  %s9 = ssub.s32 1, %s7
  %s10 = scalar_select 0, %s9, %s7
  loop: start=0, step=1, limit=4
  $region2: #{_lambda_.12} parent=0 // loop_pre_header
    _
  $region3: #{_lambda_.12} parent=0 // loop_header
    %s12 = sphi 0, %s16
    %p13 = scmp.ge.s32.totalorder %s12, 4
    %s22 = sphi 0, %s24
    %s25 = sphi 0, %s22
    %s26 = sphi 0, %s25
    %s42 = sphi 0, %s26
    %s46 = sphi 0, %s46
    %s48 = sphi 0, %s46
    %s49 = sphi 0, %s48
    %s63 = sphi 0, %s49
    %s67 = sphi 0, %s67
    %s69 = sphi 0, %s67
    %s70 = sphi 0, %s69
    %s84 = sphi 0, %s70
    %s88 = sphi 0, %s88
    %s90 = sphi 0, %s88
    %s91 = sphi 0, %s90
    %s105 = sphi 0, %s91
    %s109 = sphi 0, %s109
    %s111 = sphi 0, %s109
    %s112 = sphi 0, %s111
    %s126 = sphi 0, %s112
    %s130 = sphi 0, %s130
    %s132 = sphi 0, %s130
    %s133 = sphi 0, %s132
    %s147 = sphi 0, %s133
    %s153 = sphi 0, %s155
    %s156 = sphi 0, %s153
    %s157 = sphi 0, %s156
    %s173 = sphi 0, %s157
  $region4: #{_lambda_.12} parent=0 // loop_header_branch
    %15 = sbr.rel (%p13) target = $region8
  $region5: #{_lambda_.12} parent=0 // loop_body
    %s17 = ssub.s32 %s12, 1
    %s18 = ssub.s32 %s12, 2
    %s19 = sadd.s32 %s12, 1
    %s20 = ssub.s32 %s12, %s19
    %p21 = scmp.eq.s32.totalorder %s20, 0
    %s23 = sadd.s32 %s22, 1
    %s24 = scalar_select %p21, %s22, %s23
    %p27 = pneg %p21
    %p28 = scmp.eq.s32.totalorder %s12, 1
    %p29 = por %p27, %p28
    %p30 = scmp.ne.s32.totalorder %s22, %s25
    %p31 = scmp.eq.s32.totalorder %s12, 0
    %p32 = por %p30, %p31
    %p33 = scmp.ne.s32.totalorder %s22, %s25
    %p34 = scmp.eq.s32.totalorder %s17, 1
    %p35 = por %p33, %p34
    %p36 = scmp.ne.s32.totalorder %s25, %s26
    %p37 = scmp.eq.s32.totalorder %s17, 0
    %p38 = por %p36, %p37
    %p39 = scmp.ne.s32.totalorder %s25, %s26
    %p40 = scmp.eq.s32.totalorder %s18, 1
    %p41 = por %p39, %p40
    %p43 = scmp.ne.s32.totalorder %s26, %s42
    %p44 = scmp.eq.s32.totalorder %s18, 0
    %p45 = por %p43, %p44
    %s47 = sadd.s32 %s46, 1
    %p50 = scmp.eq.s32.totalorder %s12, 1
    %p51 = scmp.ne.s32.totalorder %s46, %s48
    %p52 = scmp.eq.s32.totalorder %s12, 0
    %p53 = por %p51, %p52
    %p54 = scmp.ne.s32.totalorder %s46, %s48
    %p55 = scmp.eq.s32.totalorder %s17, 1
    %p56 = por %p54, %p55
    %p57 = scmp.ne.s32.totalorder %s48, %s49
    %p58 = scmp.eq.s32.totalorder %s17, 0
    %p59 = por %p57, %p58
    %p60 = scmp.ne.s32.totalorder %s48, %s49
    %p61 = scmp.eq.s32.totalorder %s18, 1
    %p62 = por %p60, %p61
    %p64 = scmp.ne.s32.totalorder %s49, %s63
    %p65 = scmp.eq.s32.totalorder %s18, 0
    %p66 = por %p64, %p65
    %s68 = sadd.s32 %s67, 1
    %p71 = scmp.eq.s32.totalorder %s12, 1
    %p72 = scmp.ne.s32.totalorder %s67, %s69
    %p73 = scmp.eq.s32.totalorder %s12, 0
    %p74 = por %p72, %p73
    %p75 = scmp.ne.s32.totalorder %s67, %s69
    %p76 = scmp.eq.s32.totalorder %s17, 1
    %p77 = por %p75, %p76
    %p78 = scmp.ne.s32.totalorder %s69, %s70
    %p79 = scmp.eq.s32.totalorder %s17, 0
    %p80 = por %p78, %p79
    %p81 = scmp.ne.s32.totalorder %s69, %s70
    %p82 = scmp.eq.s32.totalorder %s18, 1
    %p83 = por %p81, %p82
    %p85 = scmp.ne.s32.totalorder %s70, %s84
    %p86 = scmp.eq.s32.totalorder %s18, 0
    %p87 = por %p85, %p86
    %s89 = sadd.s32 %s88, 1
    %p92 = scmp.eq.s32.totalorder %s12, 1
    %p93 = scmp.ne.s32.totalorder %s88, %s90
    %p94 = scmp.eq.s32.totalorder %s12, 0
    %p95 = por %p93, %p94
    %p96 = scmp.ne.s32.totalorder %s88, %s90
    %p97 = scmp.eq.s32.totalorder %s17, 1
    %p98 = por %p96, %p97
    %p99 = scmp.ne.s32.totalorder %s90, %s91
    %p100 = scmp.eq.s32.totalorder %s17, 0
    %p101 = por %p99, %p100
    %p102 = scmp.ne.s32.totalorder %s90, %s91
    %p103 = scmp.eq.s32.totalorder %s18, 1
    %p104 = por %p102, %p103
    %p106 = scmp.ne.s32.totalorder %s91, %s105
    %p107 = scmp.eq.s32.totalorder %s18, 0
    %p108 = por %p106, %p107
    %s110 = sadd.s32 %s109, 1
    %p113 = scmp.eq.s32.totalorder %s12, 1
    %p114 = scmp.ne.s32.totalorder %s109, %s111
    %p115 = scmp.eq.s32.totalorder %s12, 0
    %p116 = por %p114, %p115
    %p117 = scmp.ne.s32.totalorder %s109, %s111
    %p118 = scmp.eq.s32.totalorder %s17, 1
    %p119 = por %p117, %p118
    %p120 = scmp.ne.s32.totalorder %s111, %s112
    %p121 = scmp.eq.s32.totalorder %s17, 0
    %p122 = por %p120, %p121
    %p123 = scmp.ne.s32.totalorder %s111, %s112
    %p124 = scmp.eq.s32.totalorder %s18, 1
    %p125 = por %p123, %p124
    %p127 = scmp.ne.s32.totalorder %s112, %s126
    %p128 = scmp.eq.s32.totalorder %s18, 0
    %p129 = por %p127, %p128
    %s131 = sadd.s32 %s130, 1
    %p134 = scmp.eq.s32.totalorder %s12, 1
    %p135 = scmp.ne.s32.totalorder %s130, %s132
    %p136 = scmp.eq.s32.totalorder %s12, 0
    %p137 = por %p135, %p136
    %p138 = scmp.ne.s32.totalorder %s130, %s132
    %p139 = scmp.eq.s32.totalorder %s17, 1
    %p140 = por %p138, %p139
    %p141 = scmp.ne.s32.totalorder %s132, %s133
    %p142 = scmp.eq.s32.totalorder %s17, 0
    %p143 = por %p141, %p142
    %p144 = scmp.ne.s32.totalorder %s132, %s133
    %p145 = scmp.eq.s32.totalorder %s18, 1
    %p146 = por %p144, %p145
    %p148 = scmp.ne.s32.totalorder %s133, %s147
    %p149 = scmp.eq.s32.totalorder %s18, 0
    %p150 = por %p148, %p149
    %s151 = ssub.s32 %s12, %s19
    %p152 = scmp.eq.s32.totalorder %s151, 0
    %s154 = sadd.s32 %s153, 1
    %s155 = scalar_select %p152, %s153, %s154
    %p158 = pneg %p152
    %p159 = scmp.eq.s32.totalorder %s12, 1
    %p160 = por %p158, %p159
    %p161 = scmp.ne.s32.totalorder %s153, %s156
    %p162 = scmp.eq.s32.totalorder %s12, 0
    %p163 = por %p161, %p162
    %p164 = scmp.ne.s32.totalorder %s153, %s156
    %p165 = scmp.eq.s32.totalorder %s17, 1
    %p166 = por %p164, %p165
    %p167 = scmp.ne.s32.totalorder %s156, %s157
    %p168 = scmp.eq.s32.totalorder %s17, 0
    %p169 = por %p167, %p168
    %p170 = scmp.ne.s32.totalorder %s156, %s157
    %p171 = scmp.eq.s32.totalorder %s18, 1
    %p172 = por %p170, %p171
    %p174 = scmp.ne.s32.totalorder %s157, %s173
    %p175 = scmp.eq.s32.totalorder %s18, 0
    %p176 = por %p174, %p175
    %p177 = scmp.le.s32.totalorder 1, %s12
    %p178 = scmp.lt.s32.totalorder %s12, 3
    %p179 = pnand %p177, %p178
    %p180 = pneg %p179
    // Predicated region
    $region9: #{_lambda_.12} parent=5 // pred_check
      _
    $region10: #{_lambda_.12} parent=5 // pred_check_branch
      %182 = sbr.rel (%p179) target = $region12
    $region11: #{_lambda_.12} parent=5 // pred_region
      %s183 = ssub.s32 %s12, 1
      // Predicated region
      $region13: #{_lambda_.12} parent=11 // pred_check
        %p184 = pneg %p59
      $region14: #{_lambda_.12} parent=11 // pred_check_branch
        %186 = sbr.rel (%p184) target = $region16
      $region15: #{_lambda_.12} parent=11 // pred_region
        _
      $region16: #{_lambda_.12} parent=11 // pred_fallthru
        _
      // Predicated region
      $region17: #{_lambda_.12} parent=11 // pred_check
        %p187 = pneg %p80
      $region18: #{_lambda_.12} parent=11 // pred_check_branch
        %189 = sbr.rel (%p187) target = $region20
      $region19: #{_lambda_.12} parent=11 // pred_region
        _
      $region20: #{_lambda_.12} parent=11 // pred_fallthru
        _
      // Predicated region
      $region21: #{_lambda_.12} parent=11 // pred_check
        %p190 = pneg %p101
      $region22: #{_lambda_.12} parent=11 // pred_check_branch
        %192 = sbr.rel (%p190) target = $region24
      $region23: #{_lambda_.12} parent=11 // pred_region
        _
      $region24: #{_lambda_.12} parent=11 // pred_fallthru
        _
      // Predicated region
      $region25: #{_lambda_.12} parent=11 // pred_check
        %p193 = pneg %p122
      $region26: #{_lambda_.12} parent=11 // pred_check_branch
        %195 = sbr.rel (%p193) target = $region28
      $region27: #{_lambda_.12} parent=11 // pred_region
        _
      $region28: #{_lambda_.12} parent=11 // pred_fallthru
        _
      // Predicated region
      $region29: #{_lambda_.12} parent=11 // pred_check
        %p196 = pneg %p143
      $region30: #{_lambda_.12} parent=11 // pred_check_branch
        %198 = sbr.rel (%p196) target = $region32
      $region31: #{_lambda_.12} parent=11 // pred_region
        _
      $region32: #{_lambda_.12} parent=11 // pred_fallthru
        _
    $region12: #{_lambda_.12} parent=5 // pred_fallthru
      _
    %p199 = scmp.lt.s32.totalorder %s12, 2
    // Predicated region
    $region33: #{_lambda_.12} parent=5 // pred_check
      %p200 = pneg %p199
    $region34: #{_lambda_.12} parent=5 // pred_check_branch
      %202 = sbr.rel (%p200) target = $region36
    $region35: #{_lambda_.12} parent=5 // pred_region
      // Predicated region
      $region37: #{_lambda_.12} parent=35 // pred_check
        %p203 = pneg %p32
      $region38: #{_lambda_.12} parent=35 // pred_check_branch
        %205 = sbr.rel (%p203) target = $region40
      $region39: #{_lambda_.12} parent=35 // pred_region
        %p206 = scmp.lt.s32.totalorder %s12, 1
        %s207 = scalar_select %p206, %s12, 1
        %s208 = smul.addr %s207, 2
        %s209 = smul.addr %s208, 8
        %s210 = scalar_lea.vmem %s0, %s209
      $region40: #{_lambda_.12} parent=35 // pred_fallthru
        _
    $region36: #{_lambda_.12} parent=5 // pred_fallthru
      _
    %p211 = scmp.le.s32.totalorder 1, %s12
    %p212 = scmp.lt.s32.totalorder %s12, 3
    %p213 = pnand %p211, %p212
    %p214 = pneg %p213
    // Predicated region
    $region41: #{_lambda_.12} parent=5 // pred_check
      _
    $region42: #{_lambda_.12} parent=5 // pred_check_branch
      %216 = sbr.rel (%p213) target = $region44
    $region43: #{_lambda_.12} parent=5 // pred_region
      %s217 = ssub.s32 %s12, 1
      %p218 = scmp.lt.s32.totalorder %s17, 1
      %s219 = scalar_select %p218, %s17, 1
      %s220 = smul.addr %s219, 2
      %s221 = smul.addr %s220, 8
      %s222 = scalar_lea.vmem %s0, %s221
      %p223 = pneg %p38
      %p224 = pneg %p35
      %p225 = pneg %p59
      %p226 = pneg %p56
      %p227 = pneg %p80
      %p228 = pneg %p77
      %p229 = pneg %p101
      %p230 = pneg %p98
      %p231 = pneg %p122
      %p232 = pneg %p119
      %p233 = pneg %p143
      %p234 = pneg %p140
      %p235 = pneg %p169
      %p236 = pneg %p166
      %p237 = scmp.lt.s32.totalorder %s17, 1
      %s238 = scalar_select %p237, %s17, 1
      %s239 = smul.addr %s238, 2
      %s240 = smul.addr %s239, 8
      %s241 = scalar_lea.vmem %s6, %s240
      %p242 = scmp.lt.s32.totalorder %s17, 1
      %s243 = scalar_select %p242, %s17, 1
      %s244 = smul.addr %s243, 2
      %s245 = smul.addr %s244, 8
      %s246 = scalar_lea.vmem %s0, %s245
      %p247 = scmp.lt.s32.totalorder %s17, 1
      %s248 = scalar_select %p247, %s17, 1
      %s249 = smul.addr %s248, 2
      %s250 = smul.addr %s249, 8
      %s251 = scalar_lea.vmem %s6, %s250
      %v252 = vld [vmem:[%s246] sm:$0xff]
      %v253 = vld [vmem:[%s246 + $0x8] sm:$0xff]
      %v254 = vld [vmem:[%s2] sm:$0x1]
      %v256 = vlaneseq
      %v257 = vshrl.u32 %v256, 7
      %v258 = vsub.s32 0, %v257
      %v259 = vrot.slane %v254, %v258
      %v261 = vmul.f32 %v252, %v259
      %v262 = vmul.f32 %v253, %v259
      %v263 = vld [vmem:[%s3] sm:$0x1]
      %v265 = vlaneseq
      %v266 = vshrl.u32 %v265, 7
      %v267 = vsub.s32 0, %v266
      %v268 = vrot.slane %v263, %v267
      %v270 = vadd.f32 %v261, %v268
      %v271 = vadd.f32 %v262, %v268
      %vm274 = vcmask 1040384
      %v275 = vrot.slane %v270, 7
      %v276 = vrot.slane %v271, 7
      %v277 = vsel %vm274, %v275, %v276
      %v280 = vsel %vm274, 0.0, %v275
      %v281 = vsel %vm274, %v276, 0.0
      %v282 = vld [vmem:[%s1] sm:$0xff]
      %v283 = vld [vmem:[%s1 + $0x8] sm:$0xff]
      %v284 = vld [vmem:[%s1 + $0x10] sm:$0xff]
      %v285 = vld [vmem:[%s1 + $0x18] sm:$0xff]
      %v286 = vld [vmem:[%s1 + $0x20] sm:$0xff]
      %v287 = vld [vmem:[%s1 + $0x28] sm:$0xff]
      %v288 = vld [vmem:[%s1 + $0x30] sm:$0xff]
      %v289 = vld [vmem:[%s1 + $0x38] sm:$0xff]
      %s290 = scalar_lea.vmem %s1, 64
      %v291 = vld [vmem:[%s290] sm:$0xff]
      %v292 = vld [vmem:[%s290 + $0x8] sm:$0xff]
      %v293 = vld [vmem:[%s290 + $0x10] sm:$0xff]
      %v294 = vld [vmem:[%s290 + $0x18] sm:$0xff]
      %v295 = vld [vmem:[%s290 + $0x20] sm:$0xff]
      %v296 = vld [vmem:[%s290 + $0x28] sm:$0xff]
      %v297 = vld [vmem:[%s290 + $0x30] sm:$0xff]
      %v298 = vld [vmem:[%s290 + $0x38] sm:$0xff]
      %vm301 = vcmask 1046528
      %v302 = vrot.slane %v280, 1
      %v303 = vrot.slane %v277, 1
      %v304 = vsel %vm301, %v302, %v303
      %v305 = vrot.slane %v281, 1
      %v306 = vsel %vm301, %v303, %v305
      %vm307 = vcmask 523264
      %v308 = vsel %vm307, %v304, 0
      %v310 = vsel %vm307, %v306, 0
      %312 = vmatprep.subr.mxu0 0.0
      %313 = vmatpush1.msra.mxu0 %v291
      %314 = vmatprep.subr.mxu0 0.0
      %315 = vmatpush1.msra.mxu0 %v292
      %316 = vmatprep.subr.mxu0 0.0
      %317 = vmatpush1.msra.mxu0 %v293
      %318 = vmatprep.subr.mxu0 0.0
      %319 = vmatpush1.msra.mxu0 %v294
      %320 = vmatprep.subr.mxu0 0.0
      %321 = vmatpush1.msra.mxu0 %v295
      %322 = vmatprep.subr.mxu0 0.0
      %323 = vmatpush1.msra.mxu0 %v296
      %324 = vmatprep.subr.mxu0 0.0
      %325 = vmatpush1.msra.mxu0 %v297
      %326 = vmatprep.subr.mxu0 0.0
      %327 = vmatpush1.msra.mxu0 %v298
      %328 = vmatprep.subr.mxu0 0.0
      %329 = vmatpush1.msra.mxu0 0.0
      %330 = vmatprep.subr.mxu0 0.0
      %331 = vmatpush1.msra.mxu0 0.0
      %332 = vmatprep.subr.mxu0 0.0
      %333 = vmatpush1.msra.mxu0 0.0
      %334 = vmatprep.subr.mxu0 0.0
      %335 = vmatpush1.msra.mxu0 0.0
      %336 = vmatprep.subr.mxu0 0.0
      %337 = vmatpush1.msra.mxu0 0.0
      %338 = vmatprep.subr.mxu0 0.0
      %339 = vmatpush1.msra.mxu0 0.0
      %340 = vmatprep.subr.mxu0 0.0
      %341 = vmatpush1.msra.mxu0 0.0
      %342 = vmatprep.subr.mxu0 0.0
      %343 = vmatpush1.msra.mxu0 0.0
      %344 = vmatprep.subr.mxu0 0.0
      %345 = vmatpush1.msra.mxu0 0.0
      %346 = vmatprep.subr.mxu0 0.0
      %347 = vmatpush1.msra.mxu0 0.0
      %348 = vmatprep.subr.mxu0 0.0
      %349 = vmatpush1.msra.mxu0 0.0
      %350 = vmatprep.subr.mxu0 0.0
      %351 = vmatpush1.msra.mxu0 0.0
      %352 = vmatprep.subr.mxu0 0.0
      %353 = vmatpush1.msra.mxu0 0.0
      %354 = vmatprep.subr.mxu0 0.0
      %355 = vmatpush1.msra.mxu0 0.0
      %356 = vmatprep.subr.mxu0 0.0
      %357 = vmatpush1.msra.mxu0 0.0
      %358 = vmatprep.subr.mxu0 0.0
      %359 = vmatpush1.msra.mxu0 0.0
      %360 = vmatprep.subr.mxu0 0.0
      %361 = vmatpush1.msra.mxu0 0.0
      %362 = vmatprep.subr.mxu0 0.0
      %363 = vmatpush1.msra.mxu0 0.0
      %364 = vmatprep.subr.mxu0 0.0
      %365 = vmatpush1.msra.mxu0 0.0
      %366 = vmatprep.subr.mxu0 0.0
      %367 = vmatpush1.msra.mxu0 0.0
      %368 = vmatprep.subr.mxu0 0.0
      %369 = vmatpush1.msra.mxu0 0.0
      %370 = vmatprep.subr.mxu0 0.0
      %371 = vmatpush1.msra.mxu0 0.0
      %372 = vmatprep.subr.mxu0 0.0
      %373 = vmatpush1.msra.mxu0 0.0
      %374 = vmatprep.subr.mxu0 0.0
      %375 = vmatpush1.msra.mxu0 0.0
      %376 = vmatprep.mubr.f32.mxu0 0.0
      %377 = vmatmul.mubr.f32.gmra.mrb[0].mxu0 %v308
      %v378 = vpop.f32.mrb[0].mxu0
      %v379 = vadd.f32 0.0, %v378
      %v380 = vpop.f32.mrb[0].mxu0
      %381 = vmatprep.mubr.f32.mxu0 0.0
      %382 = vmatmul.mubr.f32.gmra.mrb[0].mxu0 %v310
      %v383 = vpop.f32.mrb[0].mxu0
      %v384 = vadd.f32 0.0, %v383
      %v385 = vpop.f32.mrb[0].mxu0
      %386 = vdwg.mxu0
      %v387 = vsel %vm307, %v280, 0
      %v389 = vsel %vm307, %v277, 0
      %391 = vmatprep.subr.mxu0 0.0
      %392 = vmatpush1.msra.mxu0 %v282
      %393 = vmatprep.subr.mxu0 0.0
      %394 = vmatpush1.msra.mxu0 %v283
      %395 = vmatprep.subr.mxu0 0.0
      %396 = vmatpush1.msra.mxu0 %v284
      %397 = vmatprep.subr.mxu0 0.0
      %398 = vmatpush1.msra.mxu0 %v285
      %399 = vmatprep.subr.mxu0 0.0
      %400 = vmatpush1.msra.mxu0 %v286
      %401 = vmatprep.subr.mxu0 0.0
      %402 = vmatpush1.msra.mxu0 %v287
      %403 = vmatprep.subr.mxu0 0.0
      %404 = vmatpush1.msra.mxu0 %v288
      %405 = vmatprep.subr.mxu0 0.0
      %406 = vmatpush1.msra.mxu0 %v289
      %407 = vmatprep.subr.mxu0 0.0
      %408 = vmatpush1.msra.mxu0 0.0
      %409 = vmatprep.subr.mxu0 0.0
      %410 = vmatpush1.msra.mxu0 0.0
      %411 = vmatprep.subr.mxu0 0.0
      %412 = vmatpush1.msra.mxu0 0.0
      %413 = vmatprep.subr.mxu0 0.0
      %414 = vmatpush1.msra.mxu0 0.0
      %415 = vmatprep.subr.mxu0 0.0
      %416 = vmatpush1.msra.mxu0 0.0
      %417 = vmatprep.subr.mxu0 0.0
      %418 = vmatpush1.msra.mxu0 0.0
      %419 = vmatprep.subr.mxu0 0.0
      %420 = vmatpush1.msra.mxu0 0.0
      %421 = vmatprep.subr.mxu0 0.0
      %422 = vmatpush1.msra.mxu0 0.0
      %423 = vmatprep.subr.mxu0 0.0
      %424 = vmatpush1.msra.mxu0 0.0
      %425 = vmatprep.subr.mxu0 0.0
      %426 = vmatpush1.msra.mxu0 0.0
      %427 = vmatprep.subr.mxu0 0.0
      %428 = vmatpush1.msra.mxu0 0.0
      %429 = vmatprep.subr.mxu0 0.0
      %430 = vmatpush1.msra.mxu0 0.0
      %431 = vmatprep.subr.mxu0 0.0
      %432 = vmatpush1.msra.mxu0 0.0
      %433 = vmatprep.subr.mxu0 0.0
      %434 = vmatpush1.msra.mxu0 0.0
      %435 = vmatprep.subr.mxu0 0.0
      %436 = vmatpush1.msra.mxu0 0.0
      %437 = vmatprep.subr.mxu0 0.0
      %438 = vmatpush1.msra.mxu0 0.0
      %439 = vmatprep.subr.mxu0 0.0
      %440 = vmatpush1.msra.mxu0 0.0
      %441 = vmatprep.subr.mxu0 0.0
      %442 = vmatpush1.msra.mxu0 0.0
      %443 = vmatprep.subr.mxu0 0.0
      %444 = vmatpush1.msra.mxu0 0.0
      %445 = vmatprep.subr.mxu0 0.0
      %446 = vmatpush1.msra.mxu0 0.0
      %447 = vmatprep.subr.mxu0 0.0
      %448 = vmatpush1.msra.mxu0 0.0
      %449 = vmatprep.subr.mxu0 0.0
      %450 = vmatpush1.msra.mxu0 0.0
      %451 = vmatprep.subr.mxu0 0.0
      %452 = vmatpush1.msra.mxu0 0.0
      %453 = vmatprep.subr.mxu0 0.0
      %454 = vmatpush1.msra.mxu0 0.0
      %455 = vmatprep.mubr.f32.mxu0 0.0
      %456 = vmatmul.mubr.f32.gmra.mrb[0].mxu0 %v387
      %v457 = vpop.f32.mrb[0].mxu0
      %v458 = vadd.f32 %v379, %v457
      %v459 = vpop.f32.mrb[0].mxu0
      %460 = vmatprep.mubr.f32.mxu0 0.0
      %461 = vmatmul.mubr.f32.gmra.mrb[0].mxu0 %v389
      %v462 = vpop.f32.mrb[0].mxu0
      %v463 = vadd.f32 %v384, %v462
      %v464 = vpop.f32.mrb[0].mxu0
      %465 = vdwg.mxu0
      %s466 = scalar_lea.vmem %s1, 128
      %v467 = vld [vmem:[%s466] sm:$0xff]
      %v468 = vld [vmem:[%s466 + $0x8] sm:$0xff]
      %v469 = vld [vmem:[%s466 + $0x10] sm:$0xff]
      %v470 = vld [vmem:[%s466 + $0x18] sm:$0xff]
      %v471 = vld [vmem:[%s466 + $0x20] sm:$0xff]
      %v472 = vld [vmem:[%s466 + $0x28] sm:$0xff]
      %v473 = vld [vmem:[%s466 + $0x30] sm:$0xff]
      %v474 = vld [vmem:[%s466 + $0x38] sm:$0xff]
      %vm475 = vcmask 1045504
      %v476 = vrot.slane %v280, 2
      %v477 = vrot.slane %v277, 2
      %v478 = vsel %vm475, %v476, %v477
      %v479 = vrot.slane %v281, 2
      %v480 = vsel %vm475, %v477, %v479
      %v481 = vsel %vm307, %v478, 0
      %v483 = vsel %vm307, %v480, 0
      %485 = vmatprep.subr.mxu0 0.0
      %486 = vmatpush1.msra.mxu0 %v467
      %487 = vmatprep.subr.mxu0 0.0
      %488 = vmatpush1.msra.mxu0 %v468
      %489 = vmatprep.subr.mxu0 0.0
      %490 = vmatpush1.msra.mxu0 %v469
      %491 = vmatprep.subr.mxu0 0.0
      %492 = vmatpush1.msra.mxu0 %v470
      %493 = vmatprep.subr.mxu0 0.0
      %494 = vmatpush1.msra.mxu0 %v471
      %495 = vmatprep.subr.mxu0 0.0
      %496 = vmatpush1.msra.mxu0 %v472
      %497 = vmatprep.subr.mxu0 0.0
      %498 = vmatpush1.msra.mxu0 %v473
      %499 = vmatprep.subr.mxu0 0.0
      %500 = vmatpush1.msra.mxu0 %v474
      %501 = vmatprep.subr.mxu0 0.0
      %502 = vmatpush1.msra.mxu0 0.0
      %503 = vmatprep.subr.mxu0 0.0
      %504 = vmatpush1.msra.mxu0 0.0
      %505 = vmatprep.subr.mxu0 0.0
      %506 = vmatpush1.msra.mxu0 0.0
      %507 = vmatprep.subr.mxu0 0.0
      %508 = vmatpush1.msra.mxu0 0.0
      %509 = vmatprep.subr.mxu0 0.0
      %510 = vmatpush1.msra.mxu0 0.0
      %511 = vmatprep.subr.mxu0 0.0
      %512 = vmatpush1.msra.mxu0 0.0
      %513 = vmatprep.subr.mxu0 0.0
      %514 = vmatpush1.msra.mxu0 0.0
      %515 = vmatprep.subr.mxu0 0.0
      %516 = vmatpush1.msra.mxu0 0.0
      %517 = vmatprep.subr.mxu0 0.0
      %518 = vmatpush1.msra.mxu0 0.0
      %519 = vmatprep.subr.mxu0 0.0
      %520 = vmatpush1.msra.mxu0 0.0
      %521 = vmatprep.subr.mxu0 0.0
      %522 = vmatpush1.msra.mxu0 0.0
      %523 = vmatprep.subr.mxu0 0.0
      %524 = vmatpush1.msra.mxu0 0.0
      %525 = vmatprep.subr.mxu0 0.0
      %526 = vmatpush1.msra.mxu0 0.0
      %527 = vmatprep.subr.mxu0 0.0
      %528 = vmatpush1.msra.mxu0 0.0
      %529 = vmatprep.subr.mxu0 0.0
      %530 = vmatpush1.msra.mxu0 0.0
      %531 = vmatprep.subr.mxu0 0.0
      %532 = vmatpush1.msra.mxu0 0.0
      %533 = vmatprep.subr.mxu0 0.0
      %534 = vmatpush1.msra.mxu0 0.0
      %535 = vmatprep.subr.mxu0 0.0
      %536 = vmatpush1.msra.mxu0 0.0
      %537 = vmatprep.subr.mxu0 0.0
      %538 = vmatpush1.msra.mxu0 0.0
      %539 = vmatprep.subr.mxu0 0.0
      %540 = vmatpush1.msra.mxu0 0.0
      %541 = vmatprep.subr.mxu0 0.0
      %542 = vmatpush1.msra.mxu0 0.0
      %543 = vmatprep.subr.mxu0 0.0
      %544 = vmatpush1.msra.mxu0 0.0
      %545 = vmatprep.subr.mxu0 0.0
      %546 = vmatpush1.msra.mxu0 0.0
      %547 = vmatprep.subr.mxu0 0.0
      %548 = vmatpush1.msra.mxu0 0.0
      %549 = vmatprep.mubr.f32.mxu0 0.0
      %550 = vmatmul.mubr.f32.gmra.mrb[0].mxu0 %v481
      %v551 = vpop.f32.mrb[0].mxu0
      %v552 = vadd.f32 0.0, %v551
      %v553 = vpop.f32.mrb[0].mxu0
      %554 = vmatprep.mubr.f32.mxu0 0.0
      %555 = vmatmul.mubr.f32.gmra.mrb[0].mxu0 %v483
      %v556 = vpop.f32.mrb[0].mxu0
      %v557 = vadd.f32 0.0, %v556
      %v558 = vpop.f32.mrb[0].mxu0
      %559 = vdwg.mxu0
      %v560 = vadd.f32 %v458, %v552
      %v561 = vadd.f32 %v463, %v557
      %v562 = vld [vmem:[%s4] sm:$0x1]
      %v564 = vlaneseq
      %v565 = vshrl.u32 %v564, 7
      %v566 = vsub.s32 0, %v565
      %v567 = vrot.slane %v562, %v566
      %v569 = vmul.f32 %v560, %v567
      %v570 = vmul.f32 %v561, %v567
      %v571 = vld [vmem:[%s5] sm:$0x1]
      %v573 = vlaneseq
      %v574 = vshrl.u32 %v573, 7
      %v575 = vsub.s32 0, %v574
      %v576 = vrot.slane %v571, %v575
      %v578 = vadd.f32 %v569, %v576
      %v579 = vadd.f32 %v570, %v576
      %v580 = vmax.f32 %v578, 0.0
      %v581 = vmax.f32 %v579, 0.0
      %582 = vst.msk [vmem:[%s251] sm:$0xff] %vm307, %v580
      %583 = vst.msk [vmem:[%s251 + $0x8] sm:$0xff] %vm307, %v581
      %p584 = scmp.lt.s32.totalorder %s17, 1
      %s585 = scalar_select %p584, %s17, 1
      %s586 = smul.addr %s585, 2
      %s587 = smul.addr %s586, 8
      %s588 = scalar_lea.vmem %s6, %s587
      // Predicated region
      $region45: #{_lambda_.12} parent=43 // pred_check
        %p589 = pneg %p166
      $region46: #{_lambda_.12} parent=43 // pred_check_branch
        %591 = sbr.rel (%p589) target = $region48
      $region47: #{_lambda_.12} parent=43 // pred_region
        _
      $region48: #{_lambda_.12} parent=43 // pred_fallthru
        _
    $region44: #{_lambda_.12} parent=5 // pred_fallthru
      _
    %p592 = scmp.le.s32.totalorder 2, %s12
    // Predicated region
    $region49: #{_lambda_.12} parent=5 // pred_check
      %p593 = pneg %p592
    $region50: #{_lambda_.12} parent=5 // pred_check_branch
      %595 = sbr.rel (%p593) target = $region52
    $region51: #{_lambda_.12} parent=5 // pred_region
      %s596 = ssub.s32 %s12, 2
      // Predicated region
      $region53: #{_lambda_.12} parent=51 // pred_check
        %p597 = pneg %p172
      $region54: #{_lambda_.12} parent=51 // pred_check_branch
        %599 = sbr.rel (%p597) target = $region56
      $region55: #{_lambda_.12} parent=51 // pred_region
        %p600 = scmp.lt.s32.totalorder %s18, 1
        %s601 = scalar_select %p600, %s18, 1
        %s602 = smul.addr %s601, 2
        %s603 = smul.addr %s602, 8
        %s604 = scalar_lea.vmem %s6, %s603
      $region56: #{_lambda_.12} parent=51 // pred_fallthru
        _
    $region52: #{_lambda_.12} parent=5 // pred_fallthru
      _
  $region6: #{_lambda_.12} parent=0 // loop_footer
    %s16 = sadd.s32 1, %s12
  $region7: #{_lambda_.12} parent=0 // loop_footer_branch
    %11 = sbr.rel target = $region3
  $region8: #{_lambda_.12} parent=0 // loop_exit
    _

// kernel: tile.70
$region0: #{tile.70}
  #allocation0 [shape = 's32[1]{0}', space=sflag, size = 0x4, scoped, tag = 'scoped memory for tile.70']
  %s0 = inlined_call_operand.<no memory space> [shape: f32[], index: 0, kind: input, shape index: {}]
  %s1 = inlined_call_operand.vmem [shape: f32[1,32], index: 1, kind: output, shape index: {}]
  %v2 = vstv %s0
  %3 = vst [vmem:[%s1] sm:$0x1] %v2

// kernel: _lambda_.13
$region0: #{_lambda_.13}
  #allocation0 [shape = 'u32[]', space=smem, size = 0x4, offset = 0x4, fixed_abs, tag = 'smem constant byte address 0x4 - core index']
  #allocation1 [shape = 'u32[144,128]{1,0:T(1,128)}', space=vmem, size = 0x12000, scoped, tag = 'internal scratch']
  %s0 = inlined_call_operand.vmem [shape: f32[2,16,32], index: 0, kind: input, shape index: {}]
  %s1 = inlined_call_operand.vmem [shape: f32[7,32,16], index: 1, kind: input, shape index: {}]
  %s2 = inlined_call_operand.vmem [shape: f32[1,32], index: 2, kind: input, shape index: {}]
  %s3 = inlined_call_operand.vmem [shape: f32[1,32], index: 3, kind: input, shape index: {}]
  %s4 = inlined_call_operand.vmem [shape: f32[1,16], index: 4, kind: input, shape index: {}]
  %s5 = inlined_call_operand.vmem [shape: f32[1,16], index: 5, kind: input, shape index: {}]
  %s6 = inlined_call_operand.vmem [shape: f32[2,16,16], index: 6, kind: output, shape index: {}]
  %s7 = sld [smem:[#allocation0]]
  $region57: #{_lambda_.13} parent=0
    _
  %s9 = ssub.s32 1, %s7
  %s10 = scalar_select 0, %s9, %s7
  loop: start=0, step=1, limit=4
  $region2: #{_lambda_.13} parent=0 // loop_pre_header
    _
  $region3: #{_lambda_.13} parent=0 // loop_header
    %s12 = sphi 0, %s16
    %p13 = scmp.ge.s32.totalorder %s12, 4
    %s22 = sphi 0, %s24
    %s25 = sphi 0, %s22
    %s26 = sphi 0, %s25
    %s42 = sphi 0, %s26
    %s46 = sphi 0, %s46
    %s48 = sphi 0, %s46
    %s49 = sphi 0, %s48
    %s63 = sphi 0, %s49
    %s67 = sphi 0, %s67
    %s69 = sphi 0, %s67
    %s70 = sphi 0, %s69
    %s84 = sphi 0, %s70
    %s88 = sphi 0, %s88
    %s90 = sphi 0, %s88
    %s91 = sphi 0, %s90
    %s105 = sphi 0, %s91
    %s109 = sphi 0, %s109
    %s111 = sphi 0, %s109
    %s112 = sphi 0, %s111
    %s126 = sphi 0, %s112
    %s130 = sphi 0, %s130
    %s132 = sphi 0, %s130
    %s133 = sphi 0, %s132
    %s147 = sphi 0, %s133
    %s153 = sphi 0, %s155
    %s156 = sphi 0, %s153
    %s157 = sphi 0, %s156
    %s173 = sphi 0, %s157
  $region4: #{_lambda_.13} parent=0 // loop_header_branch
    %15 = sbr.rel (%p13) target = $region8
  $region5: #{_lambda_.13} parent=0 // loop_body
    %s17 = ssub.s32 %s12, 1
    %s18 = ssub.s32 %s12, 2
    %s19 = sadd.s32 %s12, 1
    %s20 = ssub.s32 %s12, %s19
    %p21 = scmp.eq.s32.totalorder %s20, 0
    %s23 = sadd.s32 %s22, 1
    %s24 = scalar_select %p21, %s22, %s23
    %p27 = pneg %p21
    %p28 = scmp.eq.s32.totalorder %s12, 1
    %p29 = por %p27, %p28
    %p30 = scmp.ne.s32.totalorder %s22, %s25
    %p31 = scmp.eq.s32.totalorder %s12, 0
    %p32 = por %p30, %p31
    %p33 = scmp.ne.s32.totalorder %s22, %s25
    %p34 = scmp.eq.s32.totalorder %s17, 1
    %p35 = por %p33, %p34
    %p36 = scmp.ne.s32.totalorder %s25, %s26
    %p37 = scmp.eq.s32.totalorder %s17, 0
    %p38 = por %p36, %p37
    %p39 = scmp.ne.s32.totalorder %s25, %s26
    %p40 = scmp.eq.s32.totalorder %s18, 1
    %p41 = por %p39, %p40
    %p43 = scmp.ne.s32.totalorder %s26, %s42
    %p44 = scmp.eq.s32.totalorder %s18, 0
    %p45 = por %p43, %p44
    %s47 = sadd.s32 %s46, 1
    %p50 = scmp.eq.s32.totalorder %s12, 1
    %p51 = scmp.ne.s32.totalorder %s46, %s48
    %p52 = scmp.eq.s32.totalorder %s12, 0
    %p53 = por %p51, %p52
    %p54 = scmp.ne.s32.totalorder %s46, %s48
    %p55 = scmp.eq.s32.totalorder %s17, 1
    %p56 = por %p54, %p55
    %p57 = scmp.ne.s32.totalorder %s48, %s49
    %p58 = scmp.eq.s32.totalorder %s17, 0
    %p59 = por %p57, %p58
    %p60 = scmp.ne.s32.totalorder %s48, %s49
    %p61 = scmp.eq.s32.totalorder %s18, 1
    %p62 = por %p60, %p61
    %p64 = scmp.ne.s32.totalorder %s49, %s63
    %p65 = scmp.eq.s32.totalorder %s18, 0
    %p66 = por %p64, %p65
    %s68 = sadd.s32 %s67, 1
    %p71 = scmp.eq.s32.totalorder %s12, 1
    %p72 = scmp.ne.s32.totalorder %s67, %s69
    %p73 = scmp.eq.s32.totalorder %s12, 0
    %p74 = por %p72, %p73
    %p75 = scmp.ne.s32.totalorder %s67, %s69
    %p76 = scmp.eq.s32.totalorder %s17, 1
    %p77 = por %p75, %p76
    %p78 = scmp.ne.s32.totalorder %s69, %s70
    %p79 = scmp.eq.s32.totalorder %s17, 0
    %p80 = por %p78, %p79
    %p81 = scmp.ne.s32.totalorder %s69, %s70
    %p82 = scmp.eq.s32.totalorder %s18, 1
    %p83 = por %p81, %p82
    %p85 = scmp.ne.s32.totalorder %s70, %s84
    %p86 = scmp.eq.s32.totalorder %s18, 0
    %p87 = por %p85, %p86
    %s89 = sadd.s32 %s88, 1
    %p92 = scmp.eq.s32.totalorder %s12, 1
    %p93 = scmp.ne.s32.totalorder %s88, %s90
    %p94 = scmp.eq.s32.totalorder %s12, 0
    %p95 = por %p93, %p94
    %p96 = scmp.ne.s32.totalorder %s88, %s90
    %p97 = scmp.eq.s32.totalorder %s17, 1
    %p98 = por %p96, %p97
    %p99 = scmp.ne.s32.totalorder %s90, %s91
    %p100 = scmp.eq.s32.totalorder %s17, 0
    %p101 = por %p99, %p100
    %p102 = scmp.ne.s32.totalorder %s90, %s91
    %p103 = scmp.eq.s32.totalorder %s18, 1
    %p104 = por %p102, %p103
    %p106 = scmp.ne.s32.totalorder %s91, %s105
    %p107 = scmp.eq.s32.totalorder %s18, 0
    %p108 = por %p106, %p107
    %s110 = sadd.s32 %s109, 1
    %p113 = scmp.eq.s32.totalorder %s12, 1
    %p114 = scmp.ne.s32.totalorder %s109, %s111
    %p115 = scmp.eq.s32.totalorder %s12, 0
    %p116 = por %p114, %p115
    %p117 = scmp.ne.s32.totalorder %s109, %s111
    %p118 = scmp.eq.s32.totalorder %s17, 1
    %p119 = por %p117, %p118
    %p120 = scmp.ne.s32.totalorder %s111, %s112
    %p121 = scmp.eq.s32.totalorder %s17, 0
    %p122 = por %p120, %p121
    %p123 = scmp.ne.s32.totalorder %s111, %s112
    %p124 = scmp.eq.s32.totalorder %s18, 1
    %p125 = por %p123, %p124
    %p127 = scmp.ne.s32.totalorder %s112, %s126
    %p128 = scmp.eq.s32.totalorder %s18, 0
    %p129 = por %p127, %p128
    %s131 = sadd.s32 %s130, 1
    %p134 = scmp.eq.s32.totalorder %s12, 1
    %p135 = scmp.ne.s32.totalorder %s130, %s132
    %p136 = scmp.eq.s32.totalorder %s12, 0
    %p137 = por %p135, %p136
    %p138 = scmp.ne.s32.totalorder %s130, %s132
    %p139 = scmp.eq.s32.totalorder %s17, 1
    %p140 = por %p138, %p139
    %p141 = scmp.ne.s32.totalorder %s132, %s133
    %p142 = scmp.eq.s32.totalorder %s17, 0
    %p143 = por %p141, %p142
    %p144 = scmp.ne.s32.totalorder %s132, %s133
    %p145 = scmp.eq.s32.totalorder %s18, 1
    %p146 = por %p144, %p145
    %p148 = scmp.ne.s32.totalorder %s133, %s147
    %p149 = scmp.eq.s32.totalorder %s18, 0
    %p150 = por %p148, %p149
    %s151 = ssub.s32 %s12, %s19
    %p152 = scmp.eq.s32.totalorder %s151, 0
    %s154 = sadd.s32 %s153, 1
    %s155 = scalar_select %p152, %s153, %s154
    %p158 = pneg %p152
    %p159 = scmp.eq.s32.totalorder %s12, 1
    %p160 = por %p158, %p159
    %p161 = scmp.ne.s32.totalorder %s153, %s156
    %p162 = scmp.eq.s32.totalorder %s12, 0
    %p163 = por %p161, %p162
    %p164 = scmp.ne.s32.totalorder %s153, %s156
    %p165 = scmp.eq.s32.totalorder %s17, 1
    %p166 = por %p164, %p165
    %p167 = scmp.ne.s32.totalorder %s156, %s157
    %p168 = scmp.eq.s32.totalorder %s17, 0
    %p169 = por %p167, %p168
    %p170 = scmp.ne.s32.totalorder %s156, %s157
    %p171 = scmp.eq.s32.totalorder %s18, 1
    %p172 = por %p170, %p171
    %p174 = scmp.ne.s32.totalorder %s157, %s173
    %p175 = scmp.eq.s32.totalorder %s18, 0
    %p176 = por %p174, %p175
    %p177 = scmp.le.s32.totalorder 1, %s12
    %p178 = scmp.lt.s32.totalorder %s12, 3
    %p179 = pnand %p177, %p178
    %p180 = pneg %p179
    // Predicated region
    $region9: #{_lambda_.13} parent=5 // pred_check
      _
    $region10: #{_lambda_.13} parent=5 // pred_check_branch
      %182 = sbr.rel (%p179) target = $region12
    $region11: #{_lambda_.13} parent=5 // pred_region
      %s183 = ssub.s32 %s12, 1
      // Predicated region
      $region13: #{_lambda_.13} parent=11 // pred_check
        %p184 = pneg %p59
      $region14: #{_lambda_.13} parent=11 // pred_check_branch
        %186 = sbr.rel (%p184) target = $region16
      $region15: #{_lambda_.13} parent=11 // pred_region
        _
      $region16: #{_lambda_.13} parent=11 // pred_fallthru
        _
      // Predicated region
      $region17: #{_lambda_.13} parent=11 // pred_check
        %p187 = pneg %p80
      $region18: #{_lambda_.13} parent=11 // pred_check_branch
        %189 = sbr.rel (%p187) target = $region20
      $region19: #{_lambda_.13} parent=11 // pred_region
        _
      $region20: #{_lambda_.13} parent=11 // pred_fallthru
        _
      // Predicated region
      $region21: #{_lambda_.13} parent=11 // pred_check
        %p190 = pneg %p101
      $region22: #{_lambda_.13} parent=11 // pred_check_branch
        %192 = sbr.rel (%p190) target = $region24
      $region23: #{_lambda_.13} parent=11 // pred_region
        _
      $region24: #{_lambda_.13} parent=11 // pred_fallthru
        _
      // Predicated region
      $region25: #{_lambda_.13} parent=11 // pred_check
        %p193 = pneg %p122
      $region26: #{_lambda_.13} parent=11 // pred_check_branch
        %195 = sbr.rel (%p193) target = $region28
      $region27: #{_lambda_.13} parent=11 // pred_region
        _
      $region28: #{_lambda_.13} parent=11 // pred_fallthru
        _
      // Predicated region
      $region29: #{_lambda_.13} parent=11 // pred_check
        %p196 = pneg %p143
      $region30: #{_lambda_.13} parent=11 // pred_check_branch
        %198 = sbr.rel (%p196) target = $region32
      $region31: #{_lambda_.13} parent=11 // pred_region
        _
      $region32: #{_lambda_.13} parent=11 // pred_fallthru
        _
    $region12: #{_lambda_.13} parent=5 // pred_fallthru
      _
    %p199 = scmp.lt.s32.totalorder %s12, 2
    // Predicated region
    $region33: #{_lambda_.13} parent=5 // pred_check
      %p200 = pneg %p199
    $region34: #{_lambda_.13} parent=5 // pred_check_branch
      %202 = sbr.rel (%p200) target = $region36
    $region35: #{_lambda_.13} parent=5 // pred_region
      // Predicated region
      $region37: #{_lambda_.13} parent=35 // pred_check
        %p203 = pneg %p32
      $region38: #{_lambda_.13} parent=35 // pred_check_branch
        %205 = sbr.rel (%p203) target = $region40
      $region39: #{_lambda_.13} parent=35 // pred_region
        %p206 = scmp.lt.s32.totalorder %s12, 1
        %s207 = scalar_select %p206, %s12, 1
        %s208 = smul.addr %s207, 2
        %s209 = smul.addr %s208, 8
        %s210 = scalar_lea.vmem %s0, %s209
      $region40: #{_lambda_.13} parent=35 // pred_fallthru
        _
    $region36: #{_lambda_.13} parent=5 // pred_fallthru
      _
    %p211 = scmp.le.s32.totalorder 1, %s12
    %p212 = scmp.lt.s32.totalorder %s12, 3
    %p213 = pnand %p211, %p212
    %p214 = pneg %p213
    // Predicated region
    $region41: #{_lambda_.13} parent=5 // pred_check
      _
    $region42: #{_lambda_.13} parent=5 // pred_check_branch
      %216 = sbr.rel (%p213) target = $region44
    $region43: #{_lambda_.13} parent=5 // pred_region
      %s217 = ssub.s32 %s12, 1
      %p218 = scmp.lt.s32.totalorder %s17, 1
      %s219 = scalar_select %p218, %s17, 1
      %s220 = smul.addr %s219, 2
      %s221 = smul.addr %s220, 8
      %s222 = scalar_lea.vmem %s0, %s221
      %p223 = pneg %p38
      %p224 = pneg %p35
      %p225 = pneg %p59
      %p226 = pneg %p56
      %p227 = pneg %p80
      %p228 = pneg %p77
      %p229 = pneg %p101
      %p230 = pneg %p98
      %p231 = pneg %p122
      %p232 = pneg %p119
      %p233 = pneg %p143
      %p234 = pneg %p140
      %p235 = pneg %p169
      %p236 = pneg %p166
      %p237 = scmp.lt.s32.totalorder %s17, 1
      %s238 = scalar_select %p237, %s17, 1
      %s239 = smul.addr %s238, 2
      %s240 = smul.addr %s239, 8
      %s241 = scalar_lea.vmem %s6, %s240
      %p242 = scmp.lt.s32.totalorder %s17, 1
      %s243 = scalar_select %p242, %s17, 1
      %s244 = smul.addr %s243, 2
      %s245 = smul.addr %s244, 8
      %s246 = scalar_lea.vmem %s0, %s245
      %p247 = scmp.lt.s32.totalorder %s17, 1
      %s248 = scalar_select %p247, %s17, 1
      %s249 = smul.addr %s248, 2
      %s250 = smul.addr %s249, 8
      %s251 = scalar_lea.vmem %s6, %s250
      %v252 = vld [vmem:[%s246] sm:$0xff]
      %v253 = vld [vmem:[%s246 + $0x8] sm:$0xff]
      %v254 = vld [vmem:[%s2] sm:$0x1]
      %v256 = vlaneseq
      %v257 = vshrl.u32 %v256, 7
      %v258 = vsub.s32 0, %v257
      %v259 = vrot.slane %v254, %v258
      %v261 = vmul.f32 %v252, %v259
      %v262 = vmul.f32 %v253, %v259
      %v263 = vld [vmem:[%s3] sm:$0x1]
      %v265 = vlaneseq
      %v266 = vshrl.u32 %v265, 7
      %v267 = vsub.s32 0, %v266
      %v268 = vrot.slane %v263, %v267
      %v270 = vadd.f32 %v261, %v268
      %v271 = vadd.f32 %v262, %v268
      %vm274 = vcmask 1042432
      %v275 = vrot.slane %v270, 5
      %v276 = vrot.slane %v271, 5
      %v277 = vsel %vm274, %v275, %v276
      %v280 = vsel %vm274, 0.0, %v275
      %v281 = vsel %vm274, %v276, 0.0
      %v282 = vld [vmem:[%s1] sm:$0xff]
      %v283 = vld [vmem:[%s1 + $0x8] sm:$0xff]
      %v284 = vld [vmem:[%s1 + $0x10] sm:$0xff]
      %v285 = vld [vmem:[%s1 + $0x18] sm:$0xff]
      %s286 = scalar_lea.vmem %s1, 32
      %v287 = vld [vmem:[%s286] sm:$0xff]
      %v288 = vld [vmem:[%s286 + $0x8] sm:$0xff]
      %v289 = vld [vmem:[%s286 + $0x10] sm:$0xff]
      %v290 = vld [vmem:[%s286 + $0x18] sm:$0xff]
      %vm293 = vcmask 1046528
      %v294 = vrot.slane %v280, 1
      %v295 = vrot.slane %v277, 1
      %v296 = vsel %vm293, %v294, %v295
      %v297 = vrot.slane %v281, 1
      %v298 = vsel %vm293, %v295, %v297
      %vm299 = vcmask 261120
      %v300 = vsel %vm299, %v296, 0
      %v302 = vsel %vm299, %v298, 0
      %304 = vmatprep.subr.mxu0 0.0
      %305 = vmatpush1.msra.mxu0 %v287
      %306 = vmatprep.subr.mxu0 0.0
      %307 = vmatpush1.msra.mxu0 %v288
      %308 = vmatprep.subr.mxu0 0.0
      %309 = vmatpush1.msra.mxu0 %v289
      %310 = vmatprep.subr.mxu0 0.0
      %311 = vmatpush1.msra.mxu0 %v290
      %312 = vmatprep.subr.mxu0 0.0
      %313 = vmatpush1.msra.mxu0 0.0
      %314 = vmatprep.subr.mxu0 0.0
      %315 = vmatpush1.msra.mxu0 0.0
      %316 = vmatprep.subr.mxu0 0.0
      %317 = vmatpush1.msra.mxu0 0.0
      %318 = vmatprep.subr.mxu0 0.0
      %319 = vmatpush1.msra.mxu0 0.0
      %320 = vmatprep.subr.mxu0 0.0
      %321 = vmatpush1.msra.mxu0 0.0
      %322 = vmatprep.subr.mxu0 0.0
      %323 = vmatpush1.msra.mxu0 0.0
      %324 = vmatprep.subr.mxu0 0.0
      %325 = vmatpush1.msra.mxu0 0.0
      %326 = vmatprep.subr.mxu0 0.0
      %327 = vmatpush1.msra.mxu0 0.0
      %328 = vmatprep.subr.mxu0 0.0
      %329 = vmatpush1.msra.mxu0 0.0
      %330 = vmatprep.subr.mxu0 0.0
      %331 = vmatpush1.msra.mxu0 0.0
      %332 = vmatprep.subr.mxu0 0.0
      %333 = vmatpush1.msra.mxu0 0.0
      %334 = vmatprep.subr.mxu0 0.0
      %335 = vmatpush1.msra.mxu0 0.0
      %336 = vmatprep.subr.mxu0 0.0
      %337 = vmatpush1.msra.mxu0 0.0
      %338 = vmatprep.subr.mxu0 0.0
      %339 = vmatpush1.msra.mxu0 0.0
      %340 = vmatprep.subr.mxu0 0.0
      %341 = vmatpush1.msra.mxu0 0.0
      %342 = vmatprep.subr.mxu0 0.0
      %343 = vmatpush1.msra.mxu0 0.0
      %344 = vmatprep.subr.mxu0 0.0
      %345 = vmatpush1.msra.mxu0 0.0
      %346 = vmatprep.subr.mxu0 0.0
      %347 = vmatpush1.msra.mxu0 0.0
      %348 = vmatprep.subr.mxu0 0.0
      %349 = vmatpush1.msra.mxu0 0.0
      %350 = vmatprep.subr.mxu0 0.0
      %351 = vmatpush1.msra.mxu0 0.0
      %352 = vmatprep.subr.mxu0 0.0
      %353 = vmatpush1.msra.mxu0 0.0
      %354 = vmatprep.subr.mxu0 0.0
      %355 = vmatpush1.msra.mxu0 0.0
      %356 = vmatprep.subr.mxu0 0.0
      %357 = vmatpush1.msra.mxu0 0.0
      %358 = vmatprep.subr.mxu0 0.0
      %359 = vmatpush1.msra.mxu0 0.0
      %360 = vmatprep.subr.mxu0 0.0
      %361 = vmatpush1.msra.mxu0 0.0
      %362 = vmatprep.subr.mxu0 0.0
      %363 = vmatpush1.msra.mxu0 0.0
      %364 = vmatprep.subr.mxu0 0.0
      %365 = vmatpush1.msra.mxu0 0.0
      %366 = vmatprep.subr.mxu0 0.0
      %367 = vmatpush1.msra.mxu0 0.0
      %368 = vmatprep.mubr.f32.mxu0 0.0
      %369 = vmatmul.mubr.f32.gmra.mrb[0].mxu0 %v300
      %v370 = vpop.f32.mrb[0].mxu0
      %v371 = vadd.f32 0.0, %v370
      %v372 = vpop.f32.mrb[0].mxu0
      %373 = vmatprep.mubr.f32.mxu0 0.0
      %374 = vmatmul.mubr.f32.gmra.mrb[0].mxu0 %v302
      %v375 = vpop.f32.mrb[0].mxu0
      %v376 = vadd.f32 0.0, %v375
      %v377 = vpop.f32.mrb[0].mxu0
      %378 = vdwg.mxu0
      %v379 = vsel %vm299, %v280, 0
      %v381 = vsel %vm299, %v277, 0
      %383 = vmatprep.subr.mxu0 0.0
      %384 = vmatpush1.msra.mxu0 %v282
      %385 = vmatprep.subr.mxu0 0.0
      %386 = vmatpush1.msra.mxu0 %v283
      %387 = vmatprep.subr.mxu0 0.0
      %388 = vmatpush1.msra.mxu0 %v284
      %389 = vmatprep.subr.mxu0 0.0
      %390 = vmatpush1.msra.mxu0 %v285
      %391 = vmatprep.subr.mxu0 0.0
      %392 = vmatpush1.msra.mxu0 0.0
      %393 = vmatprep.subr.mxu0 0.0
      %394 = vmatpush1.msra.mxu0 0.0
      %395 = vmatprep.subr.mxu0 0.0
      %396 = vmatpush1.msra.mxu0 0.0
      %397 = vmatprep.subr.mxu0 0.0
      %398 = vmatpush1.msra.mxu0 0.0
      %399 = vmatprep.subr.mxu0 0.0
      %400 = vmatpush1.msra.mxu0 0.0
      %401 = vmatprep.subr.mxu0 0.0
      %402 = vmatpush1.msra.mxu0 0.0
      %403 = vmatprep.subr.mxu0 0.0
      %404 = vmatpush1.msra.mxu0 0.0
      %405 = vmatprep.subr.mxu0 0.0
      %406 = vmatpush1.msra.mxu0 0.0
      %407 = vmatprep.subr.mxu0 0.0
      %408 = vmatpush1.msra.mxu0 0.0
      %409 = vmatprep.subr.mxu0 0.0
      %410 = vmatpush1.msra.mxu0 0.0
      %411 = vmatprep.subr.mxu0 0.0
      %412 = vmatpush1.msra.mxu0 0.0
      %413 = vmatprep.subr.mxu0 0.0
      %414 = vmatpush1.msra.mxu0 0.0
      %415 = vmatprep.subr.mxu0 0.0
      %416 = vmatpush1.msra.mxu0 0.0
      %417 = vmatprep.subr.mxu0 0.0
      %418 = vmatpush1.msra.mxu0 0.0
      %419 = vmatprep.subr.mxu0 0.0
      %420 = vmatpush1.msra.mxu0 0.0
      %421 = vmatprep.subr.mxu0 0.0
      %422 = vmatpush1.msra.mxu0 0.0
      %423 = vmatprep.subr.mxu0 0.0
      %424 = vmatpush1.msra.mxu0 0.0
      %425 = vmatprep.subr.mxu0 0.0
      %426 = vmatpush1.msra.mxu0 0.0
      %427 = vmatprep.subr.mxu0 0.0
      %428 = vmatpush1.msra.mxu0 0.0
      %429 = vmatprep.subr.mxu0 0.0
      %430 = vmatpush1.msra.mxu0 0.0
      %431 = vmatprep.subr.mxu0 0.0
      %432 = vmatpush1.msra.mxu0 0.0
      %433 = vmatprep.subr.mxu0 0.0
      %434 = vmatpush1.msra.mxu0 0.0
      %435 = vmatprep.subr.mxu0 0.0
      %436 = vmatpush1.msra.mxu0 0.0
      %437 = vmatprep.subr.mxu0 0.0
      %438 = vmatpush1.msra.mxu0 0.0
      %439 = vmatprep.subr.mxu0 0.0
      %440 = vmatpush1.msra.mxu0 0.0
      %441 = vmatprep.subr.mxu0 0.0
      %442 = vmatpush1.msra.mxu0 0.0
      %443 = vmatprep.subr.mxu0 0.0
      %444 = vmatpush1.msra.mxu0 0.0
      %445 = vmatprep.subr.mxu0 0.0
      %446 = vmatpush1.msra.mxu0 0.0
      %447 = vmatprep.mubr.f32.mxu0 0.0
      %448 = vmatmul.mubr.f32.gmra.mrb[0].mxu0 %v379
      %v449 = vpop.f32.mrb[0].mxu0
      %v450 = vadd.f32 %v371, %v449
      %v451 = vpop.f32.mrb[0].mxu0
      %452 = vmatprep.mubr.f32.mxu0 0.0
      %453 = vmatmul.mubr.f32.gmra.mrb[0].mxu0 %v381
      %v454 = vpop.f32.mrb[0].mxu0
      %v455 = vadd.f32 %v376, %v454
      %v456 = vpop.f32.mrb[0].mxu0
      %457 = vdwg.mxu0
      %s458 = scalar_lea.vmem %s1, 64
      %v459 = vld [vmem:[%s458] sm:$0xff]
      %v460 = vld [vmem:[%s458 + $0x8] sm:$0xff]
      %v461 = vld [vmem:[%s458 + $0x10] sm:$0xff]
      %v462 = vld [vmem:[%s458 + $0x18] sm:$0xff]
      %vm463 = vcmask 1045504
      %v464 = vrot.slane %v280, 2
      %v465 = vrot.slane %v277, 2
      %v466 = vsel %vm463, %v464, %v465
      %v467 = vrot.slane %v281, 2
      %v468 = vsel %vm463, %v465, %v467
      %v469 = vsel %vm299, %v466, 0
      %v471 = vsel %vm299, %v468, 0
      %473 = vmatprep.subr.mxu0 0.0
      %474 = vmatpush1.msra.mxu0 %v459
      %475 = vmatprep.subr.mxu0 0.0
      %476 = vmatpush1.msra.mxu0 %v460
      %477 = vmatprep.subr.mxu0 0.0
      %478 = vmatpush1.msra.mxu0 %v461
      %479 = vmatprep.subr.mxu0 0.0
      %480 = vmatpush1.msra.mxu0 %v462
      %481 = vmatprep.subr.mxu0 0.0
      %482 = vmatpush1.msra.mxu0 0.0
      %483 = vmatprep.subr.mxu0 0.0
      %484 = vmatpush1.msra.mxu0 0.0
      %485 = vmatprep.subr.mxu0 0.0
      %486 = vmatpush1.msra.mxu0 0.0
      %487 = vmatprep.subr.mxu0 0.0
      %488 = vmatpush1.msra.mxu0 0.0
      %489 = vmatprep.subr.mxu0 0.0
      %490 = vmatpush1.msra.mxu0 0.0
      %491 = vmatprep.subr.mxu0 0.0
      %492 = vmatpush1.msra.mxu0 0.0
      %493 = vmatprep.subr.mxu0 0.0
      %494 = vmatpush1.msra.mxu0 0.0
      %495 = vmatprep.subr.mxu0 0.0
      %496 = vmatpush1.msra.mxu0 0.0
      %497 = vmatprep.subr.mxu0 0.0
      %498 = vmatpush1.msra.mxu0 0.0
      %499 = vmatprep.subr.mxu0 0.0
      %500 = vmatpush1.msra.mxu0 0.0
      %501 = vmatprep.subr.mxu0 0.0
      %502 = vmatpush1.msra.mxu0 0.0
      %503 = vmatprep.subr.mxu0 0.0
      %504 = vmatpush1.msra.mxu0 0.0
      %505 = vmatprep.subr.mxu0 0.0
      %506 = vmatpush1.msra.mxu0 0.0
      %507 = vmatprep.subr.mxu0 0.0
      %508 = vmatpush1.msra.mxu0 0.0
      %509 = vmatprep.subr.mxu0 0.0
      %510 = vmatpush1.msra.mxu0 0.0
      %511 = vmatprep.subr.mxu0 0.0
      %512 = vmatpush1.msra.mxu0 0.0
      %513 = vmatprep.subr.mxu0 0.0
      %514 = vmatpush1.msra.mxu0 0.0
      %515 = vmatprep.subr.mxu0 0.0
      %516 = vmatpush1.msra.mxu0 0.0
      %517 = vmatprep.subr.mxu0 0.0
      %518 = vmatpush1.msra.mxu0 0.0
      %519 = vmatprep.subr.mxu0 0.0
      %520 = vmatpush1.msra.mxu0 0.0
      %521 = vmatprep.subr.mxu0 0.0
      %522 = vmatpush1.msra.mxu0 0.0
      %523 = vmatprep.subr.mxu0 0.0
      %524 = vmatpush1.msra.mxu0 0.0
      %525 = vmatprep.subr.mxu0 0.0
      %526 = vmatpush1.msra.mxu0 0.0
      %527 = vmatprep.subr.mxu0 0.0
      %528 = vmatpush1.msra.mxu0 0.0
      %529 = vmatprep.subr.mxu0 0.0
      %530 = vmatpush1.msra.mxu0 0.0
      %531 = vmatprep.subr.mxu0 0.0
      %532 = vmatpush1.msra.mxu0 0.0
      %533 = vmatprep.subr.mxu0 0.0
      %534 = vmatpush1.msra.mxu0 0.0
      %535 = vmatprep.subr.mxu0 0.0
      %536 = vmatpush1.msra.mxu0 0.0
      %537 = vmatprep.mubr.f32.mxu0 0.0
      %538 = vmatmul.mubr.f32.gmra.mrb[0].mxu0 %v469
      %v539 = vpop.f32.mrb[0].mxu0
      %v540 = vadd.f32 0.0, %v539
      %v541 = vpop.f32.mrb[0].mxu0
      %542 = vmatprep.mubr.f32.mxu0 0.0
      %543 = vmatmul.mubr.f32.gmra.mrb[0].mxu0 %v471
      %v544 = vpop.f32.mrb[0].mxu0
      %v545 = vadd.f32 0.0, %v544
      %v546 = vpop.f32.mrb[0].mxu0
      %547 = vdwg.mxu0
      %v548 = vadd.f32 %v450, %v540
      %v549 = vadd.f32 %v455, %v545
      %s550 = scalar_lea.vmem %s1, 96
      %v551 = vld [vmem:[%s550] sm:$0xff]
      %v552 = vld [vmem:[%s550 + $0x8] sm:$0xff]
      %v553 = vld [vmem:[%s550 + $0x10] sm:$0xff]
      %v554 = vld [vmem:[%s550 + $0x18] sm:$0xff]
      %vm555 = vcmask 1044480
      %v556 = vrot.slane %v280, 3
      %v557 = vrot.slane %v277, 3
      %v558 = vsel %vm555, %v556, %v557
      %v559 = vrot.slane %v281, 3
      %v560 = vsel %vm555, %v557, %v559
      %v561 = vsel %vm299, %v558, 0
      %v563 = vsel %vm299, %v560, 0
      %565 = vmatprep.subr.mxu0 0.0
      %566 = vmatpush1.msra.mxu0 %v551
      %567 = vmatprep.subr.mxu0 0.0
      %568 = vmatpush1.msra.mxu0 %v552
      %569 = vmatprep.subr.mxu0 0.0
      %570 = vmatpush1.msra.mxu0 %v553
      %571 = vmatprep.subr.mxu0 0.0
      %572 = vmatpush1.msra.mxu0 %v554
      %573 = vmatprep.subr.mxu0 0.0
      %574 = vmatpush1.msra.mxu0 0.0
      %575 = vmatprep.subr.mxu0 0.0
      %576 = vmatpush1.msra.mxu0 0.0
      %577 = vmatprep.subr.mxu0 0.0
      %578 = vmatpush1.msra.mxu0 0.0
      %579 = vmatprep.subr.mxu0 0.0
      %580 = vmatpush1.msra.mxu0 0.0
      %581 = vmatprep.subr.mxu0 0.0
      %582 = vmatpush1.msra.mxu0 0.0
      %583 = vmatprep.subr.mxu0 0.0
      %584 = vmatpush1.msra.mxu0 0.0
      %585 = vmatprep.subr.mxu0 0.0
      %586 = vmatpush1.msra.mxu0 0.0
      %587 = vmatprep.subr.mxu0 0.0
      %588 = vmatpush1.msra.mxu0 0.0
      %589 = vmatprep.subr.mxu0 0.0
      %590 = vmatpush1.msra.mxu0 0.0
      %591 = vmatprep.subr.mxu0 0.0
      %592 = vmatpush1.msra.mxu0 0.0
      %593 = vmatprep.subr.mxu0 0.0
      %594 = vmatpush1.msra.mxu0 0.0
      %595 = vmatprep.subr.mxu0 0.0
      %596 = vmatpush1.msra.mxu0 0.0
      %597 = vmatprep.subr.mxu0 0.0
      %598 = vmatpush1.msra.mxu0 0.0
      %599 = vmatprep.subr.mxu0 0.0
      %600 = vmatpush1.msra.mxu0 0.0
      %601 = vmatprep.subr.mxu0 0.0
      %602 = vmatpush1.msra.mxu0 0.0
      %603 = vmatprep.subr.mxu0 0.0
      %604 = vmatpush1.msra.mxu0 0.0
      %605 = vmatprep.subr.mxu0 0.0
      %606 = vmatpush1.msra.mxu0 0.0
      %607 = vmatprep.subr.mxu0 0.0
      %608 = vmatpush1.msra.mxu0 0.0
      %609 = vmatprep.subr.mxu0 0.0
      %610 = vmatpush1.msra.mxu0 0.0
      %611 = vmatprep.subr.mxu0 0.0
      %612 = vmatpush1.msra.mxu0 0.0
      %613 = vmatprep.subr.mxu0 0.0
      %614 = vmatpush1.msra.mxu0 0.0
      %615 = vmatprep.subr.mxu0 0.0
      %616 = vmatpush1.msra.mxu0 0.0
      %617 = vmatprep.subr.mxu0 0.0
      %618 = vmatpush1.msra.mxu0 0.0
      %619 = vmatprep.subr.mxu0 0.0
      %620 = vmatpush1.msra.mxu0 0.0
      %621 = vmatprep.subr.mxu0 0.0
      %622 = vmatpush1.msra.mxu0 0.0
      %623 = vmatprep.subr.mxu0 0.0
      %624 = vmatpush1.msra.mxu0 0.0
      %625 = vmatprep.subr.mxu0 0.0
      %626 = vmatpush1.msra.mxu0 0.0
      %627 = vmatprep.subr.mxu0 0.0
      %628 = vmatpush1.msra.mxu0 0.0
      %629 = vmatprep.mubr.f32.mxu0 0.0
      %630 = vmatmul.mubr.f32.gmra.mrb[0].mxu0 %v561
      %v631 = vpop.f32.mrb[0].mxu0
      %v632 = vadd.f32 0.0, %v631
      %v633 = vpop.f32.mrb[0].mxu0
      %634 = vmatprep.mubr.f32.mxu0 0.0
      %635 = vmatmul.mubr.f32.gmra.mrb[0].mxu0 %v563
      %v636 = vpop.f32.mrb[0].mxu0
      %v637 = vadd.f32 0.0, %v636
      %v638 = vpop.f32.mrb[0].mxu0
      %639 = vdwg.mxu0
      %v640 = vadd.f32 %v548, %v632
      %v641 = vadd.f32 %v549, %v637
      %s642 = scalar_lea.vmem %s1, 128
      %v643 = vld [vmem:[%s642] sm:$0xff]
      %v644 = vld [vmem:[%s642 + $0x8] sm:$0xff]
      %v645 = vld [vmem:[%s642 + $0x10] sm:$0xff]
      %v646 = vld [vmem:[%s642 + $0x18] sm:$0xff]
      %vm647 = vcmask 1043456
      %v648 = vrot.slane %v280, 4
      %v649 = vrot.slane %v277, 4
      %v650 = vsel %vm647, %v648, %v649
      %v651 = vrot.slane %v281, 4
      %v652 = vsel %vm647, %v649, %v651
      %v653 = vsel %vm299, %v650, 0
      %v655 = vsel %vm299, %v652, 0
      %657 = vmatprep.subr.mxu0 0.0
      %658 = vmatpush1.msra.mxu0 %v643
      %659 = vmatprep.subr.mxu0 0.0
      %660 = vmatpush1.msra.mxu0 %v644
      %661 = vmatprep.subr.mxu0 0.0
      %662 = vmatpush1.msra.mxu0 %v645
      %663 = vmatprep.subr.mxu0 0.0
      %664 = vmatpush1.msra.mxu0 %v646
      %665 = vmatprep.subr.mxu0 0.0
      %666 = vmatpush1.msra.mxu0 0.0
      %667 = vmatprep.subr.mxu0 0.0
      %668 = vmatpush1.msra.mxu0 0.0
      %669 = vmatprep.subr.mxu0 0.0
      %670 = vmatpush1.msra.mxu0 0.0
      %671 = vmatprep.subr.mxu0 0.0
      %672 = vmatpush1.msra.mxu0 0.0
      %673 = vmatprep.subr.mxu0 0.0
      %674 = vmatpush1.msra.mxu0 0.0
      %675 = vmatprep.subr.mxu0 0.0
      %676 = vmatpush1.msra.mxu0 0.0
      %677 = vmatprep.subr.mxu0 0.0
      %678 = vmatpush1.msra.mxu0 0.0
      %679 = vmatprep.subr.mxu0 0.0
      %680 = vmatpush1.msra.mxu0 0.0
      %681 = vmatprep.subr.mxu0 0.0
      %682 = vmatpush1.msra.mxu0 0.0
      %683 = vmatprep.subr.mxu0 0.0
      %684 = vmatpush1.msra.mxu0 0.0
      %685 = vmatprep.subr.mxu0 0.0
      %686 = vmatpush1.msra.mxu0 0.0
      %687 = vmatprep.subr.mxu0 0.0
      %688 = vmatpush1.msra.mxu0 0.0
      %689 = vmatprep.subr.mxu0 0.0
      %690 = vmatpush1.msra.mxu0 0.0
      %691 = vmatprep.subr.mxu0 0.0
      %692 = vmatpush1.msra.mxu0 0.0
      %693 = vmatprep.subr.mxu0 0.0
      %694 = vmatpush1.msra.mxu0 0.0
      %695 = vmatprep.subr.mxu0 0.0
      %696 = vmatpush1.msra.mxu0 0.0
      %697 = vmatprep.subr.mxu0 0.0
      %698 = vmatpush1.msra.mxu0 0.0
      %699 = vmatprep.subr.mxu0 0.0
      %700 = vmatpush1.msra.mxu0 0.0
      %701 = vmatprep.subr.mxu0 0.0
      %702 = vmatpush1.msra.mxu0 0.0
      %703 = vmatprep.subr.mxu0 0.0
      %704 = vmatpush1.msra.mxu0 0.0
      %705 = vmatprep.subr.mxu0 0.0
      %706 = vmatpush1.msra.mxu0 0.0
      %707 = vmatprep.subr.mxu0 0.0
      %708 = vmatpush1.msra.mxu0 0.0
      %709 = vmatprep.subr.mxu0 0.0
      %710 = vmatpush1.msra.mxu0 0.0
      %711 = vmatprep.subr.mxu0 0.0
      %712 = vmatpush1.msra.mxu0 0.0
      %713 = vmatprep.subr.mxu0 0.0
      %714 = vmatpush1.msra.mxu0 0.0
      %715 = vmatprep.subr.mxu0 0.0
      %716 = vmatpush1.msra.mxu0 0.0
      %717 = vmatprep.subr.mxu0 0.0
      %718 = vmatpush1.msra.mxu0 0.0
      %719 = vmatprep.subr.mxu0 0.0
      %720 = vmatpush1.msra.mxu0 0.0
      %721 = vmatprep.mubr.f32.mxu0 0.0
      %722 = vmatmul.mubr.f32.gmra.mrb[0].mxu0 %v653
      %v723 = vpop.f32.mrb[0].mxu0
      %v724 = vadd.f32 0.0, %v723
      %v725 = vpop.f32.mrb[0].mxu0
      %726 = vmatprep.mubr.f32.mxu0 0.0
      %727 = vmatmul.mubr.f32.gmra.mrb[0].mxu0 %v655
      %v728 = vpop.f32.mrb[0].mxu0
      %v729 = vadd.f32 0.0, %v728
      %v730 = vpop.f32.mrb[0].mxu0
      %731 = vdwg.mxu0
      %v732 = vadd.f32 %v640, %v724
      %v733 = vadd.f32 %v641, %v729
      %s734 = scalar_lea.vmem %s1, 160
      %v735 = vld [vmem:[%s734] sm:$0xff]
      %v736 = vld [vmem:[%s734 + $0x8] sm:$0xff]
      %v737 = vld [vmem:[%s734 + $0x10] sm:$0xff]
      %v738 = vld [vmem:[%s734 + $0x18] sm:$0xff]
      %v739 = vrot.slane %v280, 5
      %v740 = vrot.slane %v277, 5
      %v741 = vsel %vm274, %v739, %v740
      %v742 = vrot.slane %v281, 5
      %v743 = vsel %vm274, %v740, %v742
      %v744 = vsel %vm299, %v741, 0
      %v746 = vsel %vm299, %v743, 0
      %748 = vmatprep.subr.mxu0 0.0
      %749 = vmatpush1.msra.mxu0 %v735
      %750 = vmatprep.subr.mxu0 0.0
      %751 = vmatpush1.msra.mxu0 %v736
      %752 = vmatprep.subr.mxu0 0.0
      %753 = vmatpush1.msra.mxu0 %v737
      %754 = vmatprep.subr.mxu0 0.0
      %755 = vmatpush1.msra.mxu0 %v738
      %756 = vmatprep.subr.mxu0 0.0
      %757 = vmatpush1.msra.mxu0 0.0
      %758 = vmatprep.subr.mxu0 0.0
      %759 = vmatpush1.msra.mxu0 0.0
      %760 = vmatprep.subr.mxu0 0.0
      %761 = vmatpush1.msra.mxu0 0.0
      %762 = vmatprep.subr.mxu0 0.0
      %763 = vmatpush1.msra.mxu0 0.0
      %764 = vmatprep.subr.mxu0 0.0
      %765 = vmatpush1.msra.mxu0 0.0
      %766 = vmatprep.subr.mxu0 0.0
      %767 = vmatpush1.msra.mxu0 0.0
      %768 = vmatprep.subr.mxu0 0.0
      %769 = vmatpush1.msra.mxu0 0.0
      %770 = vmatprep.subr.mxu0 0.0
      %771 = vmatpush1.msra.mxu0 0.0
      %772 = vmatprep.subr.mxu0 0.0
      %773 = vmatpush1.msra.mxu0 0.0
      %774 = vmatprep.subr.mxu0 0.0
      %775 = vmatpush1.msra.mxu0 0.0
      %776 = vmatprep.subr.mxu0 0.0
      %777 = vmatpush1.msra.mxu0 0.0
      %778 = vmatprep.subr.mxu0 0.0
      %779 = vmatpush1.msra.mxu0 0.0
      %780 = vmatprep.subr.mxu0 0.0
      %781 = vmatpush1.msra.mxu0 0.0
      %782 = vmatprep.subr.mxu0 0.0
      %783 = vmatpush1.msra.mxu0 0.0
      %784 = vmatprep.subr.mxu0 0.0
      %785 = vmatpush1.msra.mxu0 0.0
      %786 = vmatprep.subr.mxu0 0.0
      %787 = vmatpush1.msra.mxu0 0.0
      %788 = vmatprep.subr.mxu0 0.0
      %789 = vmatpush1.msra.mxu0 0.0
      %790 = vmatprep.subr.mxu0 0.0
      %791 = vmatpush1.msra.mxu0 0.0
      %792 = vmatprep.subr.mxu0 0.0
      %793 = vmatpush1.msra.mxu0 0.0
      %794 = vmatprep.subr.mxu0 0.0
      %795 = vmatpush1.msra.mxu0 0.0
      %796 = vmatprep.subr.mxu0 0.0
      %797 = vmatpush1.msra.mxu0 0.0
      %798 = vmatprep.subr.mxu0 0.0
      %799 = vmatpush1.msra.mxu0 0.0
      %800 = vmatprep.subr.mxu0 0.0
      %801 = vmatpush1.msra.mxu0 0.0
      %802 = vmatprep.subr.mxu0 0.0
      %803 = vmatpush1.msra.mxu0 0.0
      %804 = vmatprep.subr.mxu0 0.0
      %805 = vmatpush1.msra.mxu0 0.0
      %806 = vmatprep.subr.mxu0 0.0
      %807 = vmatpush1.msra.mxu0 0.0
      %808 = vmatprep.subr.mxu0 0.0
      %809 = vmatpush1.msra.mxu0 0.0
      %810 = vmatprep.subr.mxu0 0.0
      %811 = vmatpush1.msra.mxu0 0.0
      %812 = vmatprep.mubr.f32.mxu0 0.0
      %813 = vmatmul.mubr.f32.gmra.mrb[0].mxu0 %v744
      %v814 = vpop.f32.mrb[0].mxu0
      %v815 = vadd.f32 0.0, %v814
      %v816 = vpop.f32.mrb[0].mxu0
      %817 = vmatprep.mubr.f32.mxu0 0.0
      %818 = vmatmul.mubr.f32.gmra.mrb[0].mxu0 %v746
      %v819 = vpop.f32.mrb[0].mxu0
      %v820 = vadd.f32 0.0, %v819
      %v821 = vpop.f32.mrb[0].mxu0
      %822 = vdwg.mxu0
      %v823 = vadd.f32 %v732, %v815
      %v824 = vadd.f32 %v733, %v820
      %s825 = scalar_lea.vmem %s1, 192
      %v826 = vld [vmem:[%s825] sm:$0xff]
      %v827 = vld [vmem:[%s825 + $0x8] sm:$0xff]
      %v828 = vld [vmem:[%s825 + $0x10] sm:$0xff]
      %v829 = vld [vmem:[%s825 + $0x18] sm:$0xff]
      %vm830 = vcmask 1041408
      %v831 = vrot.slane %v280, 6
      %v832 = vrot.slane %v277, 6
      %v833 = vsel %vm830, %v831, %v832
      %v834 = vrot.slane %v281, 6
      %v835 = vsel %vm830, %v832, %v834
      %v836 = vsel %vm299, %v833, 0
      %v838 = vsel %vm299, %v835, 0
      %840 = vmatprep.subr.mxu0 0.0
      %841 = vmatpush1.msra.mxu0 %v826
      %842 = vmatprep.subr.mxu0 0.0
      %843 = vmatpush1.msra.mxu0 %v827
      %844 = vmatprep.subr.mxu0 0.0
      %845 = vmatpush1.msra.mxu0 %v828
      %846 = vmatprep.subr.mxu0 0.0
      %847 = vmatpush1.msra.mxu0 %v829
      %848 = vmatprep.subr.mxu0 0.0
      %849 = vmatpush1.msra.mxu0 0.0
      %850 = vmatprep.subr.mxu0 0.0
      %851 = vmatpush1.msra.mxu0 0.0
      %852 = vmatprep.subr.mxu0 0.0
      %853 = vmatpush1.msra.mxu0 0.0
      %854 = vmatprep.subr.mxu0 0.0
      %855 = vmatpush1.msra.mxu0 0.0
      %856 = vmatprep.subr.mxu0 0.0
      %857 = vmatpush1.msra.mxu0 0.0
      %858 = vmatprep.subr.mxu0 0.0
      %859 = vmatpush1.msra.mxu0 0.0
      %860 = vmatprep.subr.mxu0 0.0
      %861 = vmatpush1.msra.mxu0 0.0
      %862 = vmatprep.subr.mxu0 0.0
      %863 = vmatpush1.msra.mxu0 0.0
      %864 = vmatprep.subr.mxu0 0.0
      %865 = vmatpush1.msra.mxu0 0.0
      %866 = vmatprep.subr.mxu0 0.0
      %867 = vmatpush1.msra.mxu0 0.0
      %868 = vmatprep.subr.mxu0 0.0
      %869 = vmatpush1.msra.mxu0 0.0
      %870 = vmatprep.subr.mxu0 0.0
      %871 = vmatpush1.msra.mxu0 0.0
      %872 = vmatprep.subr.mxu0 0.0
      %873 = vmatpush1.msra.mxu0 0.0
      %874 = vmatprep.subr.mxu0 0.0
      %875 = vmatpush1.msra.mxu0 0.0
      %876 = vmatprep.subr.mxu0 0.0
      %877 = vmatpush1.msra.mxu0 0.0
      %878 = vmatprep.subr.mxu0 0.0
      %879 = vmatpush1.msra.mxu0 0.0
      %880 = vmatprep.subr.mxu0 0.0
      %881 = vmatpush1.msra.mxu0 0.0
      %882 = vmatprep.subr.mxu0 0.0
      %883 = vmatpush1.msra.mxu0 0.0
      %884 = vmatprep.subr.mxu0 0.0
      %885 = vmatpush1.msra.mxu0 0.0
      %886 = vmatprep.subr.mxu0 0.0
      %887 = vmatpush1.msra.mxu0 0.0
      %888 = vmatprep.subr.mxu0 0.0
      %889 = vmatpush1.msra.mxu0 0.0
      %890 = vmatprep.subr.mxu0 0.0
      %891 = vmatpush1.msra.mxu0 0.0
      %892 = vmatprep.subr.mxu0 0.0
      %893 = vmatpush1.msra.mxu0 0.0
      %894 = vmatprep.subr.mxu0 0.0
      %895 = vmatpush1.msra.mxu0 0.0
      %896 = vmatprep.subr.mxu0 0.0
      %897 = vmatpush1.msra.mxu0 0.0
      %898 = vmatprep.subr.mxu0 0.0
      %899 = vmatpush1.msra.mxu0 0.0
      %900 = vmatprep.subr.mxu0 0.0
      %901 = vmatpush1.msra.mxu0 0.0
      %902 = vmatprep.subr.mxu0 0.0
      %903 = vmatpush1.msra.mxu0 0.0
      %904 = vmatprep.mubr.f32.mxu0 0.0
      %905 = vmatmul.mubr.f32.gmra.mrb[0].mxu0 %v836
      %v906 = vpop.f32.mrb[0].mxu0
      %v907 = vadd.f32 0.0, %v906
      %v908 = vpop.f32.mrb[0].mxu0
      %909 = vmatprep.mubr.f32.mxu0 0.0
      %910 = vmatmul.mubr.f32.gmra.mrb[0].mxu0 %v838
      %v911 = vpop.f32.mrb[0].mxu0
      %v912 = vadd.f32 0.0, %v911
      %v913 = vpop.f32.mrb[0].mxu0
      %914 = vdwg.mxu0
      %v915 = vadd.f32 %v823, %v907
      %v916 = vadd.f32 %v824, %v912
      %v917 = vld [vmem:[%s4] sm:$0x1]
      %v919 = vlaneseq
      %v920 = vshrl.u32 %v919, 7
      %v921 = vsub.s32 0, %v920
      %v922 = vrot.slane %v917, %v921
      %v924 = vmul.f32 %v915, %v922
      %v925 = vmul.f32 %v916, %v922
      %v926 = vld [vmem:[%s5] sm:$0x1]
      %v928 = vlaneseq
      %v929 = vshrl.u32 %v928, 7
      %v930 = vsub.s32 0, %v929
      %v931 = vrot.slane %v926, %v930
      %v933 = vadd.f32 %v924, %v931
      %v934 = vadd.f32 %v925, %v931
      %v935 = vsub.f32 0.0, %v933
      %v936 = vsub.f32 0.0, %v934
      %v937 = vmul.f32 %v935, 1.442695
      %v938 = vpow.pop %v937
      %v939 = vmul.f32 %v936, 1.442695
      %v940 = vpow.pop %v939
      %v941 = vadd.f32 %v938, 1.0
      %v942 = vadd.f32 %v940, 1.0
      %v943 = vrcp.pop %v941
      %v944 = vmul.f32 1.0, %v943
      %v945 = vrcp.pop %v942
      %v946 = vmul.f32 1.0, %v945
      %vm947 = vcmask 130048
      %948 = vst.msk [vmem:[%s251] sm:$0xff] %vm947, %v944
      %949 = vst.msk [vmem:[%s251 + $0x8] sm:$0xff] %vm947, %v946
      %p950 = scmp.lt.s32.totalorder %s17, 1
      %s951 = scalar_select %p950, %s17, 1
      %s952 = smul.addr %s951, 2
      %s953 = smul.addr %s952, 8
      %s954 = scalar_lea.vmem %s6, %s953
      // Predicated region
      $region45: #{_lambda_.13} parent=43 // pred_check
        %p955 = pneg %p166
      $region46: #{_lambda_.13} parent=43 // pred_check_branch
        %957 = sbr.rel (%p955) target = $region48
      $region47: #{_lambda_.13} parent=43 // pred_region
        _
      $region48: #{_lambda_.13} parent=43 // pred_fallthru
        _
    $region44: #{_lambda_.13} parent=5 // pred_fallthru
      _
    %p958 = scmp.le.s32.totalorder 2, %s12
    // Predicated region
    $region49: #{_lambda_.13} parent=5 // pred_check
      %p959 = pneg %p958
    $region50: #{_lambda_.13} parent=5 // pred_check_branch
      %961 = sbr.rel (%p959) target = $region52
    $region51: #{_lambda_.13} parent=5 // pred_region
      %s962 = ssub.s32 %s12, 2
      // Predicated region
      $region53: #{_lambda_.13} parent=51 // pred_check
        %p963 = pneg %p172
      $region54: #{_lambda_.13} parent=51 // pred_check_branch
        %965 = sbr.rel (%p963) target = $region56
      $region55: #{_lambda_.13} parent=51 // pred_region
        %p966 = scmp.lt.s32.totalorder %s18, 1
        %s967 = scalar_select %p966, %s18, 1
        %s968 = smul.addr %s967, 2
        %s969 = smul.addr %s968, 8
        %s970 = scalar_lea.vmem %s6, %s969
      $region56: #{_lambda_.13} parent=51 // pred_fallthru
        _
    $region52: #{_lambda_.13} parent=5 // pred_fallthru
      _
  $region6: #{_lambda_.13} parent=0 // loop_footer
    %s16 = sadd.s32 1, %s12
  $region7: #{_lambda_.13} parent=0 // loop_footer_branch
    %11 = sbr.rel target = $region3
  $region8: #{_lambda_.13} parent=0 // loop_exit
    _

// kernel: _lambda_.14
$region0: #{_lambda_.14}
  #allocation0 [shape = 'u32[]', space=smem, size = 0x4, offset = 0x4, fixed_abs, tag = 'smem constant byte address 0x4 - core index']
  #allocation1 [shape = 'u32[144,128]{1,0:T(1,128)}', space=vmem, size = 0x12000, scoped, tag = 'internal scratch']
  %s0 = inlined_call_operand.vmem [shape: f32[2,1,4], index: 0, kind: input, shape index: {}]
  %s1 = inlined_call_operand.vmem [shape: f32[1,4,2], index: 1, kind: input, shape index: {}]
  %s2 = inlined_call_operand.vmem [shape: f32[1,4], index: 2, kind: input, shape index: {}]
  %s3 = inlined_call_operand.vmem [shape: f32[1,4], index: 3, kind: input, shape index: {}]
  %s4 = inlined_call_operand.vmem [shape: f32[1,2], index: 4, kind: input, shape index: {}]
  %s5 = inlined_call_operand.vmem [shape: f32[1,2], index: 5, kind: input, shape index: {}]
  %s6 = inlined_call_operand.vmem [shape: f32[2,1,2], index: 6, kind: output, shape index: {}]
  %s7 = sld [smem:[#allocation0]]
  $region57: #{_lambda_.14} parent=0
    _
  %s9 = ssub.s32 1, %s7
  %s10 = scalar_select 0, %s9, %s7
  loop: start=0, step=1, limit=4
  $region2: #{_lambda_.14} parent=0 // loop_pre_header
    _
  $region3: #{_lambda_.14} parent=0 // loop_header
    %s12 = sphi 0, %s16
    %p13 = scmp.ge.s32.totalorder %s12, 4
    %s22 = sphi 0, %s24
    %s25 = sphi 0, %s22
    %s26 = sphi 0, %s25
    %s42 = sphi 0, %s26
    %s46 = sphi 0, %s46
    %s48 = sphi 0, %s46
    %s49 = sphi 0, %s48
    %s63 = sphi 0, %s49
    %s67 = sphi 0, %s67
    %s69 = sphi 0, %s67
    %s70 = sphi 0, %s69
    %s84 = sphi 0, %s70
    %s88 = sphi 0, %s88
    %s90 = sphi 0, %s88
    %s91 = sphi 0, %s90
    %s105 = sphi 0, %s91
    %s109 = sphi 0, %s109
    %s111 = sphi 0, %s109
    %s112 = sphi 0, %s111
    %s126 = sphi 0, %s112
    %s130 = sphi 0, %s130
    %s132 = sphi 0, %s130
    %s133 = sphi 0, %s132
    %s147 = sphi 0, %s133
    %s153 = sphi 0, %s155
    %s156 = sphi 0, %s153
    %s157 = sphi 0, %s156
    %s173 = sphi 0, %s157
  $region4: #{_lambda_.14} parent=0 // loop_header_branch
    %15 = sbr.rel (%p13) target = $region8
  $region5: #{_lambda_.14} parent=0 // loop_body
    %s17 = ssub.s32 %s12, 1
    %s18 = ssub.s32 %s12, 2
    %s19 = sadd.s32 %s12, 1
    %s20 = ssub.s32 %s12, %s19
    %p21 = scmp.eq.s32.totalorder %s20, 0
    %s23 = sadd.s32 %s22, 1
    %s24 = scalar_select %p21, %s22, %s23
    %p27 = pneg %p21
    %p28 = scmp.eq.s32.totalorder %s12, 1
    %p29 = por %p27, %p28
    %p30 = scmp.ne.s32.totalorder %s22, %s25
    %p31 = scmp.eq.s32.totalorder %s12, 0
    %p32 = por %p30, %p31
    %p33 = scmp.ne.s32.totalorder %s22, %s25
    %p34 = scmp.eq.s32.totalorder %s17, 1
    %p35 = por %p33, %p34
    %p36 = scmp.ne.s32.totalorder %s25, %s26
    %p37 = scmp.eq.s32.totalorder %s17, 0
    %p38 = por %p36, %p37
    %p39 = scmp.ne.s32.totalorder %s25, %s26
    %p40 = scmp.eq.s32.totalorder %s18, 1
    %p41 = por %p39, %p40
    %p43 = scmp.ne.s32.totalorder %s26, %s42
    %p44 = scmp.eq.s32.totalorder %s18, 0
    %p45 = por %p43, %p44
    %s47 = sadd.s32 %s46, 1
    %p50 = scmp.eq.s32.totalorder %s12, 1
    %p51 = scmp.ne.s32.totalorder %s46, %s48
    %p52 = scmp.eq.s32.totalorder %s12, 0
    %p53 = por %p51, %p52
    %p54 = scmp.ne.s32.totalorder %s46, %s48
    %p55 = scmp.eq.s32.totalorder %s17, 1
    %p56 = por %p54, %p55
    %p57 = scmp.ne.s32.totalorder %s48, %s49
    %p58 = scmp.eq.s32.totalorder %s17, 0
    %p59 = por %p57, %p58
    %p60 = scmp.ne.s32.totalorder %s48, %s49
    %p61 = scmp.eq.s32.totalorder %s18, 1
    %p62 = por %p60, %p61
    %p64 = scmp.ne.s32.totalorder %s49, %s63
    %p65 = scmp.eq.s32.totalorder %s18, 0
    %p66 = por %p64, %p65
    %s68 = sadd.s32 %s67, 1
    %p71 = scmp.eq.s32.totalorder %s12, 1
    %p72 = scmp.ne.s32.totalorder %s67, %s69
    %p73 = scmp.eq.s32.totalorder %s12, 0
    %p74 = por %p72, %p73
    %p75 = scmp.ne.s32.totalorder %s67, %s69
    %p76 = scmp.eq.s32.totalorder %s17, 1
    %p77 = por %p75, %p76
    %p78 = scmp.ne.s32.totalorder %s69, %s70
    %p79 = scmp.eq.s32.totalorder %s17, 0
    %p80 = por %p78, %p79
    %p81 = scmp.ne.s32.totalorder %s69, %s70
    %p82 = scmp.eq.s32.totalorder %s18, 1
    %p83 = por %p81, %p82
    %p85 = scmp.ne.s32.totalorder %s70, %s84
    %p86 = scmp.eq.s32.totalorder %s18, 0
    %p87 = por %p85, %p86
    %s89 = sadd.s32 %s88, 1
    %p92 = scmp.eq.s32.totalorder %s12, 1
    %p93 = scmp.ne.s32.totalorder %s88, %s90
    %p94 = scmp.eq.s32.totalorder %s12, 0
    %p95 = por %p93, %p94
    %p96 = scmp.ne.s32.totalorder %s88, %s90
    %p97 = scmp.eq.s32.totalorder %s17, 1
    %p98 = por %p96, %p97
    %p99 = scmp.ne.s32.totalorder %s90, %s91
    %p100 = scmp.eq.s32.totalorder %s17, 0
    %p101 = por %p99, %p100
    %p102 = scmp.ne.s32.totalorder %s90, %s91
    %p103 = scmp.eq.s32.totalorder %s18, 1
    %p104 = por %p102, %p103
    %p106 = scmp.ne.s32.totalorder %s91, %s105
    %p107 = scmp.eq.s32.totalorder %s18, 0
    %p108 = por %p106, %p107
    %s110 = sadd.s32 %s109, 1
    %p113 = scmp.eq.s32.totalorder %s12, 1
    %p114 = scmp.ne.s32.totalorder %s109, %s111
    %p115 = scmp.eq.s32.totalorder %s12, 0
    %p116 = por %p114, %p115
    %p117 = scmp.ne.s32.totalorder %s109, %s111
    %p118 = scmp.eq.s32.totalorder %s17, 1
    %p119 = por %p117, %p118
    %p120 = scmp.ne.s32.totalorder %s111, %s112
    %p121 = scmp.eq.s32.totalorder %s17, 0
    %p122 = por %p120, %p121
    %p123 = scmp.ne.s32.totalorder %s111, %s112
    %p124 = scmp.eq.s32.totalorder %s18, 1
    %p125 = por %p123, %p124
    %p127 = scmp.ne.s32.totalorder %s112, %s126
    %p128 = scmp.eq.s32.totalorder %s18, 0
    %p129 = por %p127, %p128
    %s131 = sadd.s32 %s130, 1
    %p134 = scmp.eq.s32.totalorder %s12, 1
    %p135 = scmp.ne.s32.totalorder %s130, %s132
    %p136 = scmp.eq.s32.totalorder %s12, 0
    %p137 = por %p135, %p136
    %p138 = scmp.ne.s32.totalorder %s130, %s132
    %p139 = scmp.eq.s32.totalorder %s17, 1
    %p140 = por %p138, %p139
    %p141 = scmp.ne.s32.totalorder %s132, %s133
    %p142 = scmp.eq.s32.totalorder %s17, 0
    %p143 = por %p141, %p142
    %p144 = scmp.ne.s32.totalorder %s132, %s133
    %p145 = scmp.eq.s32.totalorder %s18, 1
    %p146 = por %p144, %p145
    %p148 = scmp.ne.s32.totalorder %s133, %s147
    %p149 = scmp.eq.s32.totalorder %s18, 0
    %p150 = por %p148, %p149
    %s151 = ssub.s32 %s12, %s19
    %p152 = scmp.eq.s32.totalorder %s151, 0
    %s154 = sadd.s32 %s153, 1
    %s155 = scalar_select %p152, %s153, %s154
    %p158 = pneg %p152
    %p159 = scmp.eq.s32.totalorder %s12, 1
    %p160 = por %p158, %p159
    %p161 = scmp.ne.s32.totalorder %s153, %s156
    %p162 = scmp.eq.s32.totalorder %s12, 0
    %p163 = por %p161, %p162
    %p164 = scmp.ne.s32.totalorder %s153, %s156
    %p165 = scmp.eq.s32.totalorder %s17, 1
    %p166 = por %p164, %p165
    %p167 = scmp.ne.s32.totalorder %s156, %s157
    %p168 = scmp.eq.s32.totalorder %s17, 0
    %p169 = por %p167, %p168
    %p170 = scmp.ne.s32.totalorder %s156, %s157
    %p171 = scmp.eq.s32.totalorder %s18, 1
    %p172 = por %p170, %p171
    %p174 = scmp.ne.s32.totalorder %s157, %s173
    %p175 = scmp.eq.s32.totalorder %s18, 0
    %p176 = por %p174, %p175
    %p177 = scmp.le.s32.totalorder 1, %s12
    %p178 = scmp.lt.s32.totalorder %s12, 3
    %p179 = pnand %p177, %p178
    %p180 = pneg %p179
    // Predicated region
    $region9: #{_lambda_.14} parent=5 // pred_check
      _
    $region10: #{_lambda_.14} parent=5 // pred_check_branch
      %182 = sbr.rel (%p179) target = $region12
    $region11: #{_lambda_.14} parent=5 // pred_region
      %s183 = ssub.s32 %s12, 1
      // Predicated region
      $region13: #{_lambda_.14} parent=11 // pred_check
        %p184 = pneg %p59
      $region14: #{_lambda_.14} parent=11 // pred_check_branch
        %186 = sbr.rel (%p184) target = $region16
      $region15: #{_lambda_.14} parent=11 // pred_region
        _
      $region16: #{_lambda_.14} parent=11 // pred_fallthru
        _
      // Predicated region
      $region17: #{_lambda_.14} parent=11 // pred_check
        %p187 = pneg %p80
      $region18: #{_lambda_.14} parent=11 // pred_check_branch
        %189 = sbr.rel (%p187) target = $region20
      $region19: #{_lambda_.14} parent=11 // pred_region
        _
      $region20: #{_lambda_.14} parent=11 // pred_fallthru
        _
      // Predicated region
      $region21: #{_lambda_.14} parent=11 // pred_check
        %p190 = pneg %p101
      $region22: #{_lambda_.14} parent=11 // pred_check_branch
        %192 = sbr.rel (%p190) target = $region24
      $region23: #{_lambda_.14} parent=11 // pred_region
        _
      $region24: #{_lambda_.14} parent=11 // pred_fallthru
        _
      // Predicated region
      $region25: #{_lambda_.14} parent=11 // pred_check
        %p193 = pneg %p122
      $region26: #{_lambda_.14} parent=11 // pred_check_branch
        %195 = sbr.rel (%p193) target = $region28
      $region27: #{_lambda_.14} parent=11 // pred_region
        _
      $region28: #{_lambda_.14} parent=11 // pred_fallthru
        _
      // Predicated region
      $region29: #{_lambda_.14} parent=11 // pred_check
        %p196 = pneg %p143
      $region30: #{_lambda_.14} parent=11 // pred_check_branch
        %198 = sbr.rel (%p196) target = $region32
      $region31: #{_lambda_.14} parent=11 // pred_region
        _
      $region32: #{_lambda_.14} parent=11 // pred_fallthru
        _
    $region12: #{_lambda_.14} parent=5 // pred_fallthru
      _
    %p199 = scmp.lt.s32.totalorder %s12, 2
    // Predicated region
    $region33: #{_lambda_.14} parent=5 // pred_check
      %p200 = pneg %p199
    $region34: #{_lambda_.14} parent=5 // pred_check_branch
      %202 = sbr.rel (%p200) target = $region36
    $region35: #{_lambda_.14} parent=5 // pred_region
      // Predicated region
      $region37: #{_lambda_.14} parent=35 // pred_check
        %p203 = pneg %p32
      $region38: #{_lambda_.14} parent=35 // pred_check_branch
        %205 = sbr.rel (%p203) target = $region40
      $region39: #{_lambda_.14} parent=35 // pred_region
        %p206 = scmp.lt.s32.totalorder %s12, 1
        %s207 = scalar_select %p206, %s12, 1
        %s208 = scalar_lea.vmem %s0, %s207
      $region40: #{_lambda_.14} parent=35 // pred_fallthru
        _
    $region36: #{_lambda_.14} parent=5 // pred_fallthru
      _
    %p209 = scmp.le.s32.totalorder 1, %s12
    %p210 = scmp.lt.s32.totalorder %s12, 3
    %p211 = pnand %p209, %p210
    %p212 = pneg %p211
    // Predicated region
    $region41: #{_lambda_.14} parent=5 // pred_check
      _
    $region42: #{_lambda_.14} parent=5 // pred_check_branch
      %214 = sbr.rel (%p211) target = $region44
    $region43: #{_lambda_.14} parent=5 // pred_region
      %s215 = ssub.s32 %s12, 1
      %p216 = scmp.lt.s32.totalorder %s17, 1
      %s217 = scalar_select %p216, %s17, 1
      %s218 = scalar_lea.vmem %s0, %s217
      %p219 = pneg %p38
      %p220 = pneg %p35
      %p221 = pneg %p59
      %p222 = pneg %p56
      %p223 = pneg %p80
      %p224 = pneg %p77
      %p225 = pneg %p101
      %p226 = pneg %p98
      %p227 = pneg %p122
      %p228 = pneg %p119
      %p229 = pneg %p143
      %p230 = pneg %p140
      %p231 = pneg %p169
      %p232 = pneg %p166
      %p233 = scmp.lt.s32.totalorder %s17, 1
      %s234 = scalar_select %p233, %s17, 1
      %s235 = scalar_lea.vmem %s6, %s234
      %p236 = scmp.lt.s32.totalorder %s17, 1
      %s237 = scalar_select %p236, %s17, 1
      %s238 = scalar_lea.vmem %s0, %s237
      %p239 = scmp.lt.s32.totalorder %s17, 1
      %s240 = scalar_select %p239, %s17, 1
      %s241 = scalar_lea.vmem %s6, %s240
      %v242 = vld [vmem:[%s238] sm:$0x1]
      %v243 = vld [vmem:[%s2] sm:$0x1]
      %v244 = vmul.f32 %v242, %v243
      %v245 = vld [vmem:[%s3] sm:$0x1]
      %v246 = vadd.f32 %v244, %v245
      %v247 = vld [vmem:[%s1] sm:$0xf]
      %vm248 = vcmask 31744
      %v250 = vsel %vm248, %v246, 0
      %vm252 = vcmask 1043456
      %v254 = vsel %vm252, %v247, 0
      %256 = vmatprep.subr.mxu0 0.0
      %257 = vmatpush1.msra.mxu0 %v254
      %258 = vmatprep.subr.mxu0 0.0
      %259 = vmatpush1.msra.mxu0 0.0
      %260 = vmatprep.subr.mxu0 0.0
      %261 = vmatpush1.msra.mxu0 0.0
      %262 = vmatprep.subr.mxu0 0.0
      %263 = vmatpush1.msra.mxu0 0.0
      %264 = vmatprep.subr.mxu0 0.0
      %265 = vmatpush1.msra.mxu0 0.0
      %266 = vmatprep.subr.mxu0 0.0
      %267 = vmatpush1.msra.mxu0 0.0
      %268 = vmatprep.subr.mxu0 0.0
      %269 = vmatpush1.msra.mxu0 0.0
      %270 = vmatprep.subr.mxu0 0.0
      %271 = vmatpush1.msra.mxu0 0.0
      %272 = vmatprep.subr.mxu0 0.0
      %273 = vmatpush1.msra.mxu0 0.0
      %274 = vmatprep.subr.mxu0 0.0
      %275 = vmatpush1.msra.mxu0 0.0
      %276 = vmatprep.subr.mxu0 0.0
      %277 = vmatpush1.msra.mxu0 0.0
      %278 = vmatprep.subr.mxu0 0.0
      %279 = vmatpush1.msra.mxu0 0.0
      %280 = vmatprep.subr.mxu0 0.0
      %281 = vmatpush1.msra.mxu0 0.0
      %282 = vmatprep.subr.mxu0 0.0
      %283 = vmatpush1.msra.mxu0 0.0
      %284 = vmatprep.subr.mxu0 0.0
      %285 = vmatpush1.msra.mxu0 0.0
      %286 = vmatprep.subr.mxu0 0.0
      %287 = vmatpush1.msra.mxu0 0.0
      %288 = vmatprep.subr.mxu0 0.0
      %289 = vmatpush1.msra.mxu0 0.0
      %290 = vmatprep.subr.mxu0 0.0
      %291 = vmatpush1.msra.mxu0 0.0
      %292 = vmatprep.subr.mxu0 0.0
      %293 = vmatpush1.msra.mxu0 0.0
      %294 = vmatprep.subr.mxu0 0.0
      %295 = vmatpush1.msra.mxu0 0.0
      %296 = vmatprep.subr.mxu0 0.0
      %297 = vmatpush1.msra.mxu0 0.0
      %298 = vmatprep.subr.mxu0 0.0
      %299 = vmatpush1.msra.mxu0 0.0
      %300 = vmatprep.subr.mxu0 0.0
      %301 = vmatpush1.msra.mxu0 0.0
      %302 = vmatprep.subr.mxu0 0.0
      %303 = vmatpush1.msra.mxu0 0.0
      %304 = vmatprep.subr.mxu0 0.0
      %305 = vmatpush1.msra.mxu0 0.0
      %306 = vmatprep.subr.mxu0 0.0
      %307 = vmatpush1.msra.mxu0 0.0
      %308 = vmatprep.subr.mxu0 0.0
      %309 = vmatpush1.msra.mxu0 0.0
      %310 = vmatprep.subr.mxu0 0.0
      %311 = vmatpush1.msra.mxu0 0.0
      %312 = vmatprep.subr.mxu0 0.0
      %313 = vmatpush1.msra.mxu0 0.0
      %314 = vmatprep.subr.mxu0 0.0
      %315 = vmatpush1.msra.mxu0 0.0
      %316 = vmatprep.subr.mxu0 0.0
      %317 = vmatpush1.msra.mxu0 0.0
      %318 = vmatprep.subr.mxu0 0.0
      %319 = vmatpush1.msra.mxu0 0.0
      %320 = vmatprep.mubr.f32.mxu0 0.0
      %321 = vmatmul.mubr.f32.gmra.mrb[0].mxu0 %v250
      %v322 = vpop.f32.mrb[0].mxu0
      %v323 = vadd.f32 0.0, %v322
      %v324 = vpop.f32.mrb[0].mxu0
      %325 = vdwg.mxu0
      %v326 = vld [vmem:[%s4] sm:$0x1]
      %v327 = vmul.f32 %v323, %v326
      %v328 = vld [vmem:[%s5] sm:$0x1]
      %v329 = vadd.f32 %v327, %v328
      %v330 = vmax.f32 %v329, 0.0
      %vm331 = vcmask 8192
      %332 = vst.msk [vmem:[%s241] sm:$0x1] %vm331, %v330
      %p333 = scmp.lt.s32.totalorder %s17, 1
      %s334 = scalar_select %p333, %s17, 1
      %s335 = scalar_lea.vmem %s6, %s334
      // Predicated region
      $region45: #{_lambda_.14} parent=43 // pred_check
        %p336 = pneg %p166
      $region46: #{_lambda_.14} parent=43 // pred_check_branch
        %338 = sbr.rel (%p336) target = $region48
      $region47: #{_lambda_.14} parent=43 // pred_region
        _
      $region48: #{_lambda_.14} parent=43 // pred_fallthru
        _
    $region44: #{_lambda_.14} parent=5 // pred_fallthru
      _
    %p339 = scmp.le.s32.totalorder 2, %s12
    // Predicated region
    $region49: #{_lambda_.14} parent=5 // pred_check
      %p340 = pneg %p339
    $region50: #{_lambda_.14} parent=5 // pred_check_branch
      %342 = sbr.rel (%p340) target = $region52
    $region51: #{_lambda_.14} parent=5 // pred_region
      %s343 = ssub.s32 %s12, 2
      // Predicated region
      $region53: #{_lambda_.14} parent=51 // pred_check
        %p344 = pneg %p172
      $region54: #{_lambda_.14} parent=51 // pred_check_branch
        %346 = sbr.rel (%p344) target = $region56
      $region55: #{_lambda_.14} parent=51 // pred_region
        %p347 = scmp.lt.s32.totalorder %s18, 1
        %s348 = scalar_select %p347, %s18, 1
        %s349 = scalar_lea.vmem %s6, %s348
      $region56: #{_lambda_.14} parent=51 // pred_fallthru
        _
    $region52: #{_lambda_.14} parent=5 // pred_fallthru
      _
  $region6: #{_lambda_.14} parent=0 // loop_footer
    %s16 = sadd.s32 1, %s12
  $region7: #{_lambda_.14} parent=0 // loop_footer_branch
    %11 = sbr.rel target = $region3
  $region8: #{_lambda_.14} parent=0 // loop_exit
    _

// kernel: _lambda_.15
$region0: #{_lambda_.15}
  #allocation0 [shape = 'u32[]', space=smem, size = 0x4, offset = 0x4, fixed_abs, tag = 'smem constant byte address 0x4 - core index']
  #allocation1 [shape = 'u32[144,128]{1,0:T(1,128)}', space=vmem, size = 0x12000, scoped, tag = 'internal scratch']
  %s0 = inlined_call_operand.vmem [shape: f32[2,1,2], index: 0, kind: input, shape index: {}]
  %s1 = inlined_call_operand.vmem [shape: f32[1,2,4], index: 1, kind: input, shape index: {}]
  %s2 = inlined_call_operand.vmem [shape: f32[1,2], index: 2, kind: input, shape index: {}]
  %s3 = inlined_call_operand.vmem [shape: f32[1,2], index: 3, kind: input, shape index: {}]
  %s4 = inlined_call_operand.vmem [shape: f32[1,4], index: 4, kind: input, shape index: {}]
  %s5 = inlined_call_operand.vmem [shape: f32[1,4], index: 5, kind: input, shape index: {}]
  %s6 = inlined_call_operand.vmem [shape: f32[2,1,4], index: 6, kind: output, shape index: {}]
  %s7 = sld [smem:[#allocation0]]
  $region57: #{_lambda_.15} parent=0
    _
  %s9 = ssub.s32 1, %s7
  %s10 = scalar_select 0, %s9, %s7
  loop: start=0, step=1, limit=4
  $region2: #{_lambda_.15} parent=0 // loop_pre_header
    _
  $region3: #{_lambda_.15} parent=0 // loop_header
    %s12 = sphi 0, %s16
    %p13 = scmp.ge.s32.totalorder %s12, 4
    %s22 = sphi 0, %s24
    %s25 = sphi 0, %s22
    %s26 = sphi 0, %s25
    %s42 = sphi 0, %s26
    %s46 = sphi 0, %s46
    %s48 = sphi 0, %s46
    %s49 = sphi 0, %s48
    %s63 = sphi 0, %s49
    %s67 = sphi 0, %s67
    %s69 = sphi 0, %s67
    %s70 = sphi 0, %s69
    %s84 = sphi 0, %s70
    %s88 = sphi 0, %s88
    %s90 = sphi 0, %s88
    %s91 = sphi 0, %s90
    %s105 = sphi 0, %s91
    %s109 = sphi 0, %s109
    %s111 = sphi 0, %s109
    %s112 = sphi 0, %s111
    %s126 = sphi 0, %s112
    %s130 = sphi 0, %s130
    %s132 = sphi 0, %s130
    %s133 = sphi 0, %s132
    %s147 = sphi 0, %s133
    %s153 = sphi 0, %s155
    %s156 = sphi 0, %s153
    %s157 = sphi 0, %s156
    %s173 = sphi 0, %s157
  $region4: #{_lambda_.15} parent=0 // loop_header_branch
    %15 = sbr.rel (%p13) target = $region8
  $region5: #{_lambda_.15} parent=0 // loop_body
    %s17 = ssub.s32 %s12, 1
    %s18 = ssub.s32 %s12, 2
    %s19 = sadd.s32 %s12, 1
    %s20 = ssub.s32 %s12, %s19
    %p21 = scmp.eq.s32.totalorder %s20, 0
    %s23 = sadd.s32 %s22, 1
    %s24 = scalar_select %p21, %s22, %s23
    %p27 = pneg %p21
    %p28 = scmp.eq.s32.totalorder %s12, 1
    %p29 = por %p27, %p28
    %p30 = scmp.ne.s32.totalorder %s22, %s25
    %p31 = scmp.eq.s32.totalorder %s12, 0
    %p32 = por %p30, %p31
    %p33 = scmp.ne.s32.totalorder %s22, %s25
    %p34 = scmp.eq.s32.totalorder %s17, 1
    %p35 = por %p33, %p34
    %p36 = scmp.ne.s32.totalorder %s25, %s26
    %p37 = scmp.eq.s32.totalorder %s17, 0
    %p38 = por %p36, %p37
    %p39 = scmp.ne.s32.totalorder %s25, %s26
    %p40 = scmp.eq.s32.totalorder %s18, 1
    %p41 = por %p39, %p40
    %p43 = scmp.ne.s32.totalorder %s26, %s42
    %p44 = scmp.eq.s32.totalorder %s18, 0
    %p45 = por %p43, %p44
    %s47 = sadd.s32 %s46, 1
    %p50 = scmp.eq.s32.totalorder %s12, 1
    %p51 = scmp.ne.s32.totalorder %s46, %s48
    %p52 = scmp.eq.s32.totalorder %s12, 0
    %p53 = por %p51, %p52
    %p54 = scmp.ne.s32.totalorder %s46, %s48
    %p55 = scmp.eq.s32.totalorder %s17, 1
    %p56 = por %p54, %p55
    %p57 = scmp.ne.s32.totalorder %s48, %s49
    %p58 = scmp.eq.s32.totalorder %s17, 0
    %p59 = por %p57, %p58
    %p60 = scmp.ne.s32.totalorder %s48, %s49
    %p61 = scmp.eq.s32.totalorder %s18, 1
    %p62 = por %p60, %p61
    %p64 = scmp.ne.s32.totalorder %s49, %s63
    %p65 = scmp.eq.s32.totalorder %s18, 0
    %p66 = por %p64, %p65
    %s68 = sadd.s32 %s67, 1
    %p71 = scmp.eq.s32.totalorder %s12, 1
    %p72 = scmp.ne.s32.totalorder %s67, %s69
    %p73 = scmp.eq.s32.totalorder %s12, 0
    %p74 = por %p72, %p73
    %p75 = scmp.ne.s32.totalorder %s67, %s69
    %p76 = scmp.eq.s32.totalorder %s17, 1
    %p77 = por %p75, %p76
    %p78 = scmp.ne.s32.totalorder %s69, %s70
    %p79 = scmp.eq.s32.totalorder %s17, 0
    %p80 = por %p78, %p79
    %p81 = scmp.ne.s32.totalorder %s69, %s70
    %p82 = scmp.eq.s32.totalorder %s18, 1
    %p83 = por %p81, %p82
    %p85 = scmp.ne.s32.totalorder %s70, %s84
    %p86 = scmp.eq.s32.totalorder %s18, 0
    %p87 = por %p85, %p86
    %s89 = sadd.s32 %s88, 1
    %p92 = scmp.eq.s32.totalorder %s12, 1
    %p93 = scmp.ne.s32.totalorder %s88, %s90
    %p94 = scmp.eq.s32.totalorder %s12, 0
    %p95 = por %p93, %p94
    %p96 = scmp.ne.s32.totalorder %s88, %s90
    %p97 = scmp.eq.s32.totalorder %s17, 1
    %p98 = por %p96, %p97
    %p99 = scmp.ne.s32.totalorder %s90, %s91
    %p100 = scmp.eq.s32.totalorder %s17, 0
    %p101 = por %p99, %p100
    %p102 = scmp.ne.s32.totalorder %s90, %s91
    %p103 = scmp.eq.s32.totalorder %s18, 1
    %p104 = por %p102, %p103
    %p106 = scmp.ne.s32.totalorder %s91, %s105
    %p107 = scmp.eq.s32.totalorder %s18, 0
    %p108 = por %p106, %p107
    %s110 = sadd.s32 %s109, 1
    %p113 = scmp.eq.s32.totalorder %s12, 1
    %p114 = scmp.ne.s32.totalorder %s109, %s111
    %p115 = scmp.eq.s32.totalorder %s12, 0
    %p116 = por %p114, %p115
    %p117 = scmp.ne.s32.totalorder %s109, %s111
    %p118 = scmp.eq.s32.totalorder %s17, 1
    %p119 = por %p117, %p118
    %p120 = scmp.ne.s32.totalorder %s111, %s112
    %p121 = scmp.eq.s32.totalorder %s17, 0
    %p122 = por %p120, %p121
    %p123 = scmp.ne.s32.totalorder %s111, %s112
    %p124 = scmp.eq.s32.totalorder %s18, 1
    %p125 = por %p123, %p124
    %p127 = scmp.ne.s32.totalorder %s112, %s126
    %p128 = scmp.eq.s32.totalorder %s18, 0
    %p129 = por %p127, %p128
    %s131 = sadd.s32 %s130, 1
    %p134 = scmp.eq.s32.totalorder %s12, 1
    %p135 = scmp.ne.s32.totalorder %s130, %s132
    %p136 = scmp.eq.s32.totalorder %s12, 0
    %p137 = por %p135, %p136
    %p138 = scmp.ne.s32.totalorder %s130, %s132
    %p139 = scmp.eq.s32.totalorder %s17, 1
    %p140 = por %p138, %p139
    %p141 = scmp.ne.s32.totalorder %s132, %s133
    %p142 = scmp.eq.s32.totalorder %s17, 0
    %p143 = por %p141, %p142
    %p144 = scmp.ne.s32.totalorder %s132, %s133
    %p145 = scmp.eq.s32.totalorder %s18, 1
    %p146 = por %p144, %p145
    %p148 = scmp.ne.s32.totalorder %s133, %s147
    %p149 = scmp.eq.s32.totalorder %s18, 0
    %p150 = por %p148, %p149
    %s151 = ssub.s32 %s12, %s19
    %p152 = scmp.eq.s32.totalorder %s151, 0
    %s154 = sadd.s32 %s153, 1
    %s155 = scalar_select %p152, %s153, %s154
    %p158 = pneg %p152
    %p159 = scmp.eq.s32.totalorder %s12, 1
    %p160 = por %p158, %p159
    %p161 = scmp.ne.s32.totalorder %s153, %s156
    %p162 = scmp.eq.s32.totalorder %s12, 0
    %p163 = por %p161, %p162
    %p164 = scmp.ne.s32.totalorder %s153, %s156
    %p165 = scmp.eq.s32.totalorder %s17, 1
    %p166 = por %p164, %p165
    %p167 = scmp.ne.s32.totalorder %s156, %s157
    %p168 = scmp.eq.s32.totalorder %s17, 0
    %p169 = por %p167, %p168
    %p170 = scmp.ne.s32.totalorder %s156, %s157
    %p171 = scmp.eq.s32.totalorder %s18, 1
    %p172 = por %p170, %p171
    %p174 = scmp.ne.s32.totalorder %s157, %s173
    %p175 = scmp.eq.s32.totalorder %s18, 0
    %p176 = por %p174, %p175
    %p177 = scmp.le.s32.totalorder 1, %s12
    %p178 = scmp.lt.s32.totalorder %s12, 3
    %p179 = pnand %p177, %p178
    %p180 = pneg %p179
    // Predicated region
    $region9: #{_lambda_.15} parent=5 // pred_check
      _
    $region10: #{_lambda_.15} parent=5 // pred_check_branch
      %182 = sbr.rel (%p179) target = $region12
    $region11: #{_lambda_.15} parent=5 // pred_region
      %s183 = ssub.s32 %s12, 1
      // Predicated region
      $region13: #{_lambda_.15} parent=11 // pred_check
        %p184 = pneg %p59
      $region14: #{_lambda_.15} parent=11 // pred_check_branch
        %186 = sbr.rel (%p184) target = $region16
      $region15: #{_lambda_.15} parent=11 // pred_region
        _
      $region16: #{_lambda_.15} parent=11 // pred_fallthru
        _
      // Predicated region
      $region17: #{_lambda_.15} parent=11 // pred_check
        %p187 = pneg %p80
      $region18: #{_lambda_.15} parent=11 // pred_check_branch
        %189 = sbr.rel (%p187) target = $region20
      $region19: #{_lambda_.15} parent=11 // pred_region
        _
      $region20: #{_lambda_.15} parent=11 // pred_fallthru
        _
      // Predicated region
      $region21: #{_lambda_.15} parent=11 // pred_check
        %p190 = pneg %p101
      $region22: #{_lambda_.15} parent=11 // pred_check_branch
        %192 = sbr.rel (%p190) target = $region24
      $region23: #{_lambda_.15} parent=11 // pred_region
        _
      $region24: #{_lambda_.15} parent=11 // pred_fallthru
        _
      // Predicated region
      $region25: #{_lambda_.15} parent=11 // pred_check
        %p193 = pneg %p122
      $region26: #{_lambda_.15} parent=11 // pred_check_branch
        %195 = sbr.rel (%p193) target = $region28
      $region27: #{_lambda_.15} parent=11 // pred_region
        _
      $region28: #{_lambda_.15} parent=11 // pred_fallthru
        _
      // Predicated region
      $region29: #{_lambda_.15} parent=11 // pred_check
        %p196 = pneg %p143
      $region30: #{_lambda_.15} parent=11 // pred_check_branch
        %198 = sbr.rel (%p196) target = $region32
      $region31: #{_lambda_.15} parent=11 // pred_region
        _
      $region32: #{_lambda_.15} parent=11 // pred_fallthru
        _
    $region12: #{_lambda_.15} parent=5 // pred_fallthru
      _
    %p199 = scmp.lt.s32.totalorder %s12, 2
    // Predicated region
    $region33: #{_lambda_.15} parent=5 // pred_check
      %p200 = pneg %p199
    $region34: #{_lambda_.15} parent=5 // pred_check_branch
      %202 = sbr.rel (%p200) target = $region36
    $region35: #{_lambda_.15} parent=5 // pred_region
      // Predicated region
      $region37: #{_lambda_.15} parent=35 // pred_check
        %p203 = pneg %p32
      $region38: #{_lambda_.15} parent=35 // pred_check_branch
        %205 = sbr.rel (%p203) target = $region40
      $region39: #{_lambda_.15} parent=35 // pred_region
        %p206 = scmp.lt.s32.totalorder %s12, 1
        %s207 = scalar_select %p206, %s12, 1
        %s208 = scalar_lea.vmem %s0, %s207
      $region40: #{_lambda_.15} parent=35 // pred_fallthru
        _
    $region36: #{_lambda_.15} parent=5 // pred_fallthru
      _
    %p209 = scmp.le.s32.totalorder 1, %s12
    %p210 = scmp.lt.s32.totalorder %s12, 3
    %p211 = pnand %p209, %p210
    %p212 = pneg %p211
    // Predicated region
    $region41: #{_lambda_.15} parent=5 // pred_check
      _
    $region42: #{_lambda_.15} parent=5 // pred_check_branch
      %214 = sbr.rel (%p211) target = $region44
    $region43: #{_lambda_.15} parent=5 // pred_region
      %s215 = ssub.s32 %s12, 1
      %p216 = scmp.lt.s32.totalorder %s17, 1
      %s217 = scalar_select %p216, %s17, 1
      %s218 = scalar_lea.vmem %s0, %s217
      %p219 = pneg %p38
      %p220 = pneg %p35
      %p221 = pneg %p59
      %p222 = pneg %p56
      %p223 = pneg %p80
      %p224 = pneg %p77
      %p225 = pneg %p101
      %p226 = pneg %p98
      %p227 = pneg %p122
      %p228 = pneg %p119
      %p229 = pneg %p143
      %p230 = pneg %p140
      %p231 = pneg %p169
      %p232 = pneg %p166
      %p233 = scmp.lt.s32.totalorder %s17, 1
      %s234 = scalar_select %p233, %s17, 1
      %s235 = scalar_lea.vmem %s6, %s234
      %p236 = scmp.lt.s32.totalorder %s17, 1
      %s237 = scalar_select %p236, %s17, 1
      %s238 = scalar_lea.vmem %s0, %s237
      %p239 = scmp.lt.s32.totalorder %s17, 1
      %s240 = scalar_select %p239, %s17, 1
      %s241 = scalar_lea.vmem %s6, %s240
      %v242 = vld [vmem:[%s238] sm:$0x1]
      %v243 = vld [vmem:[%s2] sm:$0x1]
      %v244 = vmul.f32 %v242, %v243
      %v245 = vld [vmem:[%s3] sm:$0x1]
      %v246 = vadd.f32 %v244, %v245
      %v247 = vld [vmem:[%s1] sm:$0x3]
      %vm248 = vcmask 15360
      %v250 = vsel %vm248, %v246, 0
      %vm252 = vcmask 1041408
      %v254 = vsel %vm252, %v247, 0
      %256 = vmatprep.subr.mxu0 0.0
      %257 = vmatpush1.msra.mxu0 %v254
      %258 = vmatprep.subr.mxu0 0.0
      %259 = vmatpush1.msra.mxu0 0.0
      %260 = vmatprep.subr.mxu0 0.0
      %261 = vmatpush1.msra.mxu0 0.0
      %262 = vmatprep.subr.mxu0 0.0
      %263 = vmatpush1.msra.mxu0 0.0
      %264 = vmatprep.subr.mxu0 0.0
      %265 = vmatpush1.msra.mxu0 0.0
      %266 = vmatprep.subr.mxu0 0.0
      %267 = vmatpush1.msra.mxu0 0.0
      %268 = vmatprep.subr.mxu0 0.0
      %269 = vmatpush1.msra.mxu0 0.0
      %270 = vmatprep.subr.mxu0 0.0
      %271 = vmatpush1.msra.mxu0 0.0
      %272 = vmatprep.subr.mxu0 0.0
      %273 = vmatpush1.msra.mxu0 0.0
      %274 = vmatprep.subr.mxu0 0.0
      %275 = vmatpush1.msra.mxu0 0.0
      %276 = vmatprep.subr.mxu0 0.0
      %277 = vmatpush1.msra.mxu0 0.0
      %278 = vmatprep.subr.mxu0 0.0
      %279 = vmatpush1.msra.mxu0 0.0
      %280 = vmatprep.subr.mxu0 0.0
      %281 = vmatpush1.msra.mxu0 0.0
      %282 = vmatprep.subr.mxu0 0.0
      %283 = vmatpush1.msra.mxu0 0.0
      %284 = vmatprep.subr.mxu0 0.0
      %285 = vmatpush1.msra.mxu0 0.0
      %286 = vmatprep.subr.mxu0 0.0
      %287 = vmatpush1.msra.mxu0 0.0
      %288 = vmatprep.subr.mxu0 0.0
      %289 = vmatpush1.msra.mxu0 0.0
      %290 = vmatprep.subr.mxu0 0.0
      %291 = vmatpush1.msra.mxu0 0.0
      %292 = vmatprep.subr.mxu0 0.0
      %293 = vmatpush1.msra.mxu0 0.0
      %294 = vmatprep.subr.mxu0 0.0
      %295 = vmatpush1.msra.mxu0 0.0
      %296 = vmatprep.subr.mxu0 0.0
      %297 = vmatpush1.msra.mxu0 0.0
      %298 = vmatprep.subr.mxu0 0.0
      %299 = vmatpush1.msra.mxu0 0.0
      %300 = vmatprep.subr.mxu0 0.0
      %301 = vmatpush1.msra.mxu0 0.0
      %302 = vmatprep.subr.mxu0 0.0
      %303 = vmatpush1.msra.mxu0 0.0
      %304 = vmatprep.subr.mxu0 0.0
      %305 = vmatpush1.msra.mxu0 0.0
      %306 = vmatprep.subr.mxu0 0.0
      %307 = vmatpush1.msra.mxu0 0.0
      %308 = vmatprep.subr.mxu0 0.0
      %309 = vmatpush1.msra.mxu0 0.0
      %310 = vmatprep.subr.mxu0 0.0
      %311 = vmatpush1.msra.mxu0 0.0
      %312 = vmatprep.subr.mxu0 0.0
      %313 = vmatpush1.msra.mxu0 0.0
      %314 = vmatprep.subr.mxu0 0.0
      %315 = vmatpush1.msra.mxu0 0.0
      %316 = vmatprep.subr.mxu0 0.0
      %317 = vmatpush1.msra.mxu0 0.0
      %318 = vmatprep.subr.mxu0 0.0
      %319 = vmatpush1.msra.mxu0 0.0
      %320 = vmatprep.mubr.f32.mxu0 0.0
      %321 = vmatmul.mubr.f32.gmra.mrb[0].mxu0 %v250
      %v322 = vpop.f32.mrb[0].mxu0
      %v323 = vadd.f32 0.0, %v322
      %v324 = vpop.f32.mrb[0].mxu0
      %325 = vdwg.mxu0
      %v326 = vld [vmem:[%s4] sm:$0x1]
      %v327 = vmul.f32 %v323, %v326
      %v328 = vld [vmem:[%s5] sm:$0x1]
      %v329 = vadd.f32 %v327, %v328
      %v330 = vsub.f32 0.0, %v329
      %v331 = vmul.f32 %v330, 1.442695
      %v332 = vpow.pop %v331
      %v333 = vadd.f32 %v332, 1.0
      %v334 = vrcp.pop %v333
      %v335 = vmul.f32 1.0, %v334
      %vm336 = vcmask 24576
      %337 = vst.msk [vmem:[%s241] sm:$0x1] %vm336, %v335
      %p338 = scmp.lt.s32.totalorder %s17, 1
      %s339 = scalar_select %p338, %s17, 1
      %s340 = scalar_lea.vmem %s6, %s339
      // Predicated region
      $region45: #{_lambda_.15} parent=43 // pred_check
        %p341 = pneg %p166
      $region46: #{_lambda_.15} parent=43 // pred_check_branch
        %343 = sbr.rel (%p341) target = $region48
      $region47: #{_lambda_.15} parent=43 // pred_region
        _
      $region48: #{_lambda_.15} parent=43 // pred_fallthru
        _
    $region44: #{_lambda_.15} parent=5 // pred_fallthru
      _
    %p344 = scmp.le.s32.totalorder 2, %s12
    // Predicated region
    $region49: #{_lambda_.15} parent=5 // pred_check
      %p345 = pneg %p344
    $region50: #{_lambda_.15} parent=5 // pred_check_branch
      %347 = sbr.rel (%p345) target = $region52
    $region51: #{_lambda_.15} parent=5 // pred_region
      %s348 = ssub.s32 %s12, 2
      // Predicated region
      $region53: #{_lambda_.15} parent=51 // pred_check
        %p349 = pneg %p172
      $region54: #{_lambda_.15} parent=51 // pred_check_branch
        %351 = sbr.rel (%p349) target = $region56
      $region55: #{_lambda_.15} parent=51 // pred_region
        %p352 = scmp.lt.s32.totalorder %s18, 1
        %s353 = scalar_select %p352, %s18, 1
        %s354 = scalar_lea.vmem %s6, %s353
      $region56: #{_lambda_.15} parent=51 // pred_fallthru
        _
    $region52: #{_lambda_.15} parent=5 // pred_fallthru
      _
  $region6: #{_lambda_.15} parent=0 // loop_footer
    %s16 = sadd.s32 1, %s12
  $region7: #{_lambda_.15} parent=0 // loop_footer_branch
    %11 = sbr.rel target = $region3
  $region8: #{_lambda_.15} parent=0 // loop_exit
    _

// kernel: tile.102
$region0: #{tile.102}
  #allocation0 [shape = 's32[1]{0}', space=sflag, size = 0x4, scoped, tag = 'scoped memory for tile.102']
  %s0 = inlined_call_operand.vmem [shape: f32[12], index: 0, kind: input, shape index: {}]
  %s1 = inlined_call_operand.vmem [shape: f32[16,12], index: 1, kind: output, shape index: {}]
  // Predicated region
  $region2: #{tile.102} parent=0 // pred_check
    _
  $region3: #{tile.102} parent=0 // pred_check_branch
    %3 = sbr.rel (0) target = $region5
  $region4: #{tile.102} parent=0 // pred_region
    _
  $region5: #{tile.102} parent=0 // pred_fallthru
    _
  %v4 = vld [vmem:[%s0] ss:$0 sm:$0xff]
  %5 = vst [vmem:[%s1] sm:$0xff] %v4
  %s6 = scalar_lea.vmem %s1, 8
  %7 = vst [vmem:[%s6] sm:$0xff] %v4

// kernel: tile.103
$region0: #{tile.103}
  %s0 = inlined_call_operand.vmem [shape: f32[16,12], index: 0, kind: input, shape index: {}]
  %s1 = inlined_call_operand.vmem [shape: f32[1,192], index: 1, kind: output, shape index: {}]
  $region1: #{tile.103} parent=0
    #allocation0 [shape = 'u8[8192]{0}', space=vmem, size = 0x2000, scoped, tag = 'scoped mem for output reshape']
    %v2 = vld [vmem:[%s0] sm:$0x1]
    %vm3 = vcmask 97280
    %4 = vst.msk [vmem:[#allocation0] sm:$0x1] %vm3, %v2
    %s5 = scalar_lea.vmem %s0, 10
    %v6 = vld [vmem:[%s5] sm:$0x1]
    %s7 = scalar_lea.vmem %s0, 10
    %v8 = vld [vmem:[%s7] sm:$0x1]
    %vm9 = vcmask 64512
    %v10 = vsel %vm9, %v8, %v6
    %11 = vrot.lane.b32.xlu0 %v10, 120
    %v12 = vpop.permute.xlu0 %11
    %vm13 = vcmask 31744
    %s14 = scalar_lea.vmem [#allocation0], 8
    %15 = vst.msk [vmem:[%s14] sm:$0x1] %vm13, %v12
    %vm16 = vcmask 1048512
    %17 = vst.msk [vmem:[#allocation0] sm:$0x1] %vm16, %v12
    %s18 = scalar_lea.vmem %s0, 9
    %v19 = vld [vmem:[%s18] sm:$0x1]
    %20 = vrot.lane.b32.xlu0 %v19, 108
    %v21 = vpop.permute.xlu0 %20
    %vm22 = vcmask 982880
    %23 = vst.msk [vmem:[#allocation0] sm:$0x1] %vm22, %v21
    %s24 = scalar_lea.vmem %s0, 8
    %v25 = vld [vmem:[%s24] sm:$0x1]
    %26 = vrot.lane.b32.xlu0 %v25, 96
    %v27 = vpop.permute.xlu0 %26
    %vm28 = vcmask 884480
    %29 = vst.msk [vmem:[#allocation0] sm:$0x1] %vm28, %v27
    %s30 = scalar_lea.vmem %s0, 7
    %v31 = vld [vmem:[%s30] sm:$0x1]
    %32 = vrot.lane.b32.xlu0 %v31, 84
    %v33 = vpop.permute.xlu0 %32
    %vm34 = vcmask 786080
    %35 = vst.msk [vmem:[#allocation0] sm:$0x1] %vm34, %v33
    %s36 = scalar_lea.vmem %s0, 6
    %v37 = vld [vmem:[%s36] sm:$0x1]
    %38 = vrot.lane.b32.xlu0 %v37, 72
    %v39 = vpop.permute.xlu0 %38
    %vm40 = vcmask 687680
    %41 = vst.msk [vmem:[#allocation0] sm:$0x1] %vm40, %v39
    %s42 = scalar_lea.vmem %s0, 5
    %v43 = vld [vmem:[%s42] sm:$0x1]
    %44 = vrot.lane.b32.xlu0 %v43, 60
    %v45 = vpop.permute.xlu0 %44
    %vm46 = vcmask 589280
    %47 = vst.msk [vmem:[#allocation0] sm:$0x1] %vm46, %v45
    %s48 = scalar_lea.vmem %s0, 15
    %v49 = vld [vmem:[%s48] sm:$0x1]
    %50 = vrot.lane.b32.xlu0 %v49, 52
    %v51 = vpop.permute.xlu0 %50
    %vm52 = vcmask 523680
    %s53 = scalar_lea.vmem [#allocation0], 8
    %54 = vst.msk [vmem:[%s53] sm:$0x1] %vm52, %v51
    %s55 = scalar_lea.vmem %s0, 4
    %v56 = vld [vmem:[%s55] sm:$0x1]
    %57 = vrot.lane.b32.xlu0 %v56, 48
    %v58 = vpop.permute.xlu0 %57
    %vm59 = vcmask 490880
    %60 = vst.msk [vmem:[#allocation0] sm:$0x1] %vm59, %v58
    %s61 = scalar_lea.vmem %s0, 14
    %v62 = vld [vmem:[%s61] sm:$0x1]
    %63 = vrot.lane.b32.xlu0 %v62, 40
    %v64 = vpop.permute.xlu0 %63
    %vm65 = vcmask 425280
    %s66 = scalar_lea.vmem [#allocation0], 8
    %67 = vst.msk [vmem:[%s66] sm:$0x1] %vm65, %v64
    %s68 = scalar_lea.vmem %s0, 3
    %v69 = vld [vmem:[%s68] sm:$0x1]
    %70 = vrot.lane.b32.xlu0 %v69, 36
    %v71 = vpop.permute.xlu0 %70
    %vm72 = vcmask 392480
    %73 = vst.msk [vmem:[#allocation0] sm:$0x1] %vm72, %v71
    %s74 = scalar_lea.vmem %s0, 13
    %v75 = vld [vmem:[%s74] sm:$0x1]
    %76 = vrot.lane.b32.xlu0 %v75, 28
    %v77 = vpop.permute.xlu0 %76
    %vm78 = vcmask 326880
    %s79 = scalar_lea.vmem [#allocation0], 8
    %80 = vst.msk [vmem:[%s79] sm:$0x1] %vm78, %v77
    %s81 = scalar_lea.vmem %s0, 2
    %v82 = vld [vmem:[%s81] sm:$0x1]
    %83 = vrot.lane.b32.xlu0 %v82, 24
    %v84 = vpop.permute.xlu0 %83
    %vm85 = vcmask 294080
    %86 = vst.msk [vmem:[#allocation0] sm:$0x1] %vm85, %v84
    %s87 = scalar_lea.vmem %s0, 12
    %v88 = vld [vmem:[%s87] sm:$0x1]
    %89 = vrot.lane.b32.xlu0 %v88, 16
    %v90 = vpop.permute.xlu0 %89
    %vm91 = vcmask 228480
    %s92 = scalar_lea.vmem [#allocation0], 8
    %93 = vst.msk [vmem:[%s92] sm:$0x1] %vm91, %v90
    %s94 = scalar_lea.vmem %s0, 1
    %v95 = vld [vmem:[%s94] sm:$0x1]
    %96 = vrot.lane.b32.xlu0 %v95, 12
    %v97 = vpop.permute.xlu0 %96
    %vm98 = vcmask 195680
    %99 = vst.msk [vmem:[#allocation0] sm:$0x1] %vm98, %v97
    %s100 = scalar_lea.vmem %s0, 11
    %v101 = vld [vmem:[%s100] sm:$0x1]
    %102 = vrot.lane.b32.xlu0 %v101, 4
    %v103 = vpop.permute.xlu0 %102
    %vm104 = vcmask 130080
    %s105 = scalar_lea.vmem [#allocation0], 8
    %106 = vst.msk [vmem:[%s105] sm:$0x1] %vm104, %v103
    %s108 = sshllo.u32 0, 1
    %v110 = vld [vmem:[#allocation0] sm:%s108]
    %s111 = sshllo.u32 0, 1
    %112 = vst [vmem:[%s1] sm:%s111] %v110
    %s113 = scalar_lea.vmem [#allocation0], 8
    %v114 = vld [vmem:[%s113] sm:%s108]
    %s115 = sshllo.u32 0, 1
    %s116 = scalar_lea.vmem %s1, 1
    %117 = vst [vmem:[%s116] sm:%s115] %v114

// kernel: _lambda_.17
$region0: #{_lambda_.17}
  #allocation0 [shape = 'u32[]', space=smem, size = 0x4, offset = 0x4, fixed_abs, tag = 'smem constant byte address 0x4 - core index']
  #allocation1 [shape = 'u32[144,128]{1,0:T(1,128)}', space=vmem, size = 0x12000, scoped, tag = 'internal scratch']
  %s0 = inlined_call_operand.vmem [shape: f32[2,16,192], index: 0, kind: input, shape index: {}]
  %s1 = inlined_call_operand.vmem [shape: f32[1,192,64], index: 1, kind: input, shape index: {}]
  %s2 = inlined_call_operand.vmem [shape: f32[1,192], index: 2, kind: input, shape index: {}]
  %s3 = inlined_call_operand.vmem [shape: f32[1,192], index: 3, kind: input, shape index: {}]
  %s4 = inlined_call_operand.vmem [shape: f32[1,64], index: 4, kind: input, shape index: {}]
  %s5 = inlined_call_operand.vmem [shape: f32[1,64], index: 5, kind: input, shape index: {}]
  %s6 = inlined_call_operand.vmem [shape: f32[2,16,64], index: 6, kind: output, shape index: {}]
  %s7 = sld [smem:[#allocation0]]
  $region57: #{_lambda_.17} parent=0
    _
  %s9 = ssub.s32 1, %s7
  %s10 = scalar_select 0, %s9, %s7
  loop: start=0, step=1, limit=4
  $region2: #{_lambda_.17} parent=0 // loop_pre_header
    _
  $region3: #{_lambda_.17} parent=0 // loop_header
    %s12 = sphi 0, %s16
    %p13 = scmp.ge.s32.totalorder %s12, 4
    %s22 = sphi 0, %s24
    %s25 = sphi 0, %s22
    %s26 = sphi 0, %s25
    %s42 = sphi 0, %s26
    %s46 = sphi 0, %s46
    %s48 = sphi 0, %s46
    %s49 = sphi 0, %s48
    %s63 = sphi 0, %s49
    %s67 = sphi 0, %s67
    %s69 = sphi 0, %s67
    %s70 = sphi 0, %s69
    %s84 = sphi 0, %s70
    %s88 = sphi 0, %s88
    %s90 = sphi 0, %s88
    %s91 = sphi 0, %s90
    %s105 = sphi 0, %s91
    %s109 = sphi 0, %s109
    %s111 = sphi 0, %s109
    %s112 = sphi 0, %s111
    %s126 = sphi 0, %s112
    %s130 = sphi 0, %s130
    %s132 = sphi 0, %s130
    %s133 = sphi 0, %s132
    %s147 = sphi 0, %s133
    %s153 = sphi 0, %s155
    %s156 = sphi 0, %s153
    %s157 = sphi 0, %s156
    %s173 = sphi 0, %s157
  $region4: #{_lambda_.17} parent=0 // loop_header_branch
    %15 = sbr.rel (%p13) target = $region8
  $region5: #{_lambda_.17} parent=0 // loop_body
    %s17 = ssub.s32 %s12, 1
    %s18 = ssub.s32 %s12, 2
    %s19 = sadd.s32 %s12, 1
    %s20 = ssub.s32 %s12, %s19
    %p21 = scmp.eq.s32.totalorder %s20, 0
    %s23 = sadd.s32 %s22, 1
    %s24 = scalar_select %p21, %s22, %s23
    %p27 = pneg %p21
    %p28 = scmp.eq.s32.totalorder %s12, 1
    %p29 = por %p27, %p28
    %p30 = scmp.ne.s32.totalorder %s22, %s25
    %p31 = scmp.eq.s32.totalorder %s12, 0
    %p32 = por %p30, %p31
    %p33 = scmp.ne.s32.totalorder %s22, %s25
    %p34 = scmp.eq.s32.totalorder %s17, 1
    %p35 = por %p33, %p34
    %p36 = scmp.ne.s32.totalorder %s25, %s26
    %p37 = scmp.eq.s32.totalorder %s17, 0
    %p38 = por %p36, %p37
    %p39 = scmp.ne.s32.totalorder %s25, %s26
    %p40 = scmp.eq.s32.totalorder %s18, 1
    %p41 = por %p39, %p40
    %p43 = scmp.ne.s32.totalorder %s26, %s42
    %p44 = scmp.eq.s32.totalorder %s18, 0
    %p45 = por %p43, %p44
    %s47 = sadd.s32 %s46, 1
    %p50 = scmp.eq.s32.totalorder %s12, 1
    %p51 = scmp.ne.s32.totalorder %s46, %s48
    %p52 = scmp.eq.s32.totalorder %s12, 0
    %p53 = por %p51, %p52
    %p54 = scmp.ne.s32.totalorder %s46, %s48
    %p55 = scmp.eq.s32.totalorder %s17, 1
    %p56 = por %p54, %p55
    %p57 = scmp.ne.s32.totalorder %s48, %s49
    %p58 = scmp.eq.s32.totalorder %s17, 0
    %p59 = por %p57, %p58
    %p60 = scmp.ne.s32.totalorder %s48, %s49
    %p61 = scmp.eq.s32.totalorder %s18, 1
    %p62 = por %p60, %p61
    %p64 = scmp.ne.s32.totalorder %s49, %s63
    %p65 = scmp.eq.s32.totalorder %s18, 0
    %p66 = por %p64, %p65
    %s68 = sadd.s32 %s67, 1
    %p71 = scmp.eq.s32.totalorder %s12, 1
    %p72 = scmp.ne.s32.totalorder %s67, %s69
    %p73 = scmp.eq.s32.totalorder %s12, 0
    %p74 = por %p72, %p73
    %p75 = scmp.ne.s32.totalorder %s67, %s69
    %p76 = scmp.eq.s32.totalorder %s17, 1
    %p77 = por %p75, %p76
    %p78 = scmp.ne.s32.totalorder %s69, %s70
    %p79 = scmp.eq.s32.totalorder %s17, 0
    %p80 = por %p78, %p79
    %p81 = scmp.ne.s32.totalorder %s69, %s70
    %p82 = scmp.eq.s32.totalorder %s18, 1
    %p83 = por %p81, %p82
    %p85 = scmp.ne.s32.totalorder %s70, %s84
    %p86 = scmp.eq.s32.totalorder %s18, 0
    %p87 = por %p85, %p86
    %s89 = sadd.s32 %s88, 1
    %p92 = scmp.eq.s32.totalorder %s12, 1
    %p93 = scmp.ne.s32.totalorder %s88, %s90
    %p94 = scmp.eq.s32.totalorder %s12, 0
    %p95 = por %p93, %p94
    %p96 = scmp.ne.s32.totalorder %s88, %s90
    %p97 = scmp.eq.s32.totalorder %s17, 1
    %p98 = por %p96, %p97
    %p99 = scmp.ne.s32.totalorder %s90, %s91
    %p100 = scmp.eq.s32.totalorder %s17, 0
    %p101 = por %p99, %p100
    %p102 = scmp.ne.s32.totalorder %s90, %s91
    %p103 = scmp.eq.s32.totalorder %s18, 1
    %p104 = por %p102, %p103
    %p106 = scmp.ne.s32.totalorder %s91, %s105
    %p107 = scmp.eq.s32.totalorder %s18, 0
    %p108 = por %p106, %p107
    %s110 = sadd.s32 %s109, 1
    %p113 = scmp.eq.s32.totalorder %s12, 1
    %p114 = scmp.ne.s32.totalorder %s109, %s111
    %p115 = scmp.eq.s32.totalorder %s12, 0
    %p116 = por %p114, %p115
    %p117 = scmp.ne.s32.totalorder %s109, %s111
    %p118 = scmp.eq.s32.totalorder %s17, 1
    %p119 = por %p117, %p118
    %p120 = scmp.ne.s32.totalorder %s111, %s112
    %p121 = scmp.eq.s32.totalorder %s17, 0
    %p122 = por %p120, %p121
    %p123 = scmp.ne.s32.totalorder %s111, %s112
    %p124 = scmp.eq.s32.totalorder %s18, 1
    %p125 = por %p123, %p124
    %p127 = scmp.ne.s32.totalorder %s112, %s126
    %p128 = scmp.eq.s32.totalorder %s18, 0
    %p129 = por %p127, %p128
    %s131 = sadd.s32 %s130, 1
    %p134 = scmp.eq.s32.totalorder %s12, 1
    %p135 = scmp.ne.s32.totalorder %s130, %s132
    %p136 = scmp.eq.s32.totalorder %s12, 0
    %p137 = por %p135, %p136
    %p138 = scmp.ne.s32.totalorder %s130, %s132
    %p139 = scmp.eq.s32.totalorder %s17, 1
    %p140 = por %p138, %p139
    %p141 = scmp.ne.s32.totalorder %s132, %s133
    %p142 = scmp.eq.s32.totalorder %s17, 0
    %p143 = por %p141, %p142
    %p144 = scmp.ne.s32.totalorder %s132, %s133
    %p145 = scmp.eq.s32.totalorder %s18, 1
    %p146 = por %p144, %p145
    %p148 = scmp.ne.s32.totalorder %s133, %s147
    %p149 = scmp.eq.s32.totalorder %s18, 0
    %p150 = por %p148, %p149
    %s151 = ssub.s32 %s12, %s19
    %p152 = scmp.eq.s32.totalorder %s151, 0
    %s154 = sadd.s32 %s153, 1
    %s155 = scalar_select %p152, %s153, %s154
    %p158 = pneg %p152
    %p159 = scmp.eq.s32.totalorder %s12, 1
    %p160 = por %p158, %p159
    %p161 = scmp.ne.s32.totalorder %s153, %s156
    %p162 = scmp.eq.s32.totalorder %s12, 0
    %p163 = por %p161, %p162
    %p164 = scmp.ne.s32.totalorder %s153, %s156
    %p165 = scmp.eq.s32.totalorder %s17, 1
    %p166 = por %p164, %p165
    %p167 = scmp.ne.s32.totalorder %s156, %s157
    %p168 = scmp.eq.s32.totalorder %s17, 0
    %p169 = por %p167, %p168
    %p170 = scmp.ne.s32.totalorder %s156, %s157
    %p171 = scmp.eq.s32.totalorder %s18, 1
    %p172 = por %p170, %p171
    %p174 = scmp.ne.s32.totalorder %s157, %s173
    %p175 = scmp.eq.s32.totalorder %s18, 0
    %p176 = por %p174, %p175
    %p177 = scmp.le.s32.totalorder 1, %s12
    %p178 = scmp.lt.s32.totalorder %s12, 3
    %p179 = pnand %p177, %p178
    %p180 = pneg %p179
    // Predicated region
    $region9: #{_lambda_.17} parent=5 // pred_check
      _
    $region10: #{_lambda_.17} parent=5 // pred_check_branch
      %182 = sbr.rel (%p179) target = $region12
    $region11: #{_lambda_.17} parent=5 // pred_region
      %s183 = ssub.s32 %s12, 1
      // Predicated region
      $region13: #{_lambda_.17} parent=11 // pred_check
        %p184 = pneg %p59
      $region14: #{_lambda_.17} parent=11 // pred_check_branch
        %186 = sbr.rel (%p184) target = $region16
      $region15: #{_lambda_.17} parent=11 // pred_region
        _
      $region16: #{_lambda_.17} parent=11 // pred_fallthru
        _
      // Predicated region
      $region17: #{_lambda_.17} parent=11 // pred_check
        %p187 = pneg %p80
      $region18: #{_lambda_.17} parent=11 // pred_check_branch
        %189 = sbr.rel (%p187) target = $region20
      $region19: #{_lambda_.17} parent=11 // pred_region
        _
      $region20: #{_lambda_.17} parent=11 // pred_fallthru
        _
      // Predicated region
      $region21: #{_lambda_.17} parent=11 // pred_check
        %p190 = pneg %p101
      $region22: #{_lambda_.17} parent=11 // pred_check_branch
        %192 = sbr.rel (%p190) target = $region24
      $region23: #{_lambda_.17} parent=11 // pred_region
        _
      $region24: #{_lambda_.17} parent=11 // pred_fallthru
        _
      // Predicated region
      $region25: #{_lambda_.17} parent=11 // pred_check
        %p193 = pneg %p122
      $region26: #{_lambda_.17} parent=11 // pred_check_branch
        %195 = sbr.rel (%p193) target = $region28
      $region27: #{_lambda_.17} parent=11 // pred_region
        _
      $region28: #{_lambda_.17} parent=11 // pred_fallthru
        _
      // Predicated region
      $region29: #{_lambda_.17} parent=11 // pred_check
        %p196 = pneg %p143
      $region30: #{_lambda_.17} parent=11 // pred_check_branch
        %198 = sbr.rel (%p196) target = $region32
      $region31: #{_lambda_.17} parent=11 // pred_region
        _
      $region32: #{_lambda_.17} parent=11 // pred_fallthru
        _
    $region12: #{_lambda_.17} parent=5 // pred_fallthru
      _
    %p199 = scmp.lt.s32.totalorder %s12, 2
    // Predicated region
    $region33: #{_lambda_.17} parent=5 // pred_check
      %p200 = pneg %p199
    $region34: #{_lambda_.17} parent=5 // pred_check_branch
      %202 = sbr.rel (%p200) target = $region36
    $region35: #{_lambda_.17} parent=5 // pred_region
      // Predicated region
      $region37: #{_lambda_.17} parent=35 // pred_check
        %p203 = pneg %p32
      $region38: #{_lambda_.17} parent=35 // pred_check_branch
        %205 = sbr.rel (%p203) target = $region40
      $region39: #{_lambda_.17} parent=35 // pred_region
        %p206 = scmp.lt.s32.totalorder %s12, 1
        %s207 = scalar_select %p206, %s12, 1
        %s208 = smul.addr %s207, 4
        %s209 = smul.addr %s208, 8
        %s210 = scalar_lea.vmem %s0, %s209
      $region40: #{_lambda_.17} parent=35 // pred_fallthru
        _
    $region36: #{_lambda_.17} parent=5 // pred_fallthru
      _
    %p211 = scmp.le.s32.totalorder 1, %s12
    %p212 = scmp.lt.s32.totalorder %s12, 3
    %p213 = pnand %p211, %p212
    %p214 = pneg %p213
    // Predicated region
    $region41: #{_lambda_.17} parent=5 // pred_check
      _
    $region42: #{_lambda_.17} parent=5 // pred_check_branch
      %216 = sbr.rel (%p213) target = $region44
    $region43: #{_lambda_.17} parent=5 // pred_region
      %s217 = ssub.s32 %s12, 1
      %p218 = scmp.lt.s32.totalorder %s17, 1
      %s219 = scalar_select %p218, %s17, 1
      %s220 = smul.addr %s219, 4
      %s221 = smul.addr %s220, 8
      %s222 = scalar_lea.vmem %s0, %s221
      %p223 = pneg %p38
      %p224 = pneg %p35
      %p225 = pneg %p59
      %p226 = pneg %p56
      %p227 = pneg %p80
      %p228 = pneg %p77
      %p229 = pneg %p101
      %p230 = pneg %p98
      %p231 = pneg %p122
      %p232 = pneg %p119
      %p233 = pneg %p143
      %p234 = pneg %p140
      %p235 = pneg %p169
      %p236 = pneg %p166
      %p237 = scmp.lt.s32.totalorder %s17, 1
      %s238 = scalar_select %p237, %s17, 1
      %s239 = smul.addr %s238, 2
      %s240 = smul.addr %s239, 8
      %s241 = scalar_lea.vmem %s6, %s240
      %p242 = scmp.lt.s32.totalorder %s17, 1
      %s243 = scalar_select %p242, %s17, 1
      %s244 = smul.addr %s243, 4
      %s245 = smul.addr %s244, 8
      %s246 = scalar_lea.vmem %s0, %s245
      %p247 = scmp.lt.s32.totalorder %s17, 1
      %s248 = scalar_select %p247, %s17, 1
      %s249 = smul.addr %s248, 2
      %s250 = smul.addr %s249, 8
      %s251 = scalar_lea.vmem %s6, %s250
      %v252 = vld [vmem:[%s246] sm:$0xff]
      %v253 = vld [vmem:[%s246 + $0x8] sm:$0xff]
      %v254 = vld [vmem:[%s246 + $0x10] sm:$0xff]
      %v255 = vld [vmem:[%s246 + $0x18] sm:$0xff]
      %v256 = vld [vmem:[%s2] sm:$0x3]
      %v258 = vlaneseq
      %v259 = vshrl.u32 %v258, 7
      %v260 = vsub.s32 0, %v259
      %v261 = vrot.slane %v256, %v260
      %v262 = vlaneseq
      %v263 = vshrl.u32 %v262, 7
      %v264 = vsub.s32 1, %v263
      %v265 = vrot.slane %v256, %v264
      %v268 = vmul.f32 %v252, %v261
      %v269 = vmul.f32 %v253, %v265
      %v270 = vmul.f32 %v254, %v261
      %v271 = vmul.f32 %v255, %v265
      %v272 = vld [vmem:[%s3] sm:$0x3]
      %v274 = vlaneseq
      %v275 = vshrl.u32 %v274, 7
      %v276 = vsub.s32 0, %v275
      %v277 = vrot.slane %v272, %v276
      %v278 = vlaneseq
      %v279 = vshrl.u32 %v278, 7
      %v280 = vsub.s32 1, %v279
      %v281 = vrot.slane %v272, %v280
      %v284 = vadd.f32 %v268, %v277
      %v285 = vadd.f32 %v269, %v281
      %v286 = vadd.f32 %v270, %v277
      %v287 = vadd.f32 %v271, %v281
      %v288 = vmax.f32 %v284, 0.0
      %v289 = vmax.f32 %v285, 0.0
      %v290 = vmax.f32 %v286, 0.0
      %v291 = vmax.f32 %v287, 0.0
      %v292 = vld [vmem:[%s1] sm:$0xff]
      %v293 = vld [vmem:[%s1 + $0x8] sm:$0xff]
      %v294 = vld [vmem:[%s1 + $0x10] sm:$0xff]
      %v295 = vld [vmem:[%s1 + $0x18] sm:$0xff]
      %v296 = vld [vmem:[%s1 + $0x20] sm:$0xff]
      %v297 = vld [vmem:[%s1 + $0x28] sm:$0xff]
      %v298 = vld [vmem:[%s1 + $0x30] sm:$0xff]
      %v299 = vld [vmem:[%s1 + $0x38] sm:$0xff]
      %v300 = vld [vmem:[%s1 + $0x40] sm:$0xff]
      %v301 = vld [vmem:[%s1 + $0x48] sm:$0xff]
      %v302 = vld [vmem:[%s1 + $0x50] sm:$0xff]
      %v303 = vld [vmem:[%s1 + $0x58] sm:$0xff]
      %v304 = vld [vmem:[%s1 + $0x60] sm:$0xff]
      %v305 = vld [vmem:[%s1 + $0x68] sm:$0xff]
      %v306 = vld [vmem:[%s1 + $0x70] sm:$0xff]
      %v307 = vld [vmem:[%s1 + $0x78] sm:$0xff]
      %v308 = vld [vmem:[%s1 + $0x80] sm:$0xff]
      %v309 = vld [vmem:[%s1 + $0x88] sm:$0xff]
      %v310 = vld [vmem:[%s1 + $0x90] sm:$0xff]
      %v311 = vld [vmem:[%s1 + $0x98] sm:$0xff]
      %v312 = vld [vmem:[%s1 + $0xa0] sm:$0xff]
      %v313 = vld [vmem:[%s1 + $0xa8] sm:$0xff]
      %v314 = vld [vmem:[%s1 + $0xb0] sm:$0xff]
      %v315 = vld [vmem:[%s1 + $0xb8] sm:$0xff]
      %vm316 = vcmask 523264
      %v318 = vsel %vm316, %v289, 0
      %v321 = vsel %vm316, %v291, 0
      %323 = vmatprep.subr.mxu0 0.0
      %324 = vmatpush1.msra.mxu0 %v292
      %325 = vmatprep.subr.mxu0 0.0
      %326 = vmatpush1.msra.mxu0 %v293
      %327 = vmatprep.subr.mxu0 0.0
      %328 = vmatpush1.msra.mxu0 %v294
      %329 = vmatprep.subr.mxu0 0.0
      %330 = vmatpush1.msra.mxu0 %v295
      %331 = vmatprep.subr.mxu0 0.0
      %332 = vmatpush1.msra.mxu0 %v296
      %333 = vmatprep.subr.mxu0 0.0
      %334 = vmatpush1.msra.mxu0 %v297
      %335 = vmatprep.subr.mxu0 0.0
      %336 = vmatpush1.msra.mxu0 %v298
      %337 = vmatprep.subr.mxu0 0.0
      %338 = vmatpush1.msra.mxu0 %v299
      %339 = vmatprep.subr.mxu0 0.0
      %340 = vmatpush1.msra.mxu0 %v300
      %341 = vmatprep.subr.mxu0 0.0
      %342 = vmatpush1.msra.mxu0 %v301
      %343 = vmatprep.subr.mxu0 0.0
      %344 = vmatpush1.msra.mxu0 %v302
      %345 = vmatprep.subr.mxu0 0.0
      %346 = vmatpush1.msra.mxu0 %v303
      %347 = vmatprep.subr.mxu0 0.0
      %348 = vmatpush1.msra.mxu0 %v304
      %349 = vmatprep.subr.mxu0 0.0
      %350 = vmatpush1.msra.mxu0 %v305
      %351 = vmatprep.subr.mxu0 0.0
      %352 = vmatpush1.msra.mxu0 %v306
      %353 = vmatprep.subr.mxu0 0.0
      %354 = vmatpush1.msra.mxu0 %v307
      %355 = vmatprep.subr.mxu0 0.0
      %356 = vmatpush1.msra.mxu0 %v308
      %357 = vmatprep.subr.mxu0 0.0
      %358 = vmatpush1.msra.mxu0 %v309
      %359 = vmatprep.subr.mxu0 0.0
      %360 = vmatpush1.msra.mxu0 %v310
      %361 = vmatprep.subr.mxu0 0.0
      %362 = vmatpush1.msra.mxu0 %v311
      %363 = vmatprep.subr.mxu0 0.0
      %364 = vmatpush1.msra.mxu0 %v312
      %365 = vmatprep.subr.mxu0 0.0
      %366 = vmatpush1.msra.mxu0 %v313
      %367 = vmatprep.subr.mxu0 0.0
      %368 = vmatpush1.msra.mxu0 %v314
      %369 = vmatprep.subr.mxu0 0.0
      %370 = vmatpush1.msra.mxu0 %v315
      %371 = vmatprep.subr.mxu0 0.0
      %372 = vmatpush1.msra.mxu0 0.0
      %373 = vmatprep.subr.mxu0 0.0
      %374 = vmatpush1.msra.mxu0 0.0
      %375 = vmatprep.subr.mxu0 0.0
      %376 = vmatpush1.msra.mxu0 0.0
      %377 = vmatprep.subr.mxu0 0.0
      %378 = vmatpush1.msra.mxu0 0.0
      %379 = vmatprep.subr.mxu0 0.0
      %380 = vmatpush1.msra.mxu0 0.0
      %381 = vmatprep.subr.mxu0 0.0
      %382 = vmatpush1.msra.mxu0 0.0
      %383 = vmatprep.subr.mxu0 0.0
      %384 = vmatpush1.msra.mxu0 0.0
      %385 = vmatprep.subr.mxu0 0.0
      %386 = vmatpush1.msra.mxu0 0.0
      %387 = vmatprep.mubr.f32.mxu0 %v318
      %388 = vmatmul.mubr.f32.gmra.mrb[0].mxu0 %v288
      %v389 = vpop.f32.mrb[0].mxu0
      %v390 = vadd.f32 0.0, %v389
      %v391 = vpop.f32.mrb[0].mxu0
      %392 = vmatprep.mubr.f32.mxu0 %v321
      %393 = vmatmul.mubr.f32.gmra.mrb[0].mxu0 %v290
      %v394 = vpop.f32.mrb[0].mxu0
      %v395 = vadd.f32 0.0, %v394
      %v396 = vpop.f32.mrb[0].mxu0
      %397 = vdwg.mxu0
      %v398 = vld [vmem:[%s4] sm:$0x1]
      %v400 = vlaneseq
      %v401 = vshrl.u32 %v400, 7
      %v402 = vsub.s32 0, %v401
      %v403 = vrot.slane %v398, %v402
      %v405 = vmul.f32 %v390, %v403
      %v406 = vmul.f32 %v395, %v403
      %v407 = vld [vmem:[%s5] sm:$0x1]
      %v409 = vlaneseq
      %v410 = vshrl.u32 %v409, 7
      %v411 = vsub.s32 0, %v410
      %v412 = vrot.slane %v407, %v411
      %v414 = vadd.f32 %v405, %v412
      %v415 = vadd.f32 %v406, %v412
      %416 = vst.msk [vmem:[%s251] sm:$0xff] %vm316, %v414
      %417 = vst.msk [vmem:[%s251 + $0x8] sm:$0xff] %vm316, %v415
      %p418 = scmp.lt.s32.totalorder %s17, 1
      %s419 = scalar_select %p418, %s17, 1
      %s420 = smul.addr %s419, 2
      %s421 = smul.addr %s420, 8
      %s422 = scalar_lea.vmem %s6, %s421
      // Predicated region
      $region45: #{_lambda_.17} parent=43 // pred_check
        %p423 = pneg %p166
      $region46: #{_lambda_.17} parent=43 // pred_check_branch
        %425 = sbr.rel (%p423) target = $region48
      $region47: #{_lambda_.17} parent=43 // pred_region
        _
      $region48: #{_lambda_.17} parent=43 // pred_fallthru
        _
    $region44: #{_lambda_.17} parent=5 // pred_fallthru
      _
    %p426 = scmp.le.s32.totalorder 2, %s12
    // Predicated region
    $region49: #{_lambda_.17} parent=5 // pred_check
      %p427 = pneg %p426
    $region50: #{_lambda_.17} parent=5 // pred_check_branch
      %429 = sbr.rel (%p427) target = $region52
    $region51: #{_lambda_.17} parent=5 // pred_region
      %s430 = ssub.s32 %s12, 2
      // Predicated region
      $region53: #{_lambda_.17} parent=51 // pred_check
        %p431 = pneg %p172
      $region54: #{_lambda_.17} parent=51 // pred_check_branch
        %433 = sbr.rel (%p431) target = $region56
      $region55: #{_lambda_.17} parent=51 // pred_region
        %p434 = scmp.lt.s32.totalorder %s18, 1
        %s435 = scalar_select %p434, %s18, 1
        %s436 = smul.addr %s435, 2
        %s437 = smul.addr %s436, 8
        %s438 = scalar_lea.vmem %s6, %s437
      $region56: #{_lambda_.17} parent=51 // pred_fallthru
        _
    $region52: #{_lambda_.17} parent=5 // pred_fallthru
      _
  $region6: #{_lambda_.17} parent=0 // loop_footer
    %s16 = sadd.s32 1, %s12
  $region7: #{_lambda_.17} parent=0 // loop_footer_branch
    %11 = sbr.rel target = $region3
  $region8: #{_lambda_.17} parent=0 // loop_exit
    _

// kernel: _lambda_.18
$region0: #{_lambda_.18}
  #allocation0 [shape = 'u32[]', space=smem, size = 0x4, offset = 0x4, fixed_abs, tag = 'smem constant byte address 0x4 - core index']
  #allocation1 [shape = 'u32[144,128]{1,0:T(1,128)}', space=vmem, size = 0x12000, scoped, tag = 'internal scratch']
  %s0 = inlined_call_operand.vmem [shape: f32[2,16,64], index: 0, kind: input, shape index: {}]
  %s1 = inlined_call_operand.vmem [shape: f32[3,64,64], index: 1, kind: input, shape index: {}]
  %s2 = inlined_call_operand.vmem [shape: f32[1,64], index: 2, kind: input, shape index: {}]
  %s3 = inlined_call_operand.vmem [shape: f32[1,64], index: 3, kind: input, shape index: {}]
  %s4 = inlined_call_operand.vmem [shape: f32[1,64], index: 4, kind: input, shape index: {}]
  %s5 = inlined_call_operand.vmem [shape: f32[1,64], index: 5, kind: input, shape index: {}]
  %s6 = inlined_call_operand.vmem [shape: f32[2,16,64], index: 6, kind: output, shape index: {}]
  %s7 = sld [smem:[#allocation0]]
  $region57: #{_lambda_.18} parent=0
    _
  %s9 = ssub.s32 1, %s7
  %s10 = scalar_select 0, %s9, %s7
  loop: start=0, step=1, limit=4
  $region2: #{_lambda_.18} parent=0 // loop_pre_header
    _
  $region3: #{_lambda_.18} parent=0 // loop_header
    %s12 = sphi 0, %s16
    %p13 = scmp.ge.s32.totalorder %s12, 4
    %s22 = sphi 0, %s24
    %s25 = sphi 0, %s22
    %s26 = sphi 0, %s25
    %s42 = sphi 0, %s26
    %s46 = sphi 0, %s46
    %s48 = sphi 0, %s46
    %s49 = sphi 0, %s48
    %s63 = sphi 0, %s49
    %s67 = sphi 0, %s67
    %s69 = sphi 0, %s67
    %s70 = sphi 0, %s69
    %s84 = sphi 0, %s70
    %s88 = sphi 0, %s88
    %s90 = sphi 0, %s88
    %s91 = sphi 0, %s90
    %s105 = sphi 0, %s91
    %s109 = sphi 0, %s109
    %s111 = sphi 0, %s109
    %s112 = sphi 0, %s111
    %s126 = sphi 0, %s112
    %s130 = sphi 0, %s130
    %s132 = sphi 0, %s130
    %s133 = sphi 0, %s132
    %s147 = sphi 0, %s133
    %s153 = sphi 0, %s155
    %s156 = sphi 0, %s153
    %s157 = sphi 0, %s156
    %s173 = sphi 0, %s157
  $region4: #{_lambda_.18} parent=0 // loop_header_branch
    %15 = sbr.rel (%p13) target = $region8
  $region5: #{_lambda_.18} parent=0 // loop_body
    %s17 = ssub.s32 %s12, 1
    %s18 = ssub.s32 %s12, 2
    %s19 = sadd.s32 %s12, 1
    %s20 = ssub.s32 %s12, %s19
    %p21 = scmp.eq.s32.totalorder %s20, 0
    %s23 = sadd.s32 %s22, 1
    %s24 = scalar_select %p21, %s22, %s23
    %p27 = pneg %p21
    %p28 = scmp.eq.s32.totalorder %s12, 1
    %p29 = por %p27, %p28
    %p30 = scmp.ne.s32.totalorder %s22, %s25
    %p31 = scmp.eq.s32.totalorder %s12, 0
    %p32 = por %p30, %p31
    %p33 = scmp.ne.s32.totalorder %s22, %s25
    %p34 = scmp.eq.s32.totalorder %s17, 1
    %p35 = por %p33, %p34
    %p36 = scmp.ne.s32.totalorder %s25, %s26
    %p37 = scmp.eq.s32.totalorder %s17, 0
    %p38 = por %p36, %p37
    %p39 = scmp.ne.s32.totalorder %s25, %s26
    %p40 = scmp.eq.s32.totalorder %s18, 1
    %p41 = por %p39, %p40
    %p43 = scmp.ne.s32.totalorder %s26, %s42
    %p44 = scmp.eq.s32.totalorder %s18, 0
    %p45 = por %p43, %p44
    %s47 = sadd.s32 %s46, 1
    %p50 = scmp.eq.s32.totalorder %s12, 1
    %p51 = scmp.ne.s32.totalorder %s46, %s48
    %p52 = scmp.eq.s32.totalorder %s12, 0
    %p53 = por %p51, %p52
    %p54 = scmp.ne.s32.totalorder %s46, %s48
    %p55 = scmp.eq.s32.totalorder %s17, 1
    %p56 = por %p54, %p55
    %p57 = scmp.ne.s32.totalorder %s48, %s49
    %p58 = scmp.eq.s32.totalorder %s17, 0
    %p59 = por %p57, %p58
    %p60 = scmp.ne.s32.totalorder %s48, %s49
    %p61 = scmp.eq.s32.totalorder %s18, 1
    %p62 = por %p60, %p61
    %p64 = scmp.ne.s32.totalorder %s49, %s63
    %p65 = scmp.eq.s32.totalorder %s18, 0
    %p66 = por %p64, %p65
    %s68 = sadd.s32 %s67, 1
    %p71 = scmp.eq.s32.totalorder %s12, 1
    %p72 = scmp.ne.s32.totalorder %s67, %s69
    %p73 = scmp.eq.s32.totalorder %s12, 0
    %p74 = por %p72, %p73
    %p75 = scmp.ne.s32.totalorder %s67, %s69
    %p76 = scmp.eq.s32.totalorder %s17, 1
    %p77 = por %p75, %p76
    %p78 = scmp.ne.s32.totalorder %s69, %s70
    %p79 = scmp.eq.s32.totalorder %s17, 0
    %p80 = por %p78, %p79
    %p81 = scmp.ne.s32.totalorder %s69, %s70
    %p82 = scmp.eq.s32.totalorder %s18, 1
    %p83 = por %p81, %p82
    %p85 = scmp.ne.s32.totalorder %s70, %s84
    %p86 = scmp.eq.s32.totalorder %s18, 0
    %p87 = por %p85, %p86
    %s89 = sadd.s32 %s88, 1
    %p92 = scmp.eq.s32.totalorder %s12, 1
    %p93 = scmp.ne.s32.totalorder %s88, %s90
    %p94 = scmp.eq.s32.totalorder %s12, 0
    %p95 = por %p93, %p94
    %p96 = scmp.ne.s32.totalorder %s88, %s90
    %p97 = scmp.eq.s32.totalorder %s17, 1
    %p98 = por %p96, %p97
    %p99 = scmp.ne.s32.totalorder %s90, %s91
    %p100 = scmp.eq.s32.totalorder %s17, 0
    %p101 = por %p99, %p100
    %p102 = scmp.ne.s32.totalorder %s90, %s91
    %p103 = scmp.eq.s32.totalorder %s18, 1
    %p104 = por %p102, %p103
    %p106 = scmp.ne.s32.totalorder %s91, %s105
    %p107 = scmp.eq.s32.totalorder %s18, 0
    %p108 = por %p106, %p107
    %s110 = sadd.s32 %s109, 1
    %p113 = scmp.eq.s32.totalorder %s12, 1
    %p114 = scmp.ne.s32.totalorder %s109, %s111
    %p115 = scmp.eq.s32.totalorder %s12, 0
    %p116 = por %p114, %p115
    %p117 = scmp.ne.s32.totalorder %s109, %s111
    %p118 = scmp.eq.s32.totalorder %s17, 1
    %p119 = por %p117, %p118
    %p120 = scmp.ne.s32.totalorder %s111, %s112
    %p121 = scmp.eq.s32.totalorder %s17, 0
    %p122 = por %p120, %p121
    %p123 = scmp.ne.s32.totalorder %s111, %s112
    %p124 = scmp.eq.s32.totalorder %s18, 1
    %p125 = por %p123, %p124
    %p127 = scmp.ne.s32.totalorder %s112, %s126
    %p128 = scmp.eq.s32.totalorder %s18, 0
    %p129 = por %p127, %p128
    %s131 = sadd.s32 %s130, 1
    %p134 = scmp.eq.s32.totalorder %s12, 1
    %p135 = scmp.ne.s32.totalorder %s130, %s132
    %p136 = scmp.eq.s32.totalorder %s12, 0
    %p137 = por %p135, %p136
    %p138 = scmp.ne.s32.totalorder %s130, %s132
    %p139 = scmp.eq.s32.totalorder %s17, 1
    %p140 = por %p138, %p139
    %p141 = scmp.ne.s32.totalorder %s132, %s133
    %p142 = scmp.eq.s32.totalorder %s17, 0
    %p143 = por %p141, %p142
    %p144 = scmp.ne.s32.totalorder %s132, %s133
    %p145 = scmp.eq.s32.totalorder %s18, 1
    %p146 = por %p144, %p145
    %p148 = scmp.ne.s32.totalorder %s133, %s147
    %p149 = scmp.eq.s32.totalorder %s18, 0
    %p150 = por %p148, %p149
    %s151 = ssub.s32 %s12, %s19
    %p152 = scmp.eq.s32.totalorder %s151, 0
    %s154 = sadd.s32 %s153, 1
    %s155 = scalar_select %p152, %s153, %s154
    %p158 = pneg %p152
    %p159 = scmp.eq.s32.totalorder %s12, 1
    %p160 = por %p158, %p159
    %p161 = scmp.ne.s32.totalorder %s153, %s156
    %p162 = scmp.eq.s32.totalorder %s12, 0
    %p163 = por %p161, %p162
    %p164 = scmp.ne.s32.totalorder %s153, %s156
    %p165 = scmp.eq.s32.totalorder %s17, 1
    %p166 = por %p164, %p165
    %p167 = scmp.ne.s32.totalorder %s156, %s157
    %p168 = scmp.eq.s32.totalorder %s17, 0
    %p169 = por %p167, %p168
    %p170 = scmp.ne.s32.totalorder %s156, %s157
    %p171 = scmp.eq.s32.totalorder %s18, 1
    %p172 = por %p170, %p171
    %p174 = scmp.ne.s32.totalorder %s157, %s173
    %p175 = scmp.eq.s32.totalorder %s18, 0
    %p176 = por %p174, %p175
    %p177 = scmp.le.s32.totalorder 1, %s12
    %p178 = scmp.lt.s32.totalorder %s12, 3
    %p179 = pnand %p177, %p178
    %p180 = pneg %p179
    // Predicated region
    $region9: #{_lambda_.18} parent=5 // pred_check
      _
    $region10: #{_lambda_.18} parent=5 // pred_check_branch
      %182 = sbr.rel (%p179) target = $region12
    $region11: #{_lambda_.18} parent=5 // pred_region
      %s183 = ssub.s32 %s12, 1
      // Predicated region
      $region13: #{_lambda_.18} parent=11 // pred_check
        %p184 = pneg %p59
      $region14: #{_lambda_.18} parent=11 // pred_check_branch
        %186 = sbr.rel (%p184) target = $region16
      $region15: #{_lambda_.18} parent=11 // pred_region
        _
      $region16: #{_lambda_.18} parent=11 // pred_fallthru
        _
      // Predicated region
      $region17: #{_lambda_.18} parent=11 // pred_check
        %p187 = pneg %p80
      $region18: #{_lambda_.18} parent=11 // pred_check_branch
        %189 = sbr.rel (%p187) target = $region20
      $region19: #{_lambda_.18} parent=11 // pred_region
        _
      $region20: #{_lambda_.18} parent=11 // pred_fallthru
        _
      // Predicated region
      $region21: #{_lambda_.18} parent=11 // pred_check
        %p190 = pneg %p101
      $region22: #{_lambda_.18} parent=11 // pred_check_branch
        %192 = sbr.rel (%p190) target = $region24
      $region23: #{_lambda_.18} parent=11 // pred_region
        _
      $region24: #{_lambda_.18} parent=11 // pred_fallthru
        _
      // Predicated region
      $region25: #{_lambda_.18} parent=11 // pred_check
        %p193 = pneg %p122
      $region26: #{_lambda_.18} parent=11 // pred_check_branch
        %195 = sbr.rel (%p193) target = $region28
      $region27: #{_lambda_.18} parent=11 // pred_region
        _
      $region28: #{_lambda_.18} parent=11 // pred_fallthru
        _
      // Predicated region
      $region29: #{_lambda_.18} parent=11 // pred_check
        %p196 = pneg %p143
      $region30: #{_lambda_.18} parent=11 // pred_check_branch
        %198 = sbr.rel (%p196) target = $region32
      $region31: #{_lambda_.18} parent=11 // pred_region
        _
      $region32: #{_lambda_.18} parent=11 // pred_fallthru
        _
    $region12: #{_lambda_.18} parent=5 // pred_fallthru
      _
    %p199 = scmp.lt.s32.totalorder %s12, 2
    // Predicated region
    $region33: #{_lambda_.18} parent=5 // pred_check
      %p200 = pneg %p199
    $region34: #{_lambda_.18} parent=5 // pred_check_branch
      %202 = sbr.rel (%p200) target = $region36
    $region35: #{_lambda_.18} parent=5 // pred_region
      // Predicated region
      $region37: #{_lambda_.18} parent=35 // pred_check
        %p203 = pneg %p32
      $region38: #{_lambda_.18} parent=35 // pred_check_branch
        %205 = sbr.rel (%p203) target = $region40
      $region39: #{_lambda_.18} parent=35 // pred_region
        %p206 = scmp.lt.s32.totalorder %s12, 1
        %s207 = scalar_select %p206, %s12, 1
        %s208 = smul.addr %s207, 2
        %s209 = smul.addr %s208, 8
        %s210 = scalar_lea.vmem %s0, %s209
      $region40: #{_lambda_.18} parent=35 // pred_fallthru
        _
    $region36: #{_lambda_.18} parent=5 // pred_fallthru
      _
    %p211 = scmp.le.s32.totalorder 1, %s12
    %p212 = scmp.lt.s32.totalorder %s12, 3
    %p213 = pnand %p211, %p212
    %p214 = pneg %p213
    // Predicated region
    $region41: #{_lambda_.18} parent=5 // pred_check
      _
    $region42: #{_lambda_.18} parent=5 // pred_check_branch
      %216 = sbr.rel (%p213) target = $region44
    $region43: #{_lambda_.18} parent=5 // pred_region
      %s217 = ssub.s32 %s12, 1
      %p218 = scmp.lt.s32.totalorder %s17, 1
      %s219 = scalar_select %p218, %s17, 1
      %s220 = smul.addr %s219, 2
      %s221 = smul.addr %s220, 8
      %s222 = scalar_lea.vmem %s0, %s221
      %p223 = pneg %p38
      %p224 = pneg %p35
      %p225 = pneg %p59
      %p226 = pneg %p56
      %p227 = pneg %p80
      %p228 = pneg %p77
      %p229 = pneg %p101
      %p230 = pneg %p98
      %p231 = pneg %p122
      %p232 = pneg %p119
      %p233 = pneg %p143
      %p234 = pneg %p140
      %p235 = pneg %p169
      %p236 = pneg %p166
      %p237 = scmp.lt.s32.totalorder %s17, 1
      %s238 = scalar_select %p237, %s17, 1
      %s239 = smul.addr %s238, 2
      %s240 = smul.addr %s239, 8
      %s241 = scalar_lea.vmem %s6, %s240
      %p242 = scmp.lt.s32.totalorder %s17, 1
      %s243 = scalar_select %p242, %s17, 1
      %s244 = smul.addr %s243, 2
      %s245 = smul.addr %s244, 8
      %s246 = scalar_lea.vmem %s0, %s245
      %p247 = scmp.lt.s32.totalorder %s17, 1
      %s248 = scalar_select %p247, %s17, 1
      %s249 = smul.addr %s248, 2
      %s250 = smul.addr %s249, 8
      %s251 = scalar_lea.vmem %s6, %s250
      %v252 = vld [vmem:[%s246] sm:$0xff]
      %v253 = vld [vmem:[%s246 + $0x8] sm:$0xff]
      %v254 = vld [vmem:[%s2] sm:$0x1]
      %v256 = vlaneseq
      %v257 = vshrl.u32 %v256, 7
      %v258 = vsub.s32 0, %v257
      %v259 = vrot.slane %v254, %v258
      %v261 = vmul.f32 %v252, %v259
      %v262 = vmul.f32 %v253, %v259
      %v263 = vld [vmem:[%s3] sm:$0x1]
      %v265 = vlaneseq
      %v266 = vshrl.u32 %v265, 7
      %v267 = vsub.s32 0, %v266
      %v268 = vrot.slane %v263, %v267
      %v270 = vadd.f32 %v261, %v268
      %v271 = vadd.f32 %v262, %v268
      %v272 = vmax.f32 %v270, 0.0
      %v273 = vmax.f32 %v271, 0.0
      %vm276 = vcmask 1040384
      %v277 = vrot.slane %v272, 7
      %v278 = vrot.slane %v273, 7
      %v279 = vsel %vm276, %v277, %v278
      %v282 = vsel %vm276, 0.0, %v277
      %v283 = vsel %vm276, %v278, 0.0
      %v284 = vld [vmem:[%s1] sm:$0xff]
      %v285 = vld [vmem:[%s1 + $0x8] sm:$0xff]
      %v286 = vld [vmem:[%s1 + $0x10] sm:$0xff]
      %v287 = vld [vmem:[%s1 + $0x18] sm:$0xff]
      %v288 = vld [vmem:[%s1 + $0x20] sm:$0xff]
      %v289 = vld [vmem:[%s1 + $0x28] sm:$0xff]
      %v290 = vld [vmem:[%s1 + $0x30] sm:$0xff]
      %v291 = vld [vmem:[%s1 + $0x38] sm:$0xff]
      %s292 = scalar_lea.vmem %s1, 64
      %v293 = vld [vmem:[%s292] sm:$0xff]
      %v294 = vld [vmem:[%s292 + $0x8] sm:$0xff]
      %v295 = vld [vmem:[%s292 + $0x10] sm:$0xff]
      %v296 = vld [vmem:[%s292 + $0x18] sm:$0xff]
      %v297 = vld [vmem:[%s292 + $0x20] sm:$0xff]
      %v298 = vld [vmem:[%s292 + $0x28] sm:$0xff]
      %v299 = vld [vmem:[%s292 + $0x30] sm:$0xff]
      %v300 = vld [vmem:[%s292 + $0x38] sm:$0xff]
      %vm303 = vcmask 1046528
      %v304 = vrot.slane %v282, 1
      %v305 = vrot.slane %v279, 1
      %v306 = vsel %vm303, %v304, %v305
      %v307 = vrot.slane %v283, 1
      %v308 = vsel %vm303, %v305, %v307
      %vm309 = vcmask 523264
      %v310 = vsel %vm309, %v306, 0
      %v312 = vsel %vm309, %v308, 0
      %314 = vmatprep.subr.mxu0 0.0
      %315 = vmatpush1.msra.mxu0 %v293
      %316 = vmatprep.subr.mxu0 0.0
      %317 = vmatpush1.msra.mxu0 %v294
      %318 = vmatprep.subr.mxu0 0.0
      %319 = vmatpush1.msra.mxu0 %v295
      %320 = vmatprep.subr.mxu0 0.0
      %321 = vmatpush1.msra.mxu0 %v296
      %322 = vmatprep.subr.mxu0 0.0
      %323 = vmatpush1.msra.mxu0 %v297
      %324 = vmatprep.subr.mxu0 0.0
      %325 = vmatpush1.msra.mxu0 %v298
      %326 = vmatprep.subr.mxu0 0.0
      %327 = vmatpush1.msra.mxu0 %v299
      %328 = vmatprep.subr.mxu0 0.0
      %329 = vmatpush1.msra.mxu0 %v300
      %330 = vmatprep.subr.mxu0 0.0
      %331 = vmatpush1.msra.mxu0 0.0
      %332 = vmatprep.subr.mxu0 0.0
      %333 = vmatpush1.msra.mxu0 0.0
      %334 = vmatprep.subr.mxu0 0.0
      %335 = vmatpush1.msra.mxu0 0.0
      %336 = vmatprep.subr.mxu0 0.0
      %337 = vmatpush1.msra.mxu0 0.0
      %338 = vmatprep.subr.mxu0 0.0
      %339 = vmatpush1.msra.mxu0 0.0
      %340 = vmatprep.subr.mxu0 0.0
      %341 = vmatpush1.msra.mxu0 0.0
      %342 = vmatprep.subr.mxu0 0.0
      %343 = vmatpush1.msra.mxu0 0.0
      %344 = vmatprep.subr.mxu0 0.0
      %345 = vmatpush1.msra.mxu0 0.0
      %346 = vmatprep.subr.mxu0 0.0
      %347 = vmatpush1.msra.mxu0 0.0
      %348 = vmatprep.subr.mxu0 0.0
      %349 = vmatpush1.msra.mxu0 0.0
      %350 = vmatprep.subr.mxu0 0.0
      %351 = vmatpush1.msra.mxu0 0.0
      %352 = vmatprep.subr.mxu0 0.0
      %353 = vmatpush1.msra.mxu0 0.0
      %354 = vmatprep.subr.mxu0 0.0
      %355 = vmatpush1.msra.mxu0 0.0
      %356 = vmatprep.subr.mxu0 0.0
      %357 = vmatpush1.msra.mxu0 0.0
      %358 = vmatprep.subr.mxu0 0.0
      %359 = vmatpush1.msra.mxu0 0.0
      %360 = vmatprep.subr.mxu0 0.0
      %361 = vmatpush1.msra.mxu0 0.0
      %362 = vmatprep.subr.mxu0 0.0
      %363 = vmatpush1.msra.mxu0 0.0
      %364 = vmatprep.subr.mxu0 0.0
      %365 = vmatpush1.msra.mxu0 0.0
      %366 = vmatprep.subr.mxu0 0.0
      %367 = vmatpush1.msra.mxu0 0.0
      %368 = vmatprep.subr.mxu0 0.0
      %369 = vmatpush1.msra.mxu0 0.0
      %370 = vmatprep.subr.mxu0 0.0
      %371 = vmatpush1.msra.mxu0 0.0
      %372 = vmatprep.subr.mxu0 0.0
      %373 = vmatpush1.msra.mxu0 0.0
      %374 = vmatprep.subr.mxu0 0.0
      %375 = vmatpush1.msra.mxu0 0.0
      %376 = vmatprep.subr.mxu0 0.0
      %377 = vmatpush1.msra.mxu0 0.0
      %378 = vmatprep.mubr.f32.mxu0 0.0
      %379 = vmatmul.mubr.f32.gmra.mrb[0].mxu0 %v310
      %v380 = vpop.f32.mrb[0].mxu0
      %v381 = vadd.f32 0.0, %v380
      %v382 = vpop.f32.mrb[0].mxu0
      %383 = vmatprep.mubr.f32.mxu0 0.0
      %384 = vmatmul.mubr.f32.gmra.mrb[0].mxu0 %v312
      %v385 = vpop.f32.mrb[0].mxu0
      %v386 = vadd.f32 0.0, %v385
      %v387 = vpop.f32.mrb[0].mxu0
      %388 = vdwg.mxu0
      %v389 = vsel %vm309, %v282, 0
      %v391 = vsel %vm309, %v279, 0
      %393 = vmatprep.subr.mxu0 0.0
      %394 = vmatpush1.msra.mxu0 %v284
      %395 = vmatprep.subr.mxu0 0.0
      %396 = vmatpush1.msra.mxu0 %v285
      %397 = vmatprep.subr.mxu0 0.0
      %398 = vmatpush1.msra.mxu0 %v286
      %399 = vmatprep.subr.mxu0 0.0
      %400 = vmatpush1.msra.mxu0 %v287
      %401 = vmatprep.subr.mxu0 0.0
      %402 = vmatpush1.msra.mxu0 %v288
      %403 = vmatprep.subr.mxu0 0.0
      %404 = vmatpush1.msra.mxu0 %v289
      %405 = vmatprep.subr.mxu0 0.0
      %406 = vmatpush1.msra.mxu0 %v290
      %407 = vmatprep.subr.mxu0 0.0
      %408 = vmatpush1.msra.mxu0 %v291
      %409 = vmatprep.subr.mxu0 0.0
      %410 = vmatpush1.msra.mxu0 0.0
      %411 = vmatprep.subr.mxu0 0.0
      %412 = vmatpush1.msra.mxu0 0.0
      %413 = vmatprep.subr.mxu0 0.0
      %414 = vmatpush1.msra.mxu0 0.0
      %415 = vmatprep.subr.mxu0 0.0
      %416 = vmatpush1.msra.mxu0 0.0
      %417 = vmatprep.subr.mxu0 0.0
      %418 = vmatpush1.msra.mxu0 0.0
      %419 = vmatprep.subr.mxu0 0.0
      %420 = vmatpush1.msra.mxu0 0.0
      %421 = vmatprep.subr.mxu0 0.0
      %422 = vmatpush1.msra.mxu0 0.0
      %423 = vmatprep.subr.mxu0 0.0
      %424 = vmatpush1.msra.mxu0 0.0
      %425 = vmatprep.subr.mxu0 0.0
      %426 = vmatpush1.msra.mxu0 0.0
      %427 = vmatprep.subr.mxu0 0.0
      %428 = vmatpush1.msra.mxu0 0.0
      %429 = vmatprep.subr.mxu0 0.0
      %430 = vmatpush1.msra.mxu0 0.0
      %431 = vmatprep.subr.mxu0 0.0
      %432 = vmatpush1.msra.mxu0 0.0
      %433 = vmatprep.subr.mxu0 0.0
      %434 = vmatpush1.msra.mxu0 0.0
      %435 = vmatprep.subr.mxu0 0.0
      %436 = vmatpush1.msra.mxu0 0.0
      %437 = vmatprep.subr.mxu0 0.0
      %438 = vmatpush1.msra.mxu0 0.0
      %439 = vmatprep.subr.mxu0 0.0
      %440 = vmatpush1.msra.mxu0 0.0
      %441 = vmatprep.subr.mxu0 0.0
      %442 = vmatpush1.msra.mxu0 0.0
      %443 = vmatprep.subr.mxu0 0.0
      %444 = vmatpush1.msra.mxu0 0.0
      %445 = vmatprep.subr.mxu0 0.0
      %446 = vmatpush1.msra.mxu0 0.0
      %447 = vmatprep.subr.mxu0 0.0
      %448 = vmatpush1.msra.mxu0 0.0
      %449 = vmatprep.subr.mxu0 0.0
      %450 = vmatpush1.msra.mxu0 0.0
      %451 = vmatprep.subr.mxu0 0.0
      %452 = vmatpush1.msra.mxu0 0.0
      %453 = vmatprep.subr.mxu0 0.0
      %454 = vmatpush1.msra.mxu0 0.0
      %455 = vmatprep.subr.mxu0 0.0
      %456 = vmatpush1.msra.mxu0 0.0
      %457 = vmatprep.mubr.f32.mxu0 0.0
      %458 = vmatmul.mubr.f32.gmra.mrb[0].mxu0 %v389
      %v459 = vpop.f32.mrb[0].mxu0
      %v460 = vadd.f32 %v381, %v459
      %v461 = vpop.f32.mrb[0].mxu0
      %462 = vmatprep.mubr.f32.mxu0 0.0
      %463 = vmatmul.mubr.f32.gmra.mrb[0].mxu0 %v391
      %v464 = vpop.f32.mrb[0].mxu0
      %v465 = vadd.f32 %v386, %v464
      %v466 = vpop.f32.mrb[0].mxu0
      %467 = vdwg.mxu0
      %s468 = scalar_lea.vmem %s1, 128
      %v469 = vld [vmem:[%s468] sm:$0xff]
      %v470 = vld [vmem:[%s468 + $0x8] sm:$0xff]
      %v471 = vld [vmem:[%s468 + $0x10] sm:$0xff]
      %v472 = vld [vmem:[%s468 + $0x18] sm:$0xff]
      %v473 = vld [vmem:[%s468 + $0x20] sm:$0xff]
      %v474 = vld [vmem:[%s468 + $0x28] sm:$0xff]
      %v475 = vld [vmem:[%s468 + $0x30] sm:$0xff]
      %v476 = vld [vmem:[%s468 + $0x38] sm:$0xff]
      %vm477 = vcmask 1045504
      %v478 = vrot.slane %v282, 2
      %v479 = vrot.slane %v279, 2
      %v480 = vsel %vm477, %v478, %v479
      %v481 = vrot.slane %v283, 2
      %v482 = vsel %vm477, %v479, %v481
      %v483 = vsel %vm309, %v480, 0
      %v485 = vsel %vm309, %v482, 0
      %487 = vmatprep.subr.mxu0 0.0
      %488 = vmatpush1.msra.mxu0 %v469
      %489 = vmatprep.subr.mxu0 0.0
      %490 = vmatpush1.msra.mxu0 %v470
      %491 = vmatprep.subr.mxu0 0.0
      %492 = vmatpush1.msra.mxu0 %v471
      %493 = vmatprep.subr.mxu0 0.0
      %494 = vmatpush1.msra.mxu0 %v472
      %495 = vmatprep.subr.mxu0 0.0
      %496 = vmatpush1.msra.mxu0 %v473
      %497 = vmatprep.subr.mxu0 0.0
      %498 = vmatpush1.msra.mxu0 %v474
      %499 = vmatprep.subr.mxu0 0.0
      %500 = vmatpush1.msra.mxu0 %v475
      %501 = vmatprep.subr.mxu0 0.0
      %502 = vmatpush1.msra.mxu0 %v476
      %503 = vmatprep.subr.mxu0 0.0
      %504 = vmatpush1.msra.mxu0 0.0
      %505 = vmatprep.subr.mxu0 0.0
      %506 = vmatpush1.msra.mxu0 0.0
      %507 = vmatprep.subr.mxu0 0.0
      %508 = vmatpush1.msra.mxu0 0.0
      %509 = vmatprep.subr.mxu0 0.0
      %510 = vmatpush1.msra.mxu0 0.0
      %511 = vmatprep.subr.mxu0 0.0
      %512 = vmatpush1.msra.mxu0 0.0
      %513 = vmatprep.subr.mxu0 0.0
      %514 = vmatpush1.msra.mxu0 0.0
      %515 = vmatprep.subr.mxu0 0.0
      %516 = vmatpush1.msra.mxu0 0.0
      %517 = vmatprep.subr.mxu0 0.0
      %518 = vmatpush1.msra.mxu0 0.0
      %519 = vmatprep.subr.mxu0 0.0
      %520 = vmatpush1.msra.mxu0 0.0
      %521 = vmatprep.subr.mxu0 0.0
      %522 = vmatpush1.msra.mxu0 0.0
      %523 = vmatprep.subr.mxu0 0.0
      %524 = vmatpush1.msra.mxu0 0.0
      %525 = vmatprep.subr.mxu0 0.0
      %526 = vmatpush1.msra.mxu0 0.0
      %527 = vmatprep.subr.mxu0 0.0
      %528 = vmatpush1.msra.mxu0 0.0
      %529 = vmatprep.subr.mxu0 0.0
      %530 = vmatpush1.msra.mxu0 0.0
      %531 = vmatprep.subr.mxu0 0.0
      %532 = vmatpush1.msra.mxu0 0.0
      %533 = vmatprep.subr.mxu0 0.0
      %534 = vmatpush1.msra.mxu0 0.0
      %535 = vmatprep.subr.mxu0 0.0
      %536 = vmatpush1.msra.mxu0 0.0
      %537 = vmatprep.subr.mxu0 0.0
      %538 = vmatpush1.msra.mxu0 0.0
      %539 = vmatprep.subr.mxu0 0.0
      %540 = vmatpush1.msra.mxu0 0.0
      %541 = vmatprep.subr.mxu0 0.0
      %542 = vmatpush1.msra.mxu0 0.0
      %543 = vmatprep.subr.mxu0 0.0
      %544 = vmatpush1.msra.mxu0 0.0
      %545 = vmatprep.subr.mxu0 0.0
      %546 = vmatpush1.msra.mxu0 0.0
      %547 = vmatprep.subr.mxu0 0.0
      %548 = vmatpush1.msra.mxu0 0.0
      %549 = vmatprep.subr.mxu0 0.0
      %550 = vmatpush1.msra.mxu0 0.0
      %551 = vmatprep.mubr.f32.mxu0 0.0
      %552 = vmatmul.mubr.f32.gmra.mrb[0].mxu0 %v483
      %v553 = vpop.f32.mrb[0].mxu0
      %v554 = vadd.f32 0.0, %v553
      %v555 = vpop.f32.mrb[0].mxu0
      %556 = vmatprep.mubr.f32.mxu0 0.0
      %557 = vmatmul.mubr.f32.gmra.mrb[0].mxu0 %v485
      %v558 = vpop.f32.mrb[0].mxu0
      %v559 = vadd.f32 0.0, %v558
      %v560 = vpop.f32.mrb[0].mxu0
      %561 = vdwg.mxu0
      %v562 = vadd.f32 %v460, %v554
      %v563 = vadd.f32 %v465, %v559
      %v564 = vld [vmem:[%s4] sm:$0x1]
      %v566 = vlaneseq
      %v567 = vshrl.u32 %v566, 7
      %v568 = vsub.s32 0, %v567
      %v569 = vrot.slane %v564, %v568
      %v571 = vmul.f32 %v562, %v569
      %v572 = vmul.f32 %v563, %v569
      %v573 = vld [vmem:[%s5] sm:$0x1]
      %v575 = vlaneseq
      %v576 = vshrl.u32 %v575, 7
      %v577 = vsub.s32 0, %v576
      %v578 = vrot.slane %v573, %v577
      %v580 = vadd.f32 %v571, %v578
      %v581 = vadd.f32 %v572, %v578
      %582 = vst.msk [vmem:[%s251] sm:$0xff] %vm309, %v580
      %583 = vst.msk [vmem:[%s251 + $0x8] sm:$0xff] %vm309, %v581
      %p584 = scmp.lt.s32.totalorder %s17, 1
      %s585 = scalar_select %p584, %s17, 1
      %s586 = smul.addr %s585, 2
      %s587 = smul.addr %s586, 8
      %s588 = scalar_lea.vmem %s6, %s587
      // Predicated region
      $region45: #{_lambda_.18} parent=43 // pred_check
        %p589 = pneg %p166
      $region46: #{_lambda_.18} parent=43 // pred_check_branch
        %591 = sbr.rel (%p589) target = $region48
      $region47: #{_lambda_.18} parent=43 // pred_region
        _
      $region48: #{_lambda_.18} parent=43 // pred_fallthru
        _
    $region44: #{_lambda_.18} parent=5 // pred_fallthru
      _
    %p592 = scmp.le.s32.totalorder 2, %s12
    // Predicated region
    $region49: #{_lambda_.18} parent=5 // pred_check
      %p593 = pneg %p592
    $region50: #{_lambda_.18} parent=5 // pred_check_branch
      %595 = sbr.rel (%p593) target = $region52
    $region51: #{_lambda_.18} parent=5 // pred_region
      %s596 = ssub.s32 %s12, 2
      // Predicated region
      $region53: #{_lambda_.18} parent=51 // pred_check
        %p597 = pneg %p172
      $region54: #{_lambda_.18} parent=51 // pred_check_branch
        %599 = sbr.rel (%p597) target = $region56
      $region55: #{_lambda_.18} parent=51 // pred_region
        %p600 = scmp.lt.s32.totalorder %s18, 1
        %s601 = scalar_select %p600, %s18, 1
        %s602 = smul.addr %s601, 2
        %s603 = smul.addr %s602, 8
        %s604 = scalar_lea.vmem %s6, %s603
      $region56: #{_lambda_.18} parent=51 // pred_fallthru
        _
    $region52: #{_lambda_.18} parent=5 // pred_fallthru
      _
  $region6: #{_lambda_.18} parent=0 // loop_footer
    %s16 = sadd.s32 1, %s12
  $region7: #{_lambda_.18} parent=0 // loop_footer_branch
    %11 = sbr.rel target = $region3
  $region8: #{_lambda_.18} parent=0 // loop_exit
    _

// kernel: tile.134
$region0: #{tile.134}
  #allocation0 [shape = 's32[1]{0}', space=sflag, size = 0x4, scoped, tag = 'scoped memory for tile.134']
  %s0 = inlined_call_operand.vmem [shape: f32[8], index: 0, kind: input, shape index: {}]
  %s1 = inlined_call_operand.vmem [shape: f32[16,8], index: 1, kind: output, shape index: {}]
  // Predicated region
  $region2: #{tile.134} parent=0 // pred_check
    _
  $region3: #{tile.134} parent=0 // pred_check_branch
    %3 = sbr.rel (0) target = $region5
  $region4: #{tile.134} parent=0 // pred_region
    _
  $region5: #{tile.134} parent=0 // pred_fallthru
    _
  %v4 = vld [vmem:[%s0] ss:$0 sm:$0xff]
  %5 = vst [vmem:[%s1] sm:$0xff] %v4
  %s6 = scalar_lea.vmem %s1, 8
  %7 = vst [vmem:[%s6] sm:$0xff] %v4

// kernel: tile.135
$region0: #{tile.135}
  %s0 = inlined_call_operand.vmem [shape: f32[16,8], index: 0, kind: input, shape index: {}]
  %s1 = inlined_call_operand.vmem [shape: f32[1,128], index: 1, kind: output, shape index: {}]
  $region1: #{tile.135} parent=0
    #allocation0 [shape = 'u8[4096]{0}', space=vmem, size = 0x1000, scoped, tag = 'scoped mem for output reshape']
    %v2 = vld [vmem:[%s0] sm:$0x1]
    %vm3 = vcmask 64512
    %4 = vst.msk [vmem:[#allocation0] sm:$0x1] %vm3, %v2
    %s5 = scalar_lea.vmem %s0, 15
    %v6 = vld [vmem:[%s5] sm:$0x1]
    %7 = vrot.lane.b32.xlu0 %v6, 120
    %v8 = vpop.permute.xlu0 %7
    %vm9 = vcmask 1048512
    %10 = vst.msk [vmem:[#allocation0] sm:$0x1] %vm9, %v8
    %s11 = scalar_lea.vmem %s0, 14
    %v12 = vld [vmem:[%s11] sm:$0x1]
    %13 = vrot.lane.b32.xlu0 %v12, 112
    %v14 = vpop.permute.xlu0 %13
    %vm15 = vcmask 982912
    %16 = vst.msk [vmem:[#allocation0] sm:$0x1] %vm15, %v14
    %s17 = scalar_lea.vmem %s0, 13
    %v18 = vld [vmem:[%s17] sm:$0x1]
    %19 = vrot.lane.b32.xlu0 %v18, 104
    %v20 = vpop.permute.xlu0 %19
    %vm21 = vcmask 917312
    %22 = vst.msk [vmem:[#allocation0] sm:$0x1] %vm21, %v20
    %s23 = scalar_lea.vmem %s0, 12
    %v24 = vld [vmem:[%s23] sm:$0x1]
    %25 = vrot.lane.b32.xlu0 %v24, 96
    %v26 = vpop.permute.xlu0 %25
    %vm27 = vcmask 851712
    %28 = vst.msk [vmem:[#allocation0] sm:$0x1] %vm27, %v26
    %s29 = scalar_lea.vmem %s0, 11
    %v30 = vld [vmem:[%s29] sm:$0x1]
    %31 = vrot.lane.b32.xlu0 %v30, 88
    %v32 = vpop.permute.xlu0 %31
    %vm33 = vcmask 786112
    %34 = vst.msk [vmem:[#allocation0] sm:$0x1] %vm33, %v32
    %s35 = scalar_lea.vmem %s0, 10
    %v36 = vld [vmem:[%s35] sm:$0x1]
    %37 = vrot.lane.b32.xlu0 %v36, 80
    %v38 = vpop.permute.xlu0 %37
    %vm39 = vcmask 720512
    %40 = vst.msk [vmem:[#allocation0] sm:$0x1] %vm39, %v38
    %s41 = scalar_lea.vmem %s0, 9
    %v42 = vld [vmem:[%s41] sm:$0x1]
    %43 = vrot.lane.b32.xlu0 %v42, 72
    %v44 = vpop.permute.xlu0 %43
    %vm45 = vcmask 654912
    %46 = vst.msk [vmem:[#allocation0] sm:$0x1] %vm45, %v44
    %s47 = scalar_lea.vmem %s0, 8
    %v48 = vld [vmem:[%s47] sm:$0x1]
    %49 = vrot.lane.b32.xlu0 %v48, 64
    %v50 = vpop.permute.xlu0 %49
    %vm51 = vcmask 589312
    %52 = vst.msk [vmem:[#allocation0] sm:$0x1] %vm51, %v50
    %s53 = scalar_lea.vmem %s0, 7
    %v54 = vld [vmem:[%s53] sm:$0x1]
    %55 = vrot.lane.b32.xlu0 %v54, 56
    %v56 = vpop.permute.xlu0 %55
    %vm57 = vcmask 523712
    %58 = vst.msk [vmem:[#allocation0] sm:$0x1] %vm57, %v56
    %s59 = scalar_lea.vmem %s0, 6
    %v60 = vld [vmem:[%s59] sm:$0x1]
    %61 = vrot.lane.b32.xlu0 %v60, 48
    %v62 = vpop.permute.xlu0 %61
    %vm63 = vcmask 458112
    %64 = vst.msk [vmem:[#allocation0] sm:$0x1] %vm63, %v62
    %s65 = scalar_lea.vmem %s0, 5
    %v66 = vld [vmem:[%s65] sm:$0x1]
    %67 = vrot.lane.b32.xlu0 %v66, 40
    %v68 = vpop.permute.xlu0 %67
    %vm69 = vcmask 392512
    %70 = vst.msk [vmem:[#allocation0] sm:$0x1] %vm69, %v68
    %s71 = scalar_lea.vmem %s0, 4
    %v72 = vld [vmem:[%s71] sm:$0x1]
    %73 = vrot.lane.b32.xlu0 %v72, 32
    %v74 = vpop.permute.xlu0 %73
    %vm75 = vcmask 326912
    %76 = vst.msk [vmem:[#allocation0] sm:$0x1] %vm75, %v74
    %s77 = scalar_lea.vmem %s0, 3
    %v78 = vld [vmem:[%s77] sm:$0x1]
    %79 = vrot.lane.b32.xlu0 %v78, 24
    %v80 = vpop.permute.xlu0 %79
    %vm81 = vcmask 261312
    %82 = vst.msk [vmem:[#allocation0] sm:$0x1] %vm81, %v80
    %s83 = scalar_lea.vmem %s0, 2
    %v84 = vld [vmem:[%s83] sm:$0x1]
    %85 = vrot.lane.b32.xlu0 %v84, 16
    %v86 = vpop.permute.xlu0 %85
    %vm87 = vcmask 195712
    %88 = vst.msk [vmem:[#allocation0] sm:$0x1] %vm87, %v86
    %s89 = scalar_lea.vmem %s0, 1
    %v90 = vld [vmem:[%s89] sm:$0x1]
    %91 = vrot.lane.b32.xlu0 %v90, 8
    %v92 = vpop.permute.xlu0 %91
    %vm93 = vcmask 130112
    %94 = vst.msk [vmem:[#allocation0] sm:$0x1] %vm93, %v92
    %s96 = sshllo.u32 0, 1
    %v98 = vld [vmem:[#allocation0] sm:%s96]
    %s99 = sshllo.u32 0, 1
    %100 = vst [vmem:[%s1] sm:%s99] %v98

// kernel: _lambda_.19
$region0: #{_lambda_.19}
  #allocation0 [shape = 'u32[]', space=smem, size = 0x4, offset = 0x4, fixed_abs, tag = 'smem constant byte address 0x4 - core index']
  #allocation1 [shape = 'u32[144,128]{1,0:T(1,128)}', space=vmem, size = 0x12000, scoped, tag = 'internal scratch']
  %s0 = inlined_call_operand.vmem [shape: f32[2,16,64], index: 0, kind: input, shape index: {}]
  %s1 = inlined_call_operand.vmem [shape: f32[1,64,128], index: 1, kind: input, shape index: {}]
  %s2 = inlined_call_operand.vmem [shape: f32[1,64], index: 2, kind: input, shape index: {}]
  %s3 = inlined_call_operand.vmem [shape: f32[1,64], index: 3, kind: input, shape index: {}]
  %s4 = inlined_call_operand.vmem [shape: f32[1,128], index: 4, kind: input, shape index: {}]
  %s5 = inlined_call_operand.vmem [shape: f32[1,128], index: 5, kind: input, shape index: {}]
  %s6 = inlined_call_operand.vmem [shape: f32[2,16,128], index: 6, kind: output, shape index: {}]
  %s7 = sld [smem:[#allocation0]]
  $region57: #{_lambda_.19} parent=0
    _
  %s9 = ssub.s32 1, %s7
  %s10 = scalar_select 0, %s9, %s7
  loop: start=0, step=1, limit=4
  $region2: #{_lambda_.19} parent=0 // loop_pre_header
    _
  $region3: #{_lambda_.19} parent=0 // loop_header
    %s12 = sphi 0, %s16
    %p13 = scmp.ge.s32.totalorder %s12, 4
    %s22 = sphi 0, %s24
    %s25 = sphi 0, %s22
    %s26 = sphi 0, %s25
    %s42 = sphi 0, %s26
    %s46 = sphi 0, %s46
    %s48 = sphi 0, %s46
    %s49 = sphi 0, %s48
    %s63 = sphi 0, %s49
    %s67 = sphi 0, %s67
    %s69 = sphi 0, %s67
    %s70 = sphi 0, %s69
    %s84 = sphi 0, %s70
    %s88 = sphi 0, %s88
    %s90 = sphi 0, %s88
    %s91 = sphi 0, %s90
    %s105 = sphi 0, %s91
    %s109 = sphi 0, %s109
    %s111 = sphi 0, %s109
    %s112 = sphi 0, %s111
    %s126 = sphi 0, %s112
    %s130 = sphi 0, %s130
    %s132 = sphi 0, %s130
    %s133 = sphi 0, %s132
    %s147 = sphi 0, %s133
    %s153 = sphi 0, %s155
    %s156 = sphi 0, %s153
    %s157 = sphi 0, %s156
    %s173 = sphi 0, %s157
  $region4: #{_lambda_.19} parent=0 // loop_header_branch
    %15 = sbr.rel (%p13) target = $region8
  $region5: #{_lambda_.19} parent=0 // loop_body
    %s17 = ssub.s32 %s12, 1
    %s18 = ssub.s32 %s12, 2
    %s19 = sadd.s32 %s12, 1
    %s20 = ssub.s32 %s12, %s19
    %p21 = scmp.eq.s32.totalorder %s20, 0
    %s23 = sadd.s32 %s22, 1
    %s24 = scalar_select %p21, %s22, %s23
    %p27 = pneg %p21
    %p28 = scmp.eq.s32.totalorder %s12, 1
    %p29 = por %p27, %p28
    %p30 = scmp.ne.s32.totalorder %s22, %s25
    %p31 = scmp.eq.s32.totalorder %s12, 0
    %p32 = por %p30, %p31
    %p33 = scmp.ne.s32.totalorder %s22, %s25
    %p34 = scmp.eq.s32.totalorder %s17, 1
    %p35 = por %p33, %p34
    %p36 = scmp.ne.s32.totalorder %s25, %s26
    %p37 = scmp.eq.s32.totalorder %s17, 0
    %p38 = por %p36, %p37
    %p39 = scmp.ne.s32.totalorder %s25, %s26
    %p40 = scmp.eq.s32.totalorder %s18, 1
    %p41 = por %p39, %p40
    %p43 = scmp.ne.s32.totalorder %s26, %s42
    %p44 = scmp.eq.s32.totalorder %s18, 0
    %p45 = por %p43, %p44
    %s47 = sadd.s32 %s46, 1
    %p50 = scmp.eq.s32.totalorder %s12, 1
    %p51 = scmp.ne.s32.totalorder %s46, %s48
    %p52 = scmp.eq.s32.totalorder %s12, 0
    %p53 = por %p51, %p52
    %p54 = scmp.ne.s32.totalorder %s46, %s48
    %p55 = scmp.eq.s32.totalorder %s17, 1
    %p56 = por %p54, %p55
    %p57 = scmp.ne.s32.totalorder %s48, %s49
    %p58 = scmp.eq.s32.totalorder %s17, 0
    %p59 = por %p57, %p58
    %p60 = scmp.ne.s32.totalorder %s48, %s49
    %p61 = scmp.eq.s32.totalorder %s18, 1
    %p62 = por %p60, %p61
    %p64 = scmp.ne.s32.totalorder %s49, %s63
    %p65 = scmp.eq.s32.totalorder %s18, 0
    %p66 = por %p64, %p65
    %s68 = sadd.s32 %s67, 1
    %p71 = scmp.eq.s32.totalorder %s12, 1
    %p72 = scmp.ne.s32.totalorder %s67, %s69
    %p73 = scmp.eq.s32.totalorder %s12, 0
    %p74 = por %p72, %p73
    %p75 = scmp.ne.s32.totalorder %s67, %s69
    %p76 = scmp.eq.s32.totalorder %s17, 1
    %p77 = por %p75, %p76
    %p78 = scmp.ne.s32.totalorder %s69, %s70
    %p79 = scmp.eq.s32.totalorder %s17, 0
    %p80 = por %p78, %p79
    %p81 = scmp.ne.s32.totalorder %s69, %s70
    %p82 = scmp.eq.s32.totalorder %s18, 1
    %p83 = por %p81, %p82
    %p85 = scmp.ne.s32.totalorder %s70, %s84
    %p86 = scmp.eq.s32.totalorder %s18, 0
    %p87 = por %p85, %p86
    %s89 = sadd.s32 %s88, 1
    %p92 = scmp.eq.s32.totalorder %s12, 1
    %p93 = scmp.ne.s32.totalorder %s88, %s90
    %p94 = scmp.eq.s32.totalorder %s12, 0
    %p95 = por %p93, %p94
    %p96 = scmp.ne.s32.totalorder %s88, %s90
    %p97 = scmp.eq.s32.totalorder %s17, 1
    %p98 = por %p96, %p97
    %p99 = scmp.ne.s32.totalorder %s90, %s91
    %p100 = scmp.eq.s32.totalorder %s17, 0
    %p101 = por %p99, %p100
    %p102 = scmp.ne.s32.totalorder %s90, %s91
    %p103 = scmp.eq.s32.totalorder %s18, 1
    %p104 = por %p102, %p103
    %p106 = scmp.ne.s32.totalorder %s91, %s105
    %p107 = scmp.eq.s32.totalorder %s18, 0
    %p108 = por %p106, %p107
    %s110 = sadd.s32 %s109, 1
    %p113 = scmp.eq.s32.totalorder %s12, 1
    %p114 = scmp.ne.s32.totalorder %s109, %s111
    %p115 = scmp.eq.s32.totalorder %s12, 0
    %p116 = por %p114, %p115
    %p117 = scmp.ne.s32.totalorder %s109, %s111
    %p118 = scmp.eq.s32.totalorder %s17, 1
    %p119 = por %p117, %p118
    %p120 = scmp.ne.s32.totalorder %s111, %s112
    %p121 = scmp.eq.s32.totalorder %s17, 0
    %p122 = por %p120, %p121
    %p123 = scmp.ne.s32.totalorder %s111, %s112
    %p124 = scmp.eq.s32.totalorder %s18, 1
    %p125 = por %p123, %p124
    %p127 = scmp.ne.s32.totalorder %s112, %s126
    %p128 = scmp.eq.s32.totalorder %s18, 0
    %p129 = por %p127, %p128
    %s131 = sadd.s32 %s130, 1
    %p134 = scmp.eq.s32.totalorder %s12, 1
    %p135 = scmp.ne.s32.totalorder %s130, %s132
    %p136 = scmp.eq.s32.totalorder %s12, 0
    %p137 = por %p135, %p136
    %p138 = scmp.ne.s32.totalorder %s130, %s132
    %p139 = scmp.eq.s32.totalorder %s17, 1
    %p140 = por %p138, %p139
    %p141 = scmp.ne.s32.totalorder %s132, %s133
    %p142 = scmp.eq.s32.totalorder %s17, 0
    %p143 = por %p141, %p142
    %p144 = scmp.ne.s32.totalorder %s132, %s133
    %p145 = scmp.eq.s32.totalorder %s18, 1
    %p146 = por %p144, %p145
    %p148 = scmp.ne.s32.totalorder %s133, %s147
    %p149 = scmp.eq.s32.totalorder %s18, 0
    %p150 = por %p148, %p149
    %s151 = ssub.s32 %s12, %s19
    %p152 = scmp.eq.s32.totalorder %s151, 0
    %s154 = sadd.s32 %s153, 1
    %s155 = scalar_select %p152, %s153, %s154
    %p158 = pneg %p152
    %p159 = scmp.eq.s32.totalorder %s12, 1
    %p160 = por %p158, %p159
    %p161 = scmp.ne.s32.totalorder %s153, %s156
    %p162 = scmp.eq.s32.totalorder %s12, 0
    %p163 = por %p161, %p162
    %p164 = scmp.ne.s32.totalorder %s153, %s156
    %p165 = scmp.eq.s32.totalorder %s17, 1
    %p166 = por %p164, %p165
    %p167 = scmp.ne.s32.totalorder %s156, %s157
    %p168 = scmp.eq.s32.totalorder %s17, 0
    %p169 = por %p167, %p168
    %p170 = scmp.ne.s32.totalorder %s156, %s157
    %p171 = scmp.eq.s32.totalorder %s18, 1
    %p172 = por %p170, %p171
    %p174 = scmp.ne.s32.totalorder %s157, %s173
    %p175 = scmp.eq.s32.totalorder %s18, 0
    %p176 = por %p174, %p175
    %p177 = scmp.le.s32.totalorder 1, %s12
    %p178 = scmp.lt.s32.totalorder %s12, 3
    %p179 = pnand %p177, %p178
    %p180 = pneg %p179
    // Predicated region
    $region9: #{_lambda_.19} parent=5 // pred_check
      _
    $region10: #{_lambda_.19} parent=5 // pred_check_branch
      %182 = sbr.rel (%p179) target = $region12
    $region11: #{_lambda_.19} parent=5 // pred_region
      %s183 = ssub.s32 %s12, 1
      // Predicated region
      $region13: #{_lambda_.19} parent=11 // pred_check
        %p184 = pneg %p59
      $region14: #{_lambda_.19} parent=11 // pred_check_branch
        %186 = sbr.rel (%p184) target = $region16
      $region15: #{_lambda_.19} parent=11 // pred_region
        _
      $region16: #{_lambda_.19} parent=11 // pred_fallthru
        _
      // Predicated region
      $region17: #{_lambda_.19} parent=11 // pred_check
        %p187 = pneg %p80
      $region18: #{_lambda_.19} parent=11 // pred_check_branch
        %189 = sbr.rel (%p187) target = $region20
      $region19: #{_lambda_.19} parent=11 // pred_region
        _
      $region20: #{_lambda_.19} parent=11 // pred_fallthru
        _
      // Predicated region
      $region21: #{_lambda_.19} parent=11 // pred_check
        %p190 = pneg %p101
      $region22: #{_lambda_.19} parent=11 // pred_check_branch
        %192 = sbr.rel (%p190) target = $region24
      $region23: #{_lambda_.19} parent=11 // pred_region
        _
      $region24: #{_lambda_.19} parent=11 // pred_fallthru
        _
      // Predicated region
      $region25: #{_lambda_.19} parent=11 // pred_check
        %p193 = pneg %p122
      $region26: #{_lambda_.19} parent=11 // pred_check_branch
        %195 = sbr.rel (%p193) target = $region28
      $region27: #{_lambda_.19} parent=11 // pred_region
        _
      $region28: #{_lambda_.19} parent=11 // pred_fallthru
        _
      // Predicated region
      $region29: #{_lambda_.19} parent=11 // pred_check
        %p196 = pneg %p143
      $region30: #{_lambda_.19} parent=11 // pred_check_branch
        %198 = sbr.rel (%p196) target = $region32
      $region31: #{_lambda_.19} parent=11 // pred_region
        _
      $region32: #{_lambda_.19} parent=11 // pred_fallthru
        _
    $region12: #{_lambda_.19} parent=5 // pred_fallthru
      _
    %p199 = scmp.lt.s32.totalorder %s12, 2
    // Predicated region
    $region33: #{_lambda_.19} parent=5 // pred_check
      %p200 = pneg %p199
    $region34: #{_lambda_.19} parent=5 // pred_check_branch
      %202 = sbr.rel (%p200) target = $region36
    $region35: #{_lambda_.19} parent=5 // pred_region
      // Predicated region
      $region37: #{_lambda_.19} parent=35 // pred_check
        %p203 = pneg %p32
      $region38: #{_lambda_.19} parent=35 // pred_check_branch
        %205 = sbr.rel (%p203) target = $region40
      $region39: #{_lambda_.19} parent=35 // pred_region
        %p206 = scmp.lt.s32.totalorder %s12, 1
        %s207 = scalar_select %p206, %s12, 1
        %s208 = smul.addr %s207, 2
        %s209 = smul.addr %s208, 8
        %s210 = scalar_lea.vmem %s0, %s209
      $region40: #{_lambda_.19} parent=35 // pred_fallthru
        _
    $region36: #{_lambda_.19} parent=5 // pred_fallthru
      _
    %p211 = scmp.le.s32.totalorder 1, %s12
    %p212 = scmp.lt.s32.totalorder %s12, 3
    %p213 = pnand %p211, %p212
    %p214 = pneg %p213
    // Predicated region
    $region41: #{_lambda_.19} parent=5 // pred_check
      _
    $region42: #{_lambda_.19} parent=5 // pred_check_branch
      %216 = sbr.rel (%p213) target = $region44
    $region43: #{_lambda_.19} parent=5 // pred_region
      %s217 = ssub.s32 %s12, 1
      %p218 = scmp.lt.s32.totalorder %s17, 1
      %s219 = scalar_select %p218, %s17, 1
      %s220 = smul.addr %s219, 2
      %s221 = smul.addr %s220, 8
      %s222 = scalar_lea.vmem %s0, %s221
      %p223 = pneg %p38
      %p224 = pneg %p35
      %p225 = pneg %p59
      %p226 = pneg %p56
      %p227 = pneg %p80
      %p228 = pneg %p77
      %p229 = pneg %p101
      %p230 = pneg %p98
      %p231 = pneg %p122
      %p232 = pneg %p119
      %p233 = pneg %p143
      %p234 = pneg %p140
      %p235 = pneg %p169
      %p236 = pneg %p166
      %p237 = scmp.lt.s32.totalorder %s17, 1
      %s238 = scalar_select %p237, %s17, 1
      %s239 = smul.addr %s238, 2
      %s240 = smul.addr %s239, 8
      %s241 = scalar_lea.vmem %s6, %s240
      %p242 = scmp.lt.s32.totalorder %s17, 1
      %s243 = scalar_select %p242, %s17, 1
      %s244 = smul.addr %s243, 2
      %s245 = smul.addr %s244, 8
      %s246 = scalar_lea.vmem %s0, %s245
      %p247 = scmp.lt.s32.totalorder %s17, 1
      %s248 = scalar_select %p247, %s17, 1
      %s249 = smul.addr %s248, 2
      %s250 = smul.addr %s249, 8
      %s251 = scalar_lea.vmem %s6, %s250
      %v252 = vld [vmem:[%s246] sm:$0xff]
      %v253 = vld [vmem:[%s246 + $0x8] sm:$0xff]
      %v254 = vld [vmem:[%s2] sm:$0x1]
      %v256 = vlaneseq
      %v257 = vshrl.u32 %v256, 7
      %v258 = vsub.s32 0, %v257
      %v259 = vrot.slane %v254, %v258
      %v261 = vmul.f32 %v252, %v259
      %v262 = vmul.f32 %v253, %v259
      %v263 = vld [vmem:[%s3] sm:$0x1]
      %v265 = vlaneseq
      %v266 = vshrl.u32 %v265, 7
      %v267 = vsub.s32 0, %v266
      %v268 = vrot.slane %v263, %v267
      %v270 = vadd.f32 %v261, %v268
      %v271 = vadd.f32 %v262, %v268
      %v272 = vmax.f32 %v270, 0.0
      %v273 = vmax.f32 %v271, 0.0
      %v274 = vld [vmem:[%s1] sm:$0xff]
      %v275 = vld [vmem:[%s1 + $0x8] sm:$0xff]
      %v276 = vld [vmem:[%s1 + $0x10] sm:$0xff]
      %v277 = vld [vmem:[%s1 + $0x18] sm:$0xff]
      %v278 = vld [vmem:[%s1 + $0x20] sm:$0xff]
      %v279 = vld [vmem:[%s1 + $0x28] sm:$0xff]
      %v280 = vld [vmem:[%s1 + $0x30] sm:$0xff]
      %v281 = vld [vmem:[%s1 + $0x38] sm:$0xff]
      %vm282 = vcmask 523264
      %v284 = vsel %vm282, %v272, 0
      %v287 = vsel %vm282, %v273, 0
      %289 = vmatprep.subr.mxu0 0.0
      %290 = vmatpush1.msra.mxu0 %v274
      %291 = vmatprep.subr.mxu0 0.0
      %292 = vmatpush1.msra.mxu0 %v275
      %293 = vmatprep.subr.mxu0 0.0
      %294 = vmatpush1.msra.mxu0 %v276
      %295 = vmatprep.subr.mxu0 0.0
      %296 = vmatpush1.msra.mxu0 %v277
      %297 = vmatprep.subr.mxu0 0.0
      %298 = vmatpush1.msra.mxu0 %v278
      %299 = vmatprep.subr.mxu0 0.0
      %300 = vmatpush1.msra.mxu0 %v279
      %301 = vmatprep.subr.mxu0 0.0
      %302 = vmatpush1.msra.mxu0 %v280
      %303 = vmatprep.subr.mxu0 0.0
      %304 = vmatpush1.msra.mxu0 %v281
      %305 = vmatprep.subr.mxu0 0.0
      %306 = vmatpush1.msra.mxu0 0.0
      %307 = vmatprep.subr.mxu0 0.0
      %308 = vmatpush1.msra.mxu0 0.0
      %309 = vmatprep.subr.mxu0 0.0
      %310 = vmatpush1.msra.mxu0 0.0
      %311 = vmatprep.subr.mxu0 0.0
      %312 = vmatpush1.msra.mxu0 0.0
      %313 = vmatprep.subr.mxu0 0.0
      %314 = vmatpush1.msra.mxu0 0.0
      %315 = vmatprep.subr.mxu0 0.0
      %316 = vmatpush1.msra.mxu0 0.0
      %317 = vmatprep.subr.mxu0 0.0
      %318 = vmatpush1.msra.mxu0 0.0
      %319 = vmatprep.subr.mxu0 0.0
      %320 = vmatpush1.msra.mxu0 0.0
      %321 = vmatprep.subr.mxu0 0.0
      %322 = vmatpush1.msra.mxu0 0.0
      %323 = vmatprep.subr.mxu0 0.0
      %324 = vmatpush1.msra.mxu0 0.0
      %325 = vmatprep.subr.mxu0 0.0
      %326 = vmatpush1.msra.mxu0 0.0
      %327 = vmatprep.subr.mxu0 0.0
      %328 = vmatpush1.msra.mxu0 0.0
      %329 = vmatprep.subr.mxu0 0.0
      %330 = vmatpush1.msra.mxu0 0.0
      %331 = vmatprep.subr.mxu0 0.0
      %332 = vmatpush1.msra.mxu0 0.0
      %333 = vmatprep.subr.mxu0 0.0
      %334 = vmatpush1.msra.mxu0 0.0
      %335 = vmatprep.subr.mxu0 0.0
      %336 = vmatpush1.msra.mxu0 0.0
      %337 = vmatprep.subr.mxu0 0.0
      %338 = vmatpush1.msra.mxu0 0.0
      %339 = vmatprep.subr.mxu0 0.0
      %340 = vmatpush1.msra.mxu0 0.0
      %341 = vmatprep.subr.mxu0 0.0
      %342 = vmatpush1.msra.mxu0 0.0
      %343 = vmatprep.subr.mxu0 0.0
      %344 = vmatpush1.msra.mxu0 0.0
      %345 = vmatprep.subr.mxu0 0.0
      %346 = vmatpush1.msra.mxu0 0.0
      %347 = vmatprep.subr.mxu0 0.0
      %348 = vmatpush1.msra.mxu0 0.0
      %349 = vmatprep.subr.mxu0 0.0
      %350 = vmatpush1.msra.mxu0 0.0
      %351 = vmatprep.subr.mxu0 0.0
      %352 = vmatpush1.msra.mxu0 0.0
      %353 = vmatprep.mubr.f32.mxu0 0.0
      %354 = vmatmul.mubr.f32.gmra.mrb[0].mxu0 %v284
      %v355 = vpop.f32.mrb[0].mxu0
      %v356 = vadd.f32 0.0, %v355
      %v357 = vpop.f32.mrb[0].mxu0
      %358 = vmatprep.mubr.f32.mxu0 0.0
      %359 = vmatmul.mubr.f32.gmra.mrb[0].mxu0 %v287
      %v360 = vpop.f32.mrb[0].mxu0
      %v361 = vadd.f32 0.0, %v360
      %v362 = vpop.f32.mrb[0].mxu0
      %363 = vdwg.mxu0
      %v364 = vld [vmem:[%s4] sm:$0x1]
      %v366 = vlaneseq
      %v367 = vshrl.u32 %v366, 7
      %v368 = vsub.s32 0, %v367
      %v369 = vrot.slane %v364, %v368
      %v371 = vmul.f32 %v356, %v369
      %v372 = vmul.f32 %v361, %v369
      %v373 = vld [vmem:[%s5] sm:$0x1]
      %v375 = vlaneseq
      %v376 = vshrl.u32 %v375, 7
      %v377 = vsub.s32 0, %v376
      %v378 = vrot.slane %v373, %v377
      %v380 = vadd.f32 %v371, %v378
      %v381 = vadd.f32 %v372, %v378
      %382 = vst [vmem:[%s251] sm:$0xff] %v380
      %383 = vst [vmem:[%s251 + $0x8] sm:$0xff] %v381
      %p384 = scmp.lt.s32.totalorder %s17, 1
      %s385 = scalar_select %p384, %s17, 1
      %s386 = smul.addr %s385, 2
      %s387 = smul.addr %s386, 8
      %s388 = scalar_lea.vmem %s6, %s387
      // Predicated region
      $region45: #{_lambda_.19} parent=43 // pred_check
        %p389 = pneg %p166
      $region46: #{_lambda_.19} parent=43 // pred_check_branch
        %391 = sbr.rel (%p389) target = $region48
      $region47: #{_lambda_.19} parent=43 // pred_region
        _
      $region48: #{_lambda_.19} parent=43 // pred_fallthru
        _
    $region44: #{_lambda_.19} parent=5 // pred_fallthru
      _
    %p392 = scmp.le.s32.totalorder 2, %s12
    // Predicated region
    $region49: #{_lambda_.19} parent=5 // pred_check
      %p393 = pneg %p392
    $region50: #{_lambda_.19} parent=5 // pred_check_branch
      %395 = sbr.rel (%p393) target = $region52
    $region51: #{_lambda_.19} parent=5 // pred_region
      %s396 = ssub.s32 %s12, 2
      // Predicated region
      $region53: #{_lambda_.19} parent=51 // pred_check
        %p397 = pneg %p172
      $region54: #{_lambda_.19} parent=51 // pred_check_branch
        %399 = sbr.rel (%p397) target = $region56
      $region55: #{_lambda_.19} parent=51 // pred_region
        %p400 = scmp.lt.s32.totalorder %s18, 1
        %s401 = scalar_select %p400, %s18, 1
        %s402 = smul.addr %s401, 2
        %s403 = smul.addr %s402, 8
        %s404 = scalar_lea.vmem %s6, %s403
      $region56: #{_lambda_.19} parent=51 // pred_fallthru
        _
    $region52: #{_lambda_.19} parent=5 // pred_fallthru
      _
  $region6: #{_lambda_.19} parent=0 // loop_footer
    %s16 = sadd.s32 1, %s12
  $region7: #{_lambda_.19} parent=0 // loop_footer_branch
    %11 = sbr.rel target = $region3
  $region8: #{_lambda_.19} parent=0 // loop_exit
    _

// kernel: tile.68
$region0: #{tile.68}
  #allocation0 [shape = 's32[1]{0}', space=sflag, size = 0x4, scoped, tag = 'scoped memory for tile.68']
  %s0 = inlined_call_operand.<no memory space> [shape: f32[], index: 0, kind: input, shape index: {}]
  %s1 = inlined_call_operand.vmem [shape: f32[1,192], index: 1, kind: output, shape index: {}]
  %v2 = vstv %s0
  %3 = vst [vmem:[%s1] sm:$0x1] %v2
  %s4 = scalar_lea.vmem %s1, 1
  %5 = vst [vmem:[%s4] sm:$0x1] %v2

// kernel: _lambda_.16
$region0: #{_lambda_.16}
  #allocation0 [shape = 'u32[]', space=smem, size = 0x4, offset = 0x4, fixed_abs, tag = 'smem constant byte address 0x4 - core index']
  #allocation1 [shape = 'u32[144,128]{1,0:T(1,128)}', space=vmem, size = 0x12000, scoped, tag = 'internal scratch']
  %s0 = inlined_call_operand.vmem [shape: f32[2,16,192], index: 0, kind: input, shape index: {}]
  %s1 = inlined_call_operand.vmem [shape: f32[1,192,128], index: 1, kind: input, shape index: {}]
  %s2 = inlined_call_operand.vmem [shape: f32[1,192], index: 2, kind: input, shape index: {}]
  %s3 = inlined_call_operand.vmem [shape: f32[1,192], index: 3, kind: input, shape index: {}]
  %s4 = inlined_call_operand.vmem [shape: f32[1,128], index: 4, kind: input, shape index: {}]
  %s5 = inlined_call_operand.vmem [shape: f32[1,128], index: 5, kind: input, shape index: {}]
  %s6 = inlined_call_operand.vmem [shape: f32[2,16,128], index: 6, kind: output, shape index: {}]
  %s7 = sld [smem:[#allocation0]]
  $region57: #{_lambda_.16} parent=0
    _
  %s9 = ssub.s32 1, %s7
  %s10 = scalar_select 0, %s9, %s7
  loop: start=0, step=1, limit=4
  $region2: #{_lambda_.16} parent=0 // loop_pre_header
    _
  $region3: #{_lambda_.16} parent=0 // loop_header
    %s12 = sphi 0, %s16
    %p13 = scmp.ge.s32.totalorder %s12, 4
    %s22 = sphi 0, %s24
    %s25 = sphi 0, %s22
    %s26 = sphi 0, %s25
    %s42 = sphi 0, %s26
    %s46 = sphi 0, %s46
    %s48 = sphi 0, %s46
    %s49 = sphi 0, %s48
    %s63 = sphi 0, %s49
    %s67 = sphi 0, %s67
    %s69 = sphi 0, %s67
    %s70 = sphi 0, %s69
    %s84 = sphi 0, %s70
    %s88 = sphi 0, %s88
    %s90 = sphi 0, %s88
    %s91 = sphi 0, %s90
    %s105 = sphi 0, %s91
    %s109 = sphi 0, %s109
    %s111 = sphi 0, %s109
    %s112 = sphi 0, %s111
    %s126 = sphi 0, %s112
    %s130 = sphi 0, %s130
    %s132 = sphi 0, %s130
    %s133 = sphi 0, %s132
    %s147 = sphi 0, %s133
    %s153 = sphi 0, %s155
    %s156 = sphi 0, %s153
    %s157 = sphi 0, %s156
    %s173 = sphi 0, %s157
  $region4: #{_lambda_.16} parent=0 // loop_header_branch
    %15 = sbr.rel (%p13) target = $region8
  $region5: #{_lambda_.16} parent=0 // loop_body
    %s17 = ssub.s32 %s12, 1
    %s18 = ssub.s32 %s12, 2
    %s19 = sadd.s32 %s12, 1
    %s20 = ssub.s32 %s12, %s19
    %p21 = scmp.eq.s32.totalorder %s20, 0
    %s23 = sadd.s32 %s22, 1
    %s24 = scalar_select %p21, %s22, %s23
    %p27 = pneg %p21
    %p28 = scmp.eq.s32.totalorder %s12, 1
    %p29 = por %p27, %p28
    %p30 = scmp.ne.s32.totalorder %s22, %s25
    %p31 = scmp.eq.s32.totalorder %s12, 0
    %p32 = por %p30, %p31
    %p33 = scmp.ne.s32.totalorder %s22, %s25
    %p34 = scmp.eq.s32.totalorder %s17, 1
    %p35 = por %p33, %p34
    %p36 = scmp.ne.s32.totalorder %s25, %s26
    %p37 = scmp.eq.s32.totalorder %s17, 0
    %p38 = por %p36, %p37
    %p39 = scmp.ne.s32.totalorder %s25, %s26
    %p40 = scmp.eq.s32.totalorder %s18, 1
    %p41 = por %p39, %p40
    %p43 = scmp.ne.s32.totalorder %s26, %s42
    %p44 = scmp.eq.s32.totalorder %s18, 0
    %p45 = por %p43, %p44
    %s47 = sadd.s32 %s46, 1
    %p50 = scmp.eq.s32.totalorder %s12, 1
    %p51 = scmp.ne.s32.totalorder %s46, %s48
    %p52 = scmp.eq.s32.totalorder %s12, 0
    %p53 = por %p51, %p52
    %p54 = scmp.ne.s32.totalorder %s46, %s48
    %p55 = scmp.eq.s32.totalorder %s17, 1
    %p56 = por %p54, %p55
    %p57 = scmp.ne.s32.totalorder %s48, %s49
    %p58 = scmp.eq.s32.totalorder %s17, 0
    %p59 = por %p57, %p58
    %p60 = scmp.ne.s32.totalorder %s48, %s49
    %p61 = scmp.eq.s32.totalorder %s18, 1
    %p62 = por %p60, %p61
    %p64 = scmp.ne.s32.totalorder %s49, %s63
    %p65 = scmp.eq.s32.totalorder %s18, 0
    %p66 = por %p64, %p65
    %s68 = sadd.s32 %s67, 1
    %p71 = scmp.eq.s32.totalorder %s12, 1
    %p72 = scmp.ne.s32.totalorder %s67, %s69
    %p73 = scmp.eq.s32.totalorder %s12, 0
    %p74 = por %p72, %p73
    %p75 = scmp.ne.s32.totalorder %s67, %s69
    %p76 = scmp.eq.s32.totalorder %s17, 1
    %p77 = por %p75, %p76
    %p78 = scmp.ne.s32.totalorder %s69, %s70
    %p79 = scmp.eq.s32.totalorder %s17, 0
    %p80 = por %p78, %p79
    %p81 = scmp.ne.s32.totalorder %s69, %s70
    %p82 = scmp.eq.s32.totalorder %s18, 1
    %p83 = por %p81, %p82
    %p85 = scmp.ne.s32.totalorder %s70, %s84
    %p86 = scmp.eq.s32.totalorder %s18, 0
    %p87 = por %p85, %p86
    %s89 = sadd.s32 %s88, 1
    %p92 = scmp.eq.s32.totalorder %s12, 1
    %p93 = scmp.ne.s32.totalorder %s88, %s90
    %p94 = scmp.eq.s32.totalorder %s12, 0
    %p95 = por %p93, %p94
    %p96 = scmp.ne.s32.totalorder %s88, %s90
    %p97 = scmp.eq.s32.totalorder %s17, 1
    %p98 = por %p96, %p97
    %p99 = scmp.ne.s32.totalorder %s90, %s91
    %p100 = scmp.eq.s32.totalorder %s17, 0
    %p101 = por %p99, %p100
    %p102 = scmp.ne.s32.totalorder %s90, %s91
    %p103 = scmp.eq.s32.totalorder %s18, 1
    %p104 = por %p102, %p103
    %p106 = scmp.ne.s32.totalorder %s91, %s105
    %p107 = scmp.eq.s32.totalorder %s18, 0
    %p108 = por %p106, %p107
    %s110 = sadd.s32 %s109, 1
    %p113 = scmp.eq.s32.totalorder %s12, 1
    %p114 = scmp.ne.s32.totalorder %s109, %s111
    %p115 = scmp.eq.s32.totalorder %s12, 0
    %p116 = por %p114, %p115
    %p117 = scmp.ne.s32.totalorder %s109, %s111
    %p118 = scmp.eq.s32.totalorder %s17, 1
    %p119 = por %p117, %p118
    %p120 = scmp.ne.s32.totalorder %s111, %s112
    %p121 = scmp.eq.s32.totalorder %s17, 0
    %p122 = por %p120, %p121
    %p123 = scmp.ne.s32.totalorder %s111, %s112
    %p124 = scmp.eq.s32.totalorder %s18, 1
    %p125 = por %p123, %p124
    %p127 = scmp.ne.s32.totalorder %s112, %s126
    %p128 = scmp.eq.s32.totalorder %s18, 0
    %p129 = por %p127, %p128
    %s131 = sadd.s32 %s130, 1
    %p134 = scmp.eq.s32.totalorder %s12, 1
    %p135 = scmp.ne.s32.totalorder %s130, %s132
    %p136 = scmp.eq.s32.totalorder %s12, 0
    %p137 = por %p135, %p136
    %p138 = scmp.ne.s32.totalorder %s130, %s132
    %p139 = scmp.eq.s32.totalorder %s17, 1
    %p140 = por %p138, %p139
    %p141 = scmp.ne.s32.totalorder %s132, %s133
    %p142 = scmp.eq.s32.totalorder %s17, 0
    %p143 = por %p141, %p142
    %p144 = scmp.ne.s32.totalorder %s132, %s133
    %p145 = scmp.eq.s32.totalorder %s18, 1
    %p146 = por %p144, %p145
    %p148 = scmp.ne.s32.totalorder %s133, %s147
    %p149 = scmp.eq.s32.totalorder %s18, 0
    %p150 = por %p148, %p149
    %s151 = ssub.s32 %s12, %s19
    %p152 = scmp.eq.s32.totalorder %s151, 0
    %s154 = sadd.s32 %s153, 1
    %s155 = scalar_select %p152, %s153, %s154
    %p158 = pneg %p152
    %p159 = scmp.eq.s32.totalorder %s12, 1
    %p160 = por %p158, %p159
    %p161 = scmp.ne.s32.totalorder %s153, %s156
    %p162 = scmp.eq.s32.totalorder %s12, 0
    %p163 = por %p161, %p162
    %p164 = scmp.ne.s32.totalorder %s153, %s156
    %p165 = scmp.eq.s32.totalorder %s17, 1
    %p166 = por %p164, %p165
    %p167 = scmp.ne.s32.totalorder %s156, %s157
    %p168 = scmp.eq.s32.totalorder %s17, 0
    %p169 = por %p167, %p168
    %p170 = scmp.ne.s32.totalorder %s156, %s157
    %p171 = scmp.eq.s32.totalorder %s18, 1
    %p172 = por %p170, %p171
    %p174 = scmp.ne.s32.totalorder %s157, %s173
    %p175 = scmp.eq.s32.totalorder %s18, 0
    %p176 = por %p174, %p175
    %p177 = scmp.le.s32.totalorder 1, %s12
    %p178 = scmp.lt.s32.totalorder %s12, 3
    %p179 = pnand %p177, %p178
    %p180 = pneg %p179
    // Predicated region
    $region9: #{_lambda_.16} parent=5 // pred_check
      _
    $region10: #{_lambda_.16} parent=5 // pred_check_branch
      %182 = sbr.rel (%p179) target = $region12
    $region11: #{_lambda_.16} parent=5 // pred_region
      %s183 = ssub.s32 %s12, 1
      // Predicated region
      $region13: #{_lambda_.16} parent=11 // pred_check
        %p184 = pneg %p59
      $region14: #{_lambda_.16} parent=11 // pred_check_branch
        %186 = sbr.rel (%p184) target = $region16
      $region15: #{_lambda_.16} parent=11 // pred_region
        _
      $region16: #{_lambda_.16} parent=11 // pred_fallthru
        _
      // Predicated region
      $region17: #{_lambda_.16} parent=11 // pred_check
        %p187 = pneg %p80
      $region18: #{_lambda_.16} parent=11 // pred_check_branch
        %189 = sbr.rel (%p187) target = $region20
      $region19: #{_lambda_.16} parent=11 // pred_region
        _
      $region20: #{_lambda_.16} parent=11 // pred_fallthru
        _
      // Predicated region
      $region21: #{_lambda_.16} parent=11 // pred_check
        %p190 = pneg %p101
      $region22: #{_lambda_.16} parent=11 // pred_check_branch
        %192 = sbr.rel (%p190) target = $region24
      $region23: #{_lambda_.16} parent=11 // pred_region
        _
      $region24: #{_lambda_.16} parent=11 // pred_fallthru
        _
      // Predicated region
      $region25: #{_lambda_.16} parent=11 // pred_check
        %p193 = pneg %p122
      $region26: #{_lambda_.16} parent=11 // pred_check_branch
        %195 = sbr.rel (%p193) target = $region28
      $region27: #{_lambda_.16} parent=11 // pred_region
        _
      $region28: #{_lambda_.16} parent=11 // pred_fallthru
        _
      // Predicated region
      $region29: #{_lambda_.16} parent=11 // pred_check
        %p196 = pneg %p143
      $region30: #{_lambda_.16} parent=11 // pred_check_branch
        %198 = sbr.rel (%p196) target = $region32
      $region31: #{_lambda_.16} parent=11 // pred_region
        _
      $region32: #{_lambda_.16} parent=11 // pred_fallthru
        _
    $region12: #{_lambda_.16} parent=5 // pred_fallthru
      _
    %p199 = scmp.lt.s32.totalorder %s12, 2
    // Predicated region
    $region33: #{_lambda_.16} parent=5 // pred_check
      %p200 = pneg %p199
    $region34: #{_lambda_.16} parent=5 // pred_check_branch
      %202 = sbr.rel (%p200) target = $region36
    $region35: #{_lambda_.16} parent=5 // pred_region
      // Predicated region
      $region37: #{_lambda_.16} parent=35 // pred_check
        %p203 = pneg %p32
      $region38: #{_lambda_.16} parent=35 // pred_check_branch
        %205 = sbr.rel (%p203) target = $region40
      $region39: #{_lambda_.16} parent=35 // pred_region
        %p206 = scmp.lt.s32.totalorder %s12, 1
        %s207 = scalar_select %p206, %s12, 1
        %s208 = smul.addr %s207, 4
        %s209 = smul.addr %s208, 8
        %s210 = scalar_lea.vmem %s0, %s209
      $region40: #{_lambda_.16} parent=35 // pred_fallthru
        _
    $region36: #{_lambda_.16} parent=5 // pred_fallthru
      _
    %p211 = scmp.le.s32.totalorder 1, %s12
    %p212 = scmp.lt.s32.totalorder %s12, 3
    %p213 = pnand %p211, %p212
    %p214 = pneg %p213
    // Predicated region
    $region41: #{_lambda_.16} parent=5 // pred_check
      _
    $region42: #{_lambda_.16} parent=5 // pred_check_branch
      %216 = sbr.rel (%p213) target = $region44
    $region43: #{_lambda_.16} parent=5 // pred_region
      %s217 = ssub.s32 %s12, 1
      %p218 = scmp.lt.s32.totalorder %s17, 1
      %s219 = scalar_select %p218, %s17, 1
      %s220 = smul.addr %s219, 4
      %s221 = smul.addr %s220, 8
      %s222 = scalar_lea.vmem %s0, %s221
      %p223 = pneg %p38
      %p224 = pneg %p35
      %p225 = pneg %p59
      %p226 = pneg %p56
      %p227 = pneg %p80
      %p228 = pneg %p77
      %p229 = pneg %p101
      %p230 = pneg %p98
      %p231 = pneg %p122
      %p232 = pneg %p119
      %p233 = pneg %p143
      %p234 = pneg %p140
      %p235 = pneg %p169
      %p236 = pneg %p166
      %p237 = scmp.lt.s32.totalorder %s17, 1
      %s238 = scalar_select %p237, %s17, 1
      %s239 = smul.addr %s238, 2
      %s240 = smul.addr %s239, 8
      %s241 = scalar_lea.vmem %s6, %s240
      %p242 = scmp.lt.s32.totalorder %s17, 1
      %s243 = scalar_select %p242, %s17, 1
      %s244 = smul.addr %s243, 4
      %s245 = smul.addr %s244, 8
      %s246 = scalar_lea.vmem %s0, %s245
      %p247 = scmp.lt.s32.totalorder %s17, 1
      %s248 = scalar_select %p247, %s17, 1
      %s249 = smul.addr %s248, 2
      %s250 = smul.addr %s249, 8
      %s251 = scalar_lea.vmem %s6, %s250
      %v252 = vld [vmem:[%s246] sm:$0xff]
      %v253 = vld [vmem:[%s246 + $0x8] sm:$0xff]
      %v254 = vld [vmem:[%s246 + $0x10] sm:$0xff]
      %v255 = vld [vmem:[%s246 + $0x18] sm:$0xff]
      %v256 = vld [vmem:[%s2] sm:$0x3]
      %v258 = vlaneseq
      %v259 = vshrl.u32 %v258, 7
      %v260 = vsub.s32 0, %v259
      %v261 = vrot.slane %v256, %v260
      %v262 = vlaneseq
      %v263 = vshrl.u32 %v262, 7
      %v264 = vsub.s32 1, %v263
      %v265 = vrot.slane %v256, %v264
      %v268 = vmul.f32 %v252, %v261
      %v269 = vmul.f32 %v253, %v265
      %v270 = vmul.f32 %v254, %v261
      %v271 = vmul.f32 %v255, %v265
      %v272 = vld [vmem:[%s3] sm:$0x3]
      %v274 = vlaneseq
      %v275 = vshrl.u32 %v274, 7
      %v276 = vsub.s32 0, %v275
      %v277 = vrot.slane %v272, %v276
      %v278 = vlaneseq
      %v279 = vshrl.u32 %v278, 7
      %v280 = vsub.s32 1, %v279
      %v281 = vrot.slane %v272, %v280
      %v284 = vadd.f32 %v268, %v277
      %v285 = vadd.f32 %v269, %v281
      %v286 = vadd.f32 %v270, %v277
      %v287 = vadd.f32 %v271, %v281
      %v288 = vld [vmem:[%s1] sm:$0xff]
      %v289 = vld [vmem:[%s1 + $0x8] sm:$0xff]
      %v290 = vld [vmem:[%s1 + $0x10] sm:$0xff]
      %v291 = vld [vmem:[%s1 + $0x18] sm:$0xff]
      %v292 = vld [vmem:[%s1 + $0x20] sm:$0xff]
      %v293 = vld [vmem:[%s1 + $0x28] sm:$0xff]
      %v294 = vld [vmem:[%s1 + $0x30] sm:$0xff]
      %v295 = vld [vmem:[%s1 + $0x38] sm:$0xff]
      %v296 = vld [vmem:[%s1 + $0x40] sm:$0xff]
      %v297 = vld [vmem:[%s1 + $0x48] sm:$0xff]
      %v298 = vld [vmem:[%s1 + $0x50] sm:$0xff]
      %v299 = vld [vmem:[%s1 + $0x58] sm:$0xff]
      %v300 = vld [vmem:[%s1 + $0x60] sm:$0xff]
      %v301 = vld [vmem:[%s1 + $0x68] sm:$0xff]
      %v302 = vld [vmem:[%s1 + $0x70] sm:$0xff]
      %v303 = vld [vmem:[%s1 + $0x78] sm:$0xff]
      %v304 = vld [vmem:[%s1 + $0x80] sm:$0xff]
      %v305 = vld [vmem:[%s1 + $0x88] sm:$0xff]
      %v306 = vld [vmem:[%s1 + $0x90] sm:$0xff]
      %v307 = vld [vmem:[%s1 + $0x98] sm:$0xff]
      %v308 = vld [vmem:[%s1 + $0xa0] sm:$0xff]
      %v309 = vld [vmem:[%s1 + $0xa8] sm:$0xff]
      %v310 = vld [vmem:[%s1 + $0xb0] sm:$0xff]
      %v311 = vld [vmem:[%s1 + $0xb8] sm:$0xff]
      %vm312 = vcmask 523264
      %v314 = vsel %vm312, %v285, 0
      %v317 = vsel %vm312, %v287, 0
      %319 = vmatprep.subr.mxu0 0.0
      %320 = vmatpush1.msra.mxu0 %v288
      %321 = vmatprep.subr.mxu0 0.0
      %322 = vmatpush1.msra.mxu0 %v289
      %323 = vmatprep.subr.mxu0 0.0
      %324 = vmatpush1.msra.mxu0 %v290
      %325 = vmatprep.subr.mxu0 0.0
      %326 = vmatpush1.msra.mxu0 %v291
      %327 = vmatprep.subr.mxu0 0.0
      %328 = vmatpush1.msra.mxu0 %v292
      %329 = vmatprep.subr.mxu0 0.0
      %330 = vmatpush1.msra.mxu0 %v293
      %331 = vmatprep.subr.mxu0 0.0
      %332 = vmatpush1.msra.mxu0 %v294
      %333 = vmatprep.subr.mxu0 0.0
      %334 = vmatpush1.msra.mxu0 %v295
      %335 = vmatprep.subr.mxu0 0.0
      %336 = vmatpush1.msra.mxu0 %v296
      %337 = vmatprep.subr.mxu0 0.0
      %338 = vmatpush1.msra.mxu0 %v297
      %339 = vmatprep.subr.mxu0 0.0
      %340 = vmatpush1.msra.mxu0 %v298
      %341 = vmatprep.subr.mxu0 0.0
      %342 = vmatpush1.msra.mxu0 %v299
      %343 = vmatprep.subr.mxu0 0.0
      %344 = vmatpush1.msra.mxu0 %v300
      %345 = vmatprep.subr.mxu0 0.0
      %346 = vmatpush1.msra.mxu0 %v301
      %347 = vmatprep.subr.mxu0 0.0
      %348 = vmatpush1.msra.mxu0 %v302
      %349 = vmatprep.subr.mxu0 0.0
      %350 = vmatpush1.msra.mxu0 %v303
      %351 = vmatprep.subr.mxu0 0.0
      %352 = vmatpush1.msra.mxu0 %v304
      %353 = vmatprep.subr.mxu0 0.0
      %354 = vmatpush1.msra.mxu0 %v305
      %355 = vmatprep.subr.mxu0 0.0
      %356 = vmatpush1.msra.mxu0 %v306
      %357 = vmatprep.subr.mxu0 0.0
      %358 = vmatpush1.msra.mxu0 %v307
      %359 = vmatprep.subr.mxu0 0.0
      %360 = vmatpush1.msra.mxu0 %v308
      %361 = vmatprep.subr.mxu0 0.0
      %362 = vmatpush1.msra.mxu0 %v309
      %363 = vmatprep.subr.mxu0 0.0
      %364 = vmatpush1.msra.mxu0 %v310
      %365 = vmatprep.subr.mxu0 0.0
      %366 = vmatpush1.msra.mxu0 %v311
      %367 = vmatprep.subr.mxu0 0.0
      %368 = vmatpush1.msra.mxu0 0.0
      %369 = vmatprep.subr.mxu0 0.0
      %370 = vmatpush1.msra.mxu0 0.0
      %371 = vmatprep.subr.mxu0 0.0
      %372 = vmatpush1.msra.mxu0 0.0
      %373 = vmatprep.subr.mxu0 0.0
      %374 = vmatpush1.msra.mxu0 0.0
      %375 = vmatprep.subr.mxu0 0.0
      %376 = vmatpush1.msra.mxu0 0.0
      %377 = vmatprep.subr.mxu0 0.0
      %378 = vmatpush1.msra.mxu0 0.0
      %379 = vmatprep.subr.mxu0 0.0
      %380 = vmatpush1.msra.mxu0 0.0
      %381 = vmatprep.subr.mxu0 0.0
      %382 = vmatpush1.msra.mxu0 0.0
      %383 = vmatprep.mubr.f32.mxu0 %v314
      %384 = vmatmul.mubr.f32.gmra.mrb[0].mxu0 %v284
      %v385 = vpop.f32.mrb[0].mxu0
      %v386 = vadd.f32 0.0, %v385
      %v387 = vpop.f32.mrb[0].mxu0
      %388 = vmatprep.mubr.f32.mxu0 %v317
      %389 = vmatmul.mubr.f32.gmra.mrb[0].mxu0 %v286
      %v390 = vpop.f32.mrb[0].mxu0
      %v391 = vadd.f32 0.0, %v390
      %v392 = vpop.f32.mrb[0].mxu0
      %393 = vdwg.mxu0
      %v394 = vld [vmem:[%s4] sm:$0x1]
      %v396 = vlaneseq
      %v397 = vshrl.u32 %v396, 7
      %v398 = vsub.s32 0, %v397
      %v399 = vrot.slane %v394, %v398
      %v401 = vmul.f32 %v386, %v399
      %v402 = vmul.f32 %v391, %v399
      %v403 = vld [vmem:[%s5] sm:$0x1]
      %v405 = vlaneseq
      %v406 = vshrl.u32 %v405, 7
      %v407 = vsub.s32 0, %v406
      %v408 = vrot.slane %v403, %v407
      %v410 = vadd.f32 %v401, %v408
      %v411 = vadd.f32 %v402, %v408
      %412 = vst [vmem:[%s251] sm:$0xff] %v410
      %413 = vst [vmem:[%s251 + $0x8] sm:$0xff] %v411
      %p414 = scmp.lt.s32.totalorder %s17, 1
      %s415 = scalar_select %p414, %s17, 1
      %s416 = smul.addr %s415, 2
      %s417 = smul.addr %s416, 8
      %s418 = scalar_lea.vmem %s6, %s417
      // Predicated region
      $region45: #{_lambda_.16} parent=43 // pred_check
        %p419 = pneg %p166
      $region46: #{_lambda_.16} parent=43 // pred_check_branch
        %421 = sbr.rel (%p419) target = $region48
      $region47: #{_lambda_.16} parent=43 // pred_region
        _
      $region48: #{_lambda_.16} parent=43 // pred_fallthru
        _
    $region44: #{_lambda_.16} parent=5 // pred_fallthru
      _
    %p422 = scmp.le.s32.totalorder 2, %s12
    // Predicated region
    $region49: #{_lambda_.16} parent=5 // pred_check
      %p423 = pneg %p422
    $region50: #{_lambda_.16} parent=5 // pred_check_branch
      %425 = sbr.rel (%p423) target = $region52
    $region51: #{_lambda_.16} parent=5 // pred_region
      %s426 = ssub.s32 %s12, 2
      // Predicated region
      $region53: #{_lambda_.16} parent=51 // pred_check
        %p427 = pneg %p172
      $region54: #{_lambda_.16} parent=51 // pred_check_branch
        %429 = sbr.rel (%p427) target = $region56
      $region55: #{_lambda_.16} parent=51 // pred_region
        %p430 = scmp.lt.s32.totalorder %s18, 1
        %s431 = scalar_select %p430, %s18, 1
        %s432 = smul.addr %s431, 2
        %s433 = smul.addr %s432, 8
        %s434 = scalar_lea.vmem %s6, %s433
      $region56: #{_lambda_.16} parent=51 // pred_fallthru
        _
    $region52: #{_lambda_.16} parent=5 // pred_fallthru
      _
  $region6: #{_lambda_.16} parent=0 // loop_footer
    %s16 = sadd.s32 1, %s12
  $region7: #{_lambda_.16} parent=0 // loop_footer_branch
    %11 = sbr.rel target = $region3
  $region8: #{_lambda_.16} parent=0 // loop_exit
    _

</llo_original>
